<compile_context>
chip_gen: v7x
topology: tpu7x:2x2x1
jax: 0.10.0
libtpu: 0.0.40
codegen_flags: <defaults>
</compile_context>

<pallas_src>
import functools
import math

import jax
import jax.numpy as jnp
from jax.experimental import pallas as pl
from jax.experimental.pallas import tpu as pltpu

# ----------------------------- small synthetic config -----------------------------
VOCAB = 256
HIDDEN = 128                          # lane-dense hidden dim
N_LAYERS = 2
N_HEADS = 4
N_KV_HEADS = 2
HEAD_DIM = HIDDEN // N_HEADS          # 32 (real Qwen2.5-VL uses 128)
GQA_REP = N_HEADS // N_KV_HEADS       # 2
Q_DIM = N_HEADS * HEAD_DIM            # 128
KV_DIM = N_KV_HEADS * HEAD_DIM        # 64
QK_DIM = Q_DIM + KV_DIM               # 192  (rope is applied to this joint slab)
QKV_DIM = QK_DIM + KV_DIM             # 256
INTER = 256
RMS_EPS = 1e-6
ROPE_THETA = 10000.0
MAX_SEQ = 64
VOCAB_TILE = 512                      # >=512 per feedback; clamped to vocab below


# ----------------------------- fused per-layer kernel -----------------------------
def _layer_kernel(x_ref, ln1_ref, wqkv_ref, bqkv_ref, rot_ref, cos_ref, sin_ref,
                  wo_ref, ln2_ref, wg_ref, wu_ref, wd_ref, o_ref, attn_scr,
                  *, batch, seq):
    """One full decoder layer on the (B*S, H) residual tile (bf16 in HBM, f32 stats)."""
    D = HEAD_DIM
    x = x_ref[...].astype(jnp.float32)                       # (B*S, H)

    # ---- input RMSNorm (f32 statistics) ----
    var = jnp.mean(x * x, axis=-1, keepdims=True)
    h = ((x * jax.lax.rsqrt(var + RMS_EPS)) * ln1_ref[...]).astype(jnp.bfloat16)

    # ---- fused QKV projection on all B*S rows (batch collapsed into M) ----
    qkv = jnp.dot(h, wqkv_ref[...], preferred_element_type=jnp.float32) + bqkv_ref[...]

    # ---- RoPE on the joint Q|K slab: lane-dense FMAs + signed-permutation matmul ----
    qk = qkv[:, :QK_DIM]                                     # (B*S, 192) f32
    qk_rot = (qk * cos_ref[...]
              + jnp.dot(qk.astype(jnp.bfloat16), rot_ref[...],
                        preferred_element_type=jnp.float32) * sin_ref[...])

    scale = 1.0 / math.sqrt(D)
    q_bf = (qk_rot[:, :Q_DIM] * scale).astype(jnp.bfloat16)  # one cast per slab
    k_bf = qk_rot[:, Q_DIM:].astype(jnp.bfloat16)
    v_bf = qkv[:, QK_DIM:].astype(jnp.bfloat16)

    # additive causal mask for one kv-group (GQA_REP query heads stacked on sublanes)
    row = jax.lax.broadcasted_iota(jnp.int32, (seq, seq), 0)
    col = jax.lax.broadcasted_iota(jnp.int32, (seq, seq), 1)
    causal = jnp.where(col <= row, 0.0, jnp.float32(-1e30))  # (S, S) f32
    mask_grp = jnp.concatenate([causal] * GQA_REP, axis=0)   # (GQA_REP*S, S)

    # ---- causal GQA attention: per batch, per kv head, query heads batched on M ----
    for b in range(batch):                                   # static unroll (B small)
        r0 = b * seq
        for g in range(N_KV_HEADS):
            q_grp = jnp.concatenate(
                [q_bf[r0:r0 + seq, (g * GQA_REP + r) * D:(g * GQA_REP + r + 1) * D]
                 for r in range(GQA_REP)], axis=0)           # (GQA_REP*S, D)
            k_g = k_bf[r0:r0 + seq, g * D:(g + 1) * D]       # (S, D)
            v_g = v_bf[r0:r0 + seq, g * D:(g + 1) * D]       # (S, D)

            s = jax.lax.dot_general(q_grp, k_g, (((1,), (1,)), ((), ())),
                                    preferred_element_type=jnp.float32)
            s = s + mask_grp
            s = s - jnp.max(s, axis=-1, keepdims=True)       # f32 softmax stats
            p = jnp.exp(s)
            p = p * pl.reciprocal(jnp.sum(p, axis=-1, keepdims=True), approx=True)
            pv = jnp.dot(p.astype(jnp.bfloat16), v_g,
                         preferred_element_type=jnp.float32) # (GQA_REP*S, D)

            # lane-offset writes into the f32 scratch keep o_proj a single K=128 matmul
            for r in range(GQA_REP):
                hh = g * GQA_REP + r
                attn_scr[r0:r0 + seq, hh * D:(hh + 1) * D] = pv[r * seq:(r + 1) * seq, :]

    # ---- o_proj + residual (no bias in Qwen2 o_proj) ----
    proj = jnp.dot(attn_scr[...].astype(jnp.bfloat16), wo_ref[...],
                   preferred_element_type=jnp.float32)
    resid = x + proj

    # ---- post-attention RMSNorm + SwiGLU MLP + residual ----
    var2 = jnp.mean(resid * resid, axis=-1, keepdims=True)
    h2 = ((resid * jax.lax.rsqrt(var2 + RMS_EPS)) * ln2_ref[...]).astype(jnp.bfloat16)
    gate = jnp.dot(h2, wg_ref[...], preferred_element_type=jnp.float32)
    up = jnp.dot(h2, wu_ref[...], preferred_element_type=jnp.float32)
    act = (gate * jax.nn.sigmoid(gate)) * up
    down = jnp.dot(act.astype(jnp.bfloat16), wd_ref[...],
                   preferred_element_type=jnp.float32)

    o_ref[...] = (resid + down).astype(jnp.bfloat16)         # bf16 residual stream


def _lm_head_kernel(x_ref, ln_ref, w_ref, o_ref, h_scr):
    """Final RMSNorm (hoisted, computed once) + lm_head projection per vocab tile."""
    @pl.when(pl.program_id(0) == 0)
    def _():
        x = x_ref[...].astype(jnp.float32)
        var = jnp.mean(x * x, axis=-1, keepdims=True)
        h_scr[...] = ((x * jax.lax.rsqrt(var + RMS_EPS)) * ln_ref[...]).astype(jnp.bfloat16)

    o_ref[...] = jnp.dot(h_scr[...], w_ref[...], preferred_element_type=jnp.float32)


# ----------------------------- pallas_call wrappers -----------------------------
def layer_block(x, ln1, wqkv, bqkv, rot, cos, sin, wo, ln2, wg, wu, wd, *, batch, seq):
    R, H = x.shape                                           # R = B*S
    kernel = functools.partial(_layer_kernel, batch=batch, seq=seq)
    return pl.pallas_call(
        kernel,
        out_shape=jax.ShapeDtypeStruct((R, H), jnp.bfloat16),
        grid=(1,),
        in_specs=[
            pl.BlockSpec((R, H), lambda i: (0, 0)),
            pl.BlockSpec((1, H), lambda i: (0, 0)),
            pl.BlockSpec((H, QKV_DIM), lambda i: (0, 0)),
            pl.BlockSpec((1, QKV_DIM), lambda i: (0, 0)),
            pl.BlockSpec((QK_DIM, QK_DIM), lambda i: (0, 0)),
            pl.BlockSpec((R, QK_DIM), lambda i: (0, 0)),
            pl.BlockSpec((R, QK_DIM), lambda i: (0, 0)),
            pl.BlockSpec((Q_DIM, H), lambda i: (0, 0)),
            pl.BlockSpec((1, H), lambda i: (0, 0)),
            pl.BlockSpec((H, INTER), lambda i: (0, 0)),
            pl.BlockSpec((H, INTER), lambda i: (0, 0)),
            pl.BlockSpec((INTER, H), lambda i: (0, 0)),
        ],
        out_specs=pl.BlockSpec((R, H), lambda i: (0, 0)),
        scratch_shapes=[pltpu.VMEM((R, Q_DIM), jnp.float32)],   # attention output slab
        compiler_params=pltpu.CompilerParams(dimension_semantics=("arbitrary",)),
    )(x, ln1.reshape(1, H), wqkv, bqkv.reshape(1, QKV_DIM), rot, cos, sin,
      wo, ln2.reshape(1, H), wg, wu, wd)


def final_norm_lm_head(x, ln_w, w_lm):
    R, H = x.shape
    V = w_lm.shape[1]
    tn = min(VOCAB_TILE, V)
    return pl.pallas_call(
        _lm_head_kernel,
        out_shape=jax.ShapeDtypeStruct((R, V), jnp.float32),
        grid=(pl.cdiv(V, tn),),
        in_specs=[
            pl.BlockSpec((R, H), lambda j: (0, 0)),          # grid-invariant: resident
            pl.BlockSpec((1, H), lambda j: (0, 0)),
            pl.BlockSpec((H, tn), lambda j: (0, j)),
        ],
        out_specs=pl.BlockSpec((R, tn), lambda j: (0, j)),
        scratch_shapes=[pltpu.VMEM((R, H), jnp.bfloat16)],   # normalized h, reused per tile
        compiler_params=pltpu.CompilerParams(dimension_semantics=("arbitrary",)),
    )(x, ln_w.reshape(1, H), w_lm)


# ----------------------------- params & forward -----------------------------
def init_params(key):
    def wf(k, shape, scale=0.02):
        return scale * jax.random.normal(k, shape, dtype=jnp.float32)

    def wb(k, shape, scale=0.02):        # MXU weights stored in bf16
        return wf(k, shape, scale).astype(jnp.bfloat16)

    keys = jax.random.split(key, 2 + N_LAYERS)
    params = {
        "embed": wf(keys[0], (VOCAB, HIDDEN)),
        "final_ln": jnp.ones((HIDDEN,), jnp.float32),
        "lm_head": wb(keys[1], (HIDDEN, VOCAB)),
        "layers": [],
    }

    # RoPE tables, precomputed once and pre-broadcast to the joint Q|K slab width.
    inv_freq = 1.0 / (ROPE_THETA ** (jnp.arange(0, HEAD_DIM, 2, dtype=jnp.float32) / HEAD_DIM))
    t = jnp.arange(MAX_SEQ, dtype=jnp.float32)
    freqs = jnp.outer(t, inv_freq)                           # (MAX_SEQ, D/2)
    emb = jnp.concatenate([freqs, freqs], axis=-1)           # (MAX_SEQ, D)
    n_rope_heads = N_HEADS + N_KV_HEADS
    params["rope_cos_qk"] = jnp.tile(jnp.cos(emb), (1, n_rope_heads))  # (MAX_SEQ, QK_DIM)
    params["rope_sin_qk"] = jnp.tile(jnp.sin(emb), (1, n_rope_heads))

    # rotate-half as a block-diagonal signed permutation: per head [[0, I], [-I, 0]]
    half = HEAD_DIM // 2
    eye = jnp.eye(half, dtype=jnp.float32)
    zro = jnp.zeros((half, half), jnp.float32)
    blk = jnp.block([[zro, eye], [-eye, zro]])               # (D, D)
    params["rot_qk"] = jnp.kron(jnp.eye(n_rope_heads, dtype=jnp.float32), blk).astype(jnp.bfloat16)

    for li in range(N_LAYERS):
        ks = jax.random.split(keys[2 + li], 9)
        wq = wb(ks[0], (HIDDEN, Q_DIM))
        wk = wb(ks[1], (HIDDEN, KV_DIM))
        wv = wb(ks[2], (HIDDEN, KV_DIM))
        bq = wf(ks[3], (Q_DIM,))
        bk = wf(ks[4], (KV_DIM,))
        bv = wf(ks[5], (KV_DIM,))
        params["layers"].append({
            "input_ln": jnp.ones((HIDDEN,), jnp.float32),
            "post_ln": jnp.ones((HIDDEN,), jnp.float32),
            "wqkv": jnp.concatenate([wq, wk, wv], axis=1),   # (H, QKV_DIM) bf16
            "bqkv": jnp.concatenate([bq, bk, bv], axis=0),   # (QKV_DIM,) f32
            "wo": wb(ks[6], (Q_DIM, HIDDEN)),                # no bias in Qwen2 o_proj
            "wg": wb(ks[7], (HIDDEN, INTER)),
            "wu": wb(jax.random.fold_in(ks[7], 1), (HIDDEN, INTER)),
            "wd": wb(ks[8], (INTER, HIDDEN)),
        })
    return params


def qwen_llm_forward(params, input_ids, use_cache=False):
    del use_cache   # full-sequence prefill: KV cache does not change the returned logits
    B, S = input_ids.shape
    # Token-embedding gather kept as a single XLA gather (data-dependent rows),
    # then the residual stream is kept flat (B*S, H) and bf16 between kernels.
    x = params["embed"][input_ids].astype(jnp.bfloat16).reshape(B * S, HIDDEN)
    cos = jnp.tile(params["rope_cos_qk"][:S], (B, 1))        # (B*S, QK_DIM), once per fwd
    sin = jnp.tile(params["rope_sin_qk"][:S], (B, 1))

    for p in params["layers"]:
        x = layer_block(x, p["input_ln"], p["wqkv"], p["bqkv"], params["rot_qk"],
                        cos, sin, p["wo"], p["post_ln"], p["wg"], p["wu"], p["wd"],
                        batch=B, seq=S)

    logits = final_norm_lm_head(x, params["final_ln"], params["lm_head"])
    return logits.reshape(B, S, VOCAB)


if __name__ == "__main__":
    key = jax.random.PRNGKey(0)
    pkey, dkey = jax.random.split(key)
    params = init_params(pkey)

    B, S = 2, 16
    input_ids = jax.random.randint(dkey, (B, S), 0, VOCAB, dtype=jnp.int32)

    fwd = jax.jit(qwen_llm_forward, static_argnames=("use_cache",))
    logits = fwd(params, input_ids, use_cache=True)
    logits = jax.block_until_ready(logits)

    assert logits.shape == (B, S, VOCAB), logits.shape
    assert bool(jnp.all(jnp.isfinite(logits))), "non-finite logits"
    print("KERNEL_OK")
</pallas_src>

<mosaic_0001>
module attributes {stable_mosaic.version = 11 : i64} {
  func.func @_layer_kernel(%arg0: i32, %arg1: memref<32x128xbf16, #tpu.memory_space<vmem>>, %arg2: memref<1x128xf32, #tpu.memory_space<vmem>>, %arg3: memref<128x256xbf16, #tpu.memory_space<vmem>>, %arg4: memref<1x256xf32, #tpu.memory_space<vmem>>, %arg5: memref<192x192xbf16, #tpu.memory_space<vmem>>, %arg6: memref<32x192xf32, #tpu.memory_space<vmem>>, %arg7: memref<32x192xf32, #tpu.memory_space<vmem>>, %arg8: memref<128x128xbf16, #tpu.memory_space<vmem>>, %arg9: memref<1x128xf32, #tpu.memory_space<vmem>>, %arg10: memref<128x256xbf16, #tpu.memory_space<vmem>>, %arg11: memref<128x256xbf16, #tpu.memory_space<vmem>>, %arg12: memref<256x128xbf16, #tpu.memory_space<vmem>>, %arg13: memref<32x128xbf16, #tpu.memory_space<vmem>>, %arg14: memref<32x128xf32, #tpu.memory_space<vmem>>) attributes {dimension_semantics = [#tpu.dimension_semantics<arbitrary>], iteration_bounds = array<i64: 1>, scalar_prefetch = 0 : i64, scratch_operands = 1 : i64, tpu.core_type = #tpu.core_type<tc>, window_params = [{pipeline_mode = #tpu.pipeline_mode<synchronous>, transform_indices = @transform_0, window_bounds = array<i64: 32, 128>}, {pipeline_mode = #tpu.pipeline_mode<synchronous>, transform_indices = @transform_1, window_bounds = array<i64: 1, 128>}, {pipeline_mode = #tpu.pipeline_mode<synchronous>, transform_indices = @transform_2, window_bounds = array<i64: 128, 256>}, {pipeline_mode = #tpu.pipeline_mode<synchronous>, transform_indices = @transform_3, window_bounds = array<i64: 1, 256>}, {pipeline_mode = #tpu.pipeline_mode<synchronous>, transform_indices = @transform_4, window_bounds = array<i64: 192, 192>}, {pipeline_mode = #tpu.pipeline_mode<synchronous>, transform_indices = @transform_5, window_bounds = array<i64: 32, 192>}, {pipeline_mode = #tpu.pipeline_mode<synchronous>, transform_indices = @transform_6, window_bounds = array<i64: 32, 192>}, {pipeline_mode = #tpu.pipeline_mode<synchronous>, transform_indices = @transform_7, window_bounds = array<i64: 128, 128>}, {pipeline_mode = #tpu.pipeline_mode<synchronous>, transform_indices = @transform_8, window_bounds = array<i64: 1, 128>}, {pipeline_mode = #tpu.pipeline_mode<synchronous>, transform_indices = @transform_9, window_bounds = array<i64: 128, 256>}, {pipeline_mode = #tpu.pipeline_mode<synchronous>, transform_indices = @transform_10, window_bounds = array<i64: 128, 256>}, {pipeline_mode = #tpu.pipeline_mode<synchronous>, transform_indices = @transform_11, window_bounds = array<i64: 256, 128>}, {pipeline_mode = #tpu.pipeline_mode<synchronous>, transform_indices = @transform_12, window_bounds = array<i64: 32, 128>}]} {
    %c0 = arith.constant 0 : index
    %c0_0 = arith.constant 0 : index
    %0 = vector.load %arg1[%c0, %c0_0] : memref<32x128xbf16, #tpu.memory_space<vmem>>, vector<32x128xbf16>
    %1 = arith.extf %0 : vector<32x128xbf16> to vector<32x128xf32>
    %2 = arith.mulf %1, %1 : vector<32x128xf32>
    %cst = arith.constant dense<0.000000e+00> : vector<32xf32>
    %3 = vector.multi_reduction <add>, %2, %cst [1] : vector<32x128xf32> to vector<32xf32>
    %4 = vector.shape_cast %3 : vector<32xf32> to vector<32x1xf32>
    %cst_1 = arith.constant 1.280000e+02 : f32
    %5 = vector.broadcast %cst_1 : f32 to vector<32x1xf32>
    %6 = arith.divf %4, %5 : vector<32x1xf32>
    %cst_2 = arith.constant 9.99999997E-7 : f32
    %7 = vector.broadcast %cst_2 : f32 to vector<32x1xf32>
    %8 = arith.addf %6, %7 : vector<32x1xf32>
    %9 = math.rsqrt %8 : vector<32x1xf32>
    %10 = vector.broadcast %9 : vector<32x1xf32> to vector<32x128xf32>
    %11 = arith.mulf %1, %10 : vector<32x128xf32>
    %c0_3 = arith.constant 0 : index
    %c0_4 = arith.constant 0 : index
    %12 = vector.load %arg2[%c0_3, %c0_4] : memref<1x128xf32, #tpu.memory_space<vmem>>, vector<1x128xf32>
    %13 = vector.broadcast %12 : vector<1x128xf32> to vector<32x128xf32>
    %14 = arith.mulf %11, %13 : vector<32x128xf32>
    %15 = arith.truncf %14 : vector<32x128xf32> to vector<32x128xbf16>
    %c0_5 = arith.constant 0 : index
    %c0_6 = arith.constant 0 : index
    %16 = vector.load %arg3[%c0_5, %c0_6] : memref<128x256xbf16, #tpu.memory_space<vmem>>, vector<128x256xbf16>
    %cst_7 = arith.constant dense<0.000000e+00> : vector<32x256xf32>
    %17 = tpu.matmul %15, %16, %cst_7 {dimension_numbers = #tpu.dot_dimension_numbers<[1], [0], [0], [1], [0, 0, 1, 1], [], []>} : vector<32x128xbf16>, vector<128x256xbf16>, vector<32x256xf32> -> vector<32x256xf32>
    %c0_8 = arith.constant 0 : index
    %c0_9 = arith.constant 0 : index
    %18 = vector.load %arg4[%c0_8, %c0_9] : memref<1x256xf32, #tpu.memory_space<vmem>>, vector<1x256xf32>
    %19 = vector.broadcast %18 : vector<1x256xf32> to vector<32x256xf32>
    %20 = arith.addf %17, %19 : vector<32x256xf32>
    %21 = vector.extract_strided_slice %20 {offsets = [0, 0], sizes = [32, 192], strides = [1, 1]} : vector<32x256xf32> to vector<32x192xf32>
    %c0_10 = arith.constant 0 : index
    %c0_11 = arith.constant 0 : index
    %22 = vector.load %arg6[%c0_10, %c0_11] : memref<32x192xf32, #tpu.memory_space<vmem>>, vector<32x192xf32>
    %23 = arith.mulf %21, %22 : vector<32x192xf32>
    %24 = arith.truncf %21 : vector<32x192xf32> to vector<32x192xbf16>
    %c0_12 = arith.constant 0 : index
    %c0_13 = arith.constant 0 : index
    %25 = vector.load %arg5[%c0_12, %c0_13] : memref<192x192xbf16, #tpu.memory_space<vmem>>, vector<192x192xbf16>
    %cst_14 = arith.constant dense<0.000000e+00> : vector<32x192xf32>
    %26 = tpu.matmul %24, %25, %cst_14 {dimension_numbers = #tpu.dot_dimension_numbers<[1], [0], [0], [1], [0, 0, 1, 1], [], []>} : vector<32x192xbf16>, vector<192x192xbf16>, vector<32x192xf32> -> vector<32x192xf32>
    %c0_15 = arith.constant 0 : index
    %c0_16 = arith.constant 0 : index
    %27 = vector.load %arg7[%c0_15, %c0_16] : memref<32x192xf32, #tpu.memory_space<vmem>>, vector<32x192xf32>
    %28 = arith.mulf %26, %27 : vector<32x192xf32>
    %29 = arith.addf %23, %28 : vector<32x192xf32>
    %30 = vector.extract_strided_slice %29 {offsets = [0, 0], sizes = [32, 128], strides = [1, 1]} : vector<32x192xf32> to vector<32x128xf32>
    %cst_17 = arith.constant 0.176776692 : f32
    %31 = vector.broadcast %cst_17 : f32 to vector<32x128xf32>
    %32 = arith.mulf %30, %31 : vector<32x128xf32>
    %33 = arith.truncf %32 : vector<32x128xf32> to vector<32x128xbf16>
    %34 = vector.extract_strided_slice %29 {offsets = [0, 128], sizes = [32, 64], strides = [1, 1]} : vector<32x192xf32> to vector<32x64xf32>
    %35 = arith.truncf %34 : vector<32x64xf32> to vector<32x64xbf16>
    %36 = vector.extract_strided_slice %20 {offsets = [0, 192], sizes = [32, 64], strides = [1, 1]} : vector<32x256xf32> to vector<32x64xf32>
    %37 = arith.truncf %36 : vector<32x64xf32> to vector<32x64xbf16>
    %38 = tpu.iota {dimensions = array<i32: 0>} : vector<16x16xi32>
    %39 = tpu.iota {dimensions = array<i32: 1>} : vector<16x16xi32>
    %40 = arith.cmpi sle, %39, %38 : vector<16x16xi32>
    %cst_18 = arith.constant 0.000000e+00 : f32
    %cst_19 = arith.constant -1.000000e+30 : f32
    %41 = vector.broadcast %cst_18 : f32 to vector<16x16xf32>
    %42 = vector.broadcast %cst_19 : f32 to vector<16x16xf32>
    %43 = arith.select %40, %41, %42 : vector<16x16xi1>, vector<16x16xf32>
    %44 = tpu.concatenate %43, %43 in 0 : vector<16x16xf32>, vector<16x16xf32> -> vector<32x16xf32>
    %45 = vector.extract_strided_slice %33 {offsets = [0, 0], sizes = [16, 32], strides = [1, 1]} : vector<32x128xbf16> to vector<16x32xbf16>
    %46 = vector.extract_strided_slice %33 {offsets = [0, 32], sizes = [16, 32], strides = [1, 1]} : vector<32x128xbf16> to vector<16x32xbf16>
    %47 = tpu.concatenate %45, %46 in 0 : vector<16x32xbf16>, vector<16x32xbf16> -> vector<32x32xbf16>
    %48 = vector.extract_strided_slice %35 {offsets = [0, 0], sizes = [16, 32], strides = [1, 1]} : vector<32x64xbf16> to vector<16x32xbf16>
    %49 = vector.extract_strided_slice %37 {offsets = [0, 0], sizes = [16, 32], strides = [1, 1]} : vector<32x64xbf16> to vector<16x32xbf16>
    %cst_20 = arith.constant dense<0.000000e+00> : vector<32x16xf32>
    %50 = tpu.matmul %47, %48, %cst_20 {dimension_numbers = #tpu.dot_dimension_numbers<[1], [1], [0], [0], [0, 0, 1, 0], [], []>} : vector<32x32xbf16>, vector<16x32xbf16>, vector<32x16xf32> -> vector<32x16xf32>
    %51 = arith.addf %50, %44 : vector<32x16xf32>
    %cst_21 = arith.constant dense<0xFF800000> : vector<32xf32>
    %52 = vector.multi_reduction <maximumf>, %51, %cst_21 [1] : vector<32x16xf32> to vector<32xf32>
    %53 = vector.shape_cast %52 : vector<32xf32> to vector<32x1xf32>
    %54 = vector.broadcast %53 : vector<32x1xf32> to vector<32x16xf32>
    %55 = arith.subf %51, %54 : vector<32x16xf32>
    %56 = math.exp %55 : vector<32x16xf32>
    %cst_22 = arith.constant dense<0.000000e+00> : vector<32xf32>
    %57 = vector.multi_reduction <add>, %56, %cst_22 [1] : vector<32x16xf32> to vector<32xf32>
    %58 = vector.shape_cast %57 : vector<32xf32> to vector<32x1xf32>
    %59 = tpu.reciprocal %58 {approx = true} : vector<32x1xf32> -> vector<32x1xf32>
    %60 = vector.broadcast %59 : vector<32x1xf32> to vector<32x16xf32>
    %61 = arith.mulf %56, %60 : vector<32x16xf32>
    %62 = arith.truncf %61 : vector<32x16xf32> to vector<32x16xbf16>
    %cst_23 = arith.constant dense<0.000000e+00> : vector<32x32xf32>
    %63 = tpu.matmul %62, %49, %cst_23 {dimension_numbers = #tpu.dot_dimension_numbers<[1], [0], [0], [1], [0, 0, 1, 1], [], []>} : vector<32x16xbf16>, vector<16x32xbf16>, vector<32x32xf32> -> vector<32x32xf32>
    %64 = vector.extract_strided_slice %63 {offsets = [0, 0], sizes = [16, 32], strides = [1, 1]} : vector<32x32xf32> to vector<16x32xf32>
    %c0_24 = arith.constant 0 : index
    %c0_25 = arith.constant 0 : index
    %65 = vector.load %arg14[%c0_24, %c0_25] : memref<32x128xf32, #tpu.memory_space<vmem>>, vector<16x32xf32>
    tpu.vector_store %arg14[%c0_24, %c0_25], %64 {strides = array<i32>} : memref<32x128xf32, #tpu.memory_space<vmem>>, vector<16x32xf32>,
    %66 = vector.extract_strided_slice %63 {offsets = [16, 0], sizes = [16, 32], strides = [1, 1]} : vector<32x32xf32> to vector<16x32xf32>
    %c0_26 = arith.constant 0 : index
    %c32 = arith.constant 32 : index
    %67 = vector.load %arg14[%c0_26, %c32] : memref<32x128xf32, #tpu.memory_space<vmem>>, vector<16x32xf32>
    tpu.vector_store %arg14[%c0_26, %c32], %66 {strides = array<i32>} : memref<32x128xf32, #tpu.memory_space<vmem>>, vector<16x32xf32>,
    %68 = vector.extract_strided_slice %33 {offsets = [0, 64], sizes = [16, 32], strides = [1, 1]} : vector<32x128xbf16> to vector<16x32xbf16>
    %69 = vector.extract_strided_slice %33 {offsets = [0, 96], sizes = [16, 32], strides = [1, 1]} : vector<32x128xbf16> to vector<16x32xbf16>
    %70 = tpu.concatenate %68, %69 in 0 : vector<16x32xbf16>, vector<16x32xbf16> -> vector<32x32xbf16>
    %71 = vector.extract_strided_slice %35 {offsets = [0, 32], sizes = [16, 32], strides = [1, 1]} : vector<32x64xbf16> to vector<16x32xbf16>
    %72 = vector.extract_strided_slice %37 {offsets = [0, 32], sizes = [16, 32], strides = [1, 1]} : vector<32x64xbf16> to vector<16x32xbf16>
    %cst_27 = arith.constant dense<0.000000e+00> : vector<32x16xf32>
    %73 = tpu.matmul %70, %71, %cst_27 {dimension_numbers = #tpu.dot_dimension_numbers<[1], [1], [0], [0], [0, 0, 1, 0], [], []>} : vector<32x32xbf16>, vector<16x32xbf16>, vector<32x16xf32> -> vector<32x16xf32>
    %74 = arith.addf %73, %44 : vector<32x16xf32>
    %cst_28 = arith.constant dense<0xFF800000> : vector<32xf32>
    %75 = vector.multi_reduction <maximumf>, %74, %cst_28 [1] : vector<32x16xf32> to vector<32xf32>
    %76 = vector.shape_cast %75 : vector<32xf32> to vector<32x1xf32>
    %77 = vector.broadcast %76 : vector<32x1xf32> to vector<32x16xf32>
    %78 = arith.subf %74, %77 : vector<32x16xf32>
    %79 = math.exp %78 : vector<32x16xf32>
    %cst_29 = arith.constant dense<0.000000e+00> : vector<32xf32>
    %80 = vector.multi_reduction <add>, %79, %cst_29 [1] : vector<32x16xf32> to vector<32xf32>
    %81 = vector.shape_cast %80 : vector<32xf32> to vector<32x1xf32>
    %82 = tpu.reciprocal %81 {approx = true} : vector<32x1xf32> -> vector<32x1xf32>
    %83 = vector.broadcast %82 : vector<32x1xf32> to vector<32x16xf32>
    %84 = arith.mulf %79, %83 : vector<32x16xf32>
    %85 = arith.truncf %84 : vector<32x16xf32> to vector<32x16xbf16>
    %cst_30 = arith.constant dense<0.000000e+00> : vector<32x32xf32>
    %86 = tpu.matmul %85, %72, %cst_30 {dimension_numbers = #tpu.dot_dimension_numbers<[1], [0], [0], [1], [0, 0, 1, 1], [], []>} : vector<32x16xbf16>, vector<16x32xbf16>, vector<32x32xf32> -> vector<32x32xf32>
    %87 = vector.extract_strided_slice %86 {offsets = [0, 0], sizes = [16, 32], strides = [1, 1]} : vector<32x32xf32> to vector<16x32xf32>
    %c0_31 = arith.constant 0 : index
    %c64 = arith.constant 64 : index
    %88 = vector.load %arg14[%c0_31, %c64] : memref<32x128xf32, #tpu.memory_space<vmem>>, vector<16x32xf32>
    tpu.vector_store %arg14[%c0_31, %c64], %87 {strides = array<i32>} : memref<32x128xf32, #tpu.memory_space<vmem>>, vector<16x32xf32>,
    %89 = vector.extract_strided_slice %86 {offsets = [16, 0], sizes = [16, 32], strides = [1, 1]} : vector<32x32xf32> to vector<16x32xf32>
    %c0_32 = arith.constant 0 : index
    %c96 = arith.constant 96 : index
    %90 = vector.load %arg14[%c0_32, %c96] : memref<32x128xf32, #tpu.memory_space<vmem>>, vector<16x32xf32>
    tpu.vector_store %arg14[%c0_32, %c96], %89 {strides = array<i32>} : memref<32x128xf32, #tpu.memory_space<vmem>>, vector<16x32xf32>,
    %91 = vector.extract_strided_slice %33 {offsets = [16, 0], sizes = [16, 32], strides = [1, 1]} : vector<32x128xbf16> to vector<16x32xbf16>
    %92 = vector.extract_strided_slice %33 {offsets = [16, 32], sizes = [16, 32], strides = [1, 1]} : vector<32x128xbf16> to vector<16x32xbf16>
    %93 = tpu.concatenate %91, %92 in 0 : vector<16x32xbf16>, vector<16x32xbf16> -> vector<32x32xbf16>
    %94 = vector.extract_strided_slice %35 {offsets = [16, 0], sizes = [16, 32], strides = [1, 1]} : vector<32x64xbf16> to vector<16x32xbf16>
    %95 = vector.extract_strided_slice %37 {offsets = [16, 0], sizes = [16, 32], strides = [1, 1]} : vector<32x64xbf16> to vector<16x32xbf16>
    %cst_33 = arith.constant dense<0.000000e+00> : vector<32x16xf32>
    %96 = tpu.matmul %93, %94, %cst_33 {dimension_numbers = #tpu.dot_dimension_numbers<[1], [1], [0], [0], [0, 0, 1, 0], [], []>} : vector<32x32xbf16>, vector<16x32xbf16>, vector<32x16xf32> -> vector<32x16xf32>
    %97 = arith.addf %96, %44 : vector<32x16xf32>
    %cst_34 = arith.constant dense<0xFF800000> : vector<32xf32>
    %98 = vector.multi_reduction <maximumf>, %97, %cst_34 [1] : vector<32x16xf32> to vector<32xf32>
    %99 = vector.shape_cast %98 : vector<32xf32> to vector<32x1xf32>
    %100 = vector.broadcast %99 : vector<32x1xf32> to vector<32x16xf32>
    %101 = arith.subf %97, %100 : vector<32x16xf32>
    %102 = math.exp %101 : vector<32x16xf32>
    %cst_35 = arith.constant dense<0.000000e+00> : vector<32xf32>
    %103 = vector.multi_reduction <add>, %102, %cst_35 [1] : vector<32x16xf32> to vector<32xf32>
    %104 = vector.shape_cast %103 : vector<32xf32> to vector<32x1xf32>
    %105 = tpu.reciprocal %104 {approx = true} : vector<32x1xf32> -> vector<32x1xf32>
    %106 = vector.broadcast %105 : vector<32x1xf32> to vector<32x16xf32>
    %107 = arith.mulf %102, %106 : vector<32x16xf32>
    %108 = arith.truncf %107 : vector<32x16xf32> to vector<32x16xbf16>
    %cst_36 = arith.constant dense<0.000000e+00> : vector<32x32xf32>
    %109 = tpu.matmul %108, %95, %cst_36 {dimension_numbers = #tpu.dot_dimension_numbers<[1], [0], [0], [1], [0, 0, 1, 1], [], []>} : vector<32x16xbf16>, vector<16x32xbf16>, vector<32x32xf32> -> vector<32x32xf32>
    %110 = vector.extract_strided_slice %109 {offsets = [0, 0], sizes = [16, 32], strides = [1, 1]} : vector<32x32xf32> to vector<16x32xf32>
    %c16 = arith.constant 16 : index
    %c0_37 = arith.constant 0 : index
    %111 = vector.load %arg14[%c16, %c0_37] : memref<32x128xf32, #tpu.memory_space<vmem>>, vector<16x32xf32>
    tpu.vector_store %arg14[%c16, %c0_37], %110 {strides = array<i32>} : memref<32x128xf32, #tpu.memory_space<vmem>>, vector<16x32xf32>,
    %112 = vector.extract_strided_slice %109 {offsets = [16, 0], sizes = [16, 32], strides = [1, 1]} : vector<32x32xf32> to vector<16x32xf32>
    %c16_38 = arith.constant 16 : index
    %c32_39 = arith.constant 32 : index
    %113 = vector.load %arg14[%c16_38, %c32_39] : memref<32x128xf32, #tpu.memory_space<vmem>>, vector<16x32xf32>
    tpu.vector_store %arg14[%c16_38, %c32_39], %112 {strides = array<i32>} : memref<32x128xf32, #tpu.memory_space<vmem>>, vector<16x32xf32>,
    %114 = vector.extract_strided_slice %33 {offsets = [16, 64], sizes = [16, 32], strides = [1, 1]} : vector<32x128xbf16> to vector<16x32xbf16>
    %115 = vector.extract_strided_slice %33 {offsets = [16, 96], sizes = [16, 32], strides = [1, 1]} : vector<32x128xbf16> to vector<16x32xbf16>
    %116 = tpu.concatenate %114, %115 in 0 : vector<16x32xbf16>, vector<16x32xbf16> -> vector<32x32xbf16>
    %117 = vector.extract_strided_slice %35 {offsets = [16, 32], sizes = [16, 32], strides = [1, 1]} : vector<32x64xbf16> to vector<16x32xbf16>
    %118 = vector.extract_strided_slice %37 {offsets = [16, 32], sizes = [16, 32], strides = [1, 1]} : vector<32x64xbf16> to vector<16x32xbf16>
    %cst_40 = arith.constant dense<0.000000e+00> : vector<32x16xf32>
    %119 = tpu.matmul %116, %117, %cst_40 {dimension_numbers = #tpu.dot_dimension_numbers<[1], [1], [0], [0], [0, 0, 1, 0], [], []>} : vector<32x32xbf16>, vector<16x32xbf16>, vector<32x16xf32> -> vector<32x16xf32>
    %120 = arith.addf %119, %44 : vector<32x16xf32>
    %cst_41 = arith.constant dense<0xFF800000> : vector<32xf32>
    %121 = vector.multi_reduction <maximumf>, %120, %cst_41 [1] : vector<32x16xf32> to vector<32xf32>
    %122 = vector.shape_cast %121 : vector<32xf32> to vector<32x1xf32>
    %123 = vector.broadcast %122 : vector<32x1xf32> to vector<32x16xf32>
    %124 = arith.subf %120, %123 : vector<32x16xf32>
    %125 = math.exp %124 : vector<32x16xf32>
    %cst_42 = arith.constant dense<0.000000e+00> : vector<32xf32>
    %126 = vector.multi_reduction <add>, %125, %cst_42 [1] : vector<32x16xf32> to vector<32xf32>
    %127 = vector.shape_cast %126 : vector<32xf32> to vector<32x1xf32>
    %128 = tpu.reciprocal %127 {approx = true} : vector<32x1xf32> -> vector<32x1xf32>
    %129 = vector.broadcast %128 : vector<32x1xf32> to vector<32x16xf32>
    %130 = arith.mulf %125, %129 : vector<32x16xf32>
    %131 = arith.truncf %130 : vector<32x16xf32> to vector<32x16xbf16>
    %cst_43 = arith.constant dense<0.000000e+00> : vector<32x32xf32>
    %132 = tpu.matmul %131, %118, %cst_43 {dimension_numbers = #tpu.dot_dimension_numbers<[1], [0], [0], [1], [0, 0, 1, 1], [], []>} : vector<32x16xbf16>, vector<16x32xbf16>, vector<32x32xf32> -> vector<32x32xf32>
    %133 = vector.extract_strided_slice %132 {offsets = [0, 0], sizes = [16, 32], strides = [1, 1]} : vector<32x32xf32> to vector<16x32xf32>
    %c16_44 = arith.constant 16 : index
    %c64_45 = arith.constant 64 : index
    %134 = vector.load %arg14[%c16_44, %c64_45] : memref<32x128xf32, #tpu.memory_space<vmem>>, vector<16x32xf32>
    tpu.vector_store %arg14[%c16_44, %c64_45], %133 {strides = array<i32>} : memref<32x128xf32, #tpu.memory_space<vmem>>, vector<16x32xf32>,
    %135 = vector.extract_strided_slice %132 {offsets = [16, 0], sizes = [16, 32], strides = [1, 1]} : vector<32x32xf32> to vector<16x32xf32>
    %c16_46 = arith.constant 16 : index
    %c96_47 = arith.constant 96 : index
    %136 = vector.load %arg14[%c16_46, %c96_47] : memref<32x128xf32, #tpu.memory_space<vmem>>, vector<16x32xf32>
    tpu.vector_store %arg14[%c16_46, %c96_47], %135 {strides = array<i32>} : memref<32x128xf32, #tpu.memory_space<vmem>>, vector<16x32xf32>,
    %c0_48 = arith.constant 0 : index
    %c0_49 = arith.constant 0 : index
    %137 = vector.load %arg14[%c0_48, %c0_49] : memref<32x128xf32, #tpu.memory_space<vmem>>, vector<32x128xf32>
    %138 = arith.truncf %137 : vector<32x128xf32> to vector<32x128xbf16>
    %c0_50 = arith.constant 0 : index
    %c0_51 = arith.constant 0 : index
    %139 = vector.load %arg8[%c0_50, %c0_51] : memref<128x128xbf16, #tpu.memory_space<vmem>>, vector<128x128xbf16>
    %cst_52 = arith.constant dense<0.000000e+00> : vector<32x128xf32>
    %140 = tpu.matmul %138, %139, %cst_52 {dimension_numbers = #tpu.dot_dimension_numbers<[1], [0], [0], [1], [0, 0, 1, 1], [], []>} : vector<32x128xbf16>, vector<128x128xbf16>, vector<32x128xf32> -> vector<32x128xf32>
    %141 = arith.addf %1, %140 : vector<32x128xf32>
    %142 = arith.mulf %141, %141 : vector<32x128xf32>
    %cst_53 = arith.constant dense<0.000000e+00> : vector<32xf32>
    %143 = vector.multi_reduction <add>, %142, %cst_53 [1] : vector<32x128xf32> to vector<32xf32>
    %144 = vector.shape_cast %143 : vector<32xf32> to vector<32x1xf32>
    %cst_54 = arith.constant 1.280000e+02 : f32
    %145 = vector.broadcast %cst_54 : f32 to vector<32x1xf32>
    %146 = arith.divf %144, %145 : vector<32x1xf32>
    %cst_55 = arith.constant 9.99999997E-7 : f32
    %147 = vector.broadcast %cst_55 : f32 to vector<32x1xf32>
    %148 = arith.addf %146, %147 : vector<32x1xf32>
    %149 = math.rsqrt %148 : vector<32x1xf32>
    %150 = vector.broadcast %149 : vector<32x1xf32> to vector<32x128xf32>
    %151 = arith.mulf %141, %150 : vector<32x128xf32>
    %c0_56 = arith.constant 0 : index
    %c0_57 = arith.constant 0 : index
    %152 = vector.load %arg9[%c0_56, %c0_57] : memref<1x128xf32, #tpu.memory_space<vmem>>, vector<1x128xf32>
    %153 = vector.broadcast %152 : vector<1x128xf32> to vector<32x128xf32>
    %154 = arith.mulf %151, %153 : vector<32x128xf32>
    %155 = arith.truncf %154 : vector<32x128xf32> to vector<32x128xbf16>
    %c0_58 = arith.constant 0 : index
    %c0_59 = arith.constant 0 : index
    %156 = vector.load %arg10[%c0_58, %c0_59] : memref<128x256xbf16, #tpu.memory_space<vmem>>, vector<128x256xbf16>
    %cst_60 = arith.constant dense<0.000000e+00> : vector<32x256xf32>
    %157 = tpu.matmul %155, %156, %cst_60 {dimension_numbers = #tpu.dot_dimension_numbers<[1], [0], [0], [1], [0, 0, 1, 1], [], []>} : vector<32x128xbf16>, vector<128x256xbf16>, vector<32x256xf32> -> vector<32x256xf32>
    %c0_61 = arith.constant 0 : index
    %c0_62 = arith.constant 0 : index
    %158 = vector.load %arg11[%c0_61, %c0_62] : memref<128x256xbf16, #tpu.memory_space<vmem>>, vector<128x256xbf16>
    %cst_63 = arith.constant dense<0.000000e+00> : vector<32x256xf32>
    %159 = tpu.matmul %155, %158, %cst_63 {dimension_numbers = #tpu.dot_dimension_numbers<[1], [0], [0], [1], [0, 0, 1, 1], [], []>} : vector<32x128xbf16>, vector<128x256xbf16>, vector<32x256xf32> -> vector<32x256xf32>
    %160 = arith.negf %157 : vector<32x256xf32>
    %161 = math.exp %160 : vector<32x256xf32>
    %cst_64 = arith.constant 1.000000e+00 : f32
    %162 = vector.broadcast %cst_64 : f32 to vector<32x256xf32>
    %163 = arith.addf %162, %161 : vector<32x256xf32>
    %164 = arith.divf %162, %163 : vector<32x256xf32>
    %165 = arith.mulf %157, %164 : vector<32x256xf32>
    %166 = arith.mulf %165, %159 : vector<32x256xf32>
    %167 = arith.truncf %166 : vector<32x256xf32> to vector<32x256xbf16>
    %c0_65 = arith.constant 0 : index
    %c0_66 = arith.constant 0 : index
    %168 = vector.load %arg12[%c0_65, %c0_66] : memref<256x128xbf16, #tpu.memory_space<vmem>>, vector<256x128xbf16>
    %cst_67 = arith.constant dense<0.000000e+00> : vector<32x128xf32>
    %169 = tpu.matmul %167, %168, %cst_67 {dimension_numbers = #tpu.dot_dimension_numbers<[1], [0], [0], [1], [0, 0, 1, 1], [], []>} : vector<32x256xbf16>, vector<256x128xbf16>, vector<32x128xf32> -> vector<32x128xf32>
    %170 = arith.addf %141, %169 : vector<32x128xf32>
    %171 = arith.truncf %170 : vector<32x128xf32> to vector<32x128xbf16>
    %c0_68 = arith.constant 0 : index
    %c0_69 = arith.constant 0 : index
    %172 = vector.load %arg13[%c0_68, %c0_69] : memref<32x128xbf16, #tpu.memory_space<vmem>>, vector<32x128xbf16>
    tpu.vector_store %arg13[%c0_68, %c0_69], %171 {strides = array<i32>} : memref<32x128xbf16, #tpu.memory_space<vmem>>, vector<32x128xbf16>,
    return
  }
  func.func @transform_0(%arg0: i32) -> (i32, i32) {
    %c0_i32 = arith.constant 0 : i32
    %c0_i32_0 = arith.constant 0 : i32
    %c0_i32_1 = arith.constant 0 : i32
    return %c0_i32, %c0_i32_0 : i32, i32
  }
  func.func @transform_1(%arg0: i32) -> (i32, i32) {
    %c0_i32 = arith.constant 0 : i32
    %c0_i32_0 = arith.constant 0 : i32
    %c0_i32_1 = arith.constant 0 : i32
    return %c0_i32, %c0_i32_0 : i32, i32
  }
  func.func @transform_2(%arg0: i32) -> (i32, i32) {
    %c0_i32 = arith.constant 0 : i32
    %c0_i32_0 = arith.constant 0 : i32
    %c0_i32_1 = arith.constant 0 : i32
    return %c0_i32, %c0_i32_0 : i32, i32
  }
  func.func @transform_3(%arg0: i32) -> (i32, i32) {
    %c0_i32 = arith.constant 0 : i32
    %c0_i32_0 = arith.constant 0 : i32
    %c0_i32_1 = arith.constant 0 : i32
    return %c0_i32, %c0_i32_0 : i32, i32
  }
  func.func @transform_4(%arg0: i32) -> (i32, i32) {
    %c0_i32 = arith.constant 0 : i32
    %c0_i32_0 = arith.constant 0 : i32
    %c0_i32_1 = arith.constant 0 : i32
    return %c0_i32, %c0_i32_0 : i32, i32
  }
  func.func @transform_5(%arg0: i32) -> (i32, i32) {
    %c0_i32 = arith.constant 0 : i32
    %c0_i32_0 = arith.constant 0 : i32
    %c0_i32_1 = arith.constant 0 : i32
    return %c0_i32, %c0_i32_0 : i32, i32
  }
  func.func @transform_6(%arg0: i32) -> (i32, i32) {
    %c0_i32 = arith.constant 0 : i32
    %c0_i32_0 = arith.constant 0 : i32
    %c0_i32_1 = arith.constant 0 : i32
    return %c0_i32, %c0_i32_0 : i32, i32
  }
  func.func @transform_7(%arg0: i32) -> (i32, i32) {
    %c0_i32 = arith.constant 0 : i32
    %c0_i32_0 = arith.constant 0 : i32
    %c0_i32_1 = arith.constant 0 : i32
    return %c0_i32, %c0_i32_0 : i32, i32
  }
  func.func @transform_8(%arg0: i32) -> (i32, i32) {
    %c0_i32 = arith.constant 0 : i32
    %c0_i32_0 = arith.constant 0 : i32
    %c0_i32_1 = arith.constant 0 : i32
    return %c0_i32, %c0_i32_0 : i32, i32
  }
  func.func @transform_9(%arg0: i32) -> (i32, i32) {
    %c0_i32 = arith.constant 0 : i32
    %c0_i32_0 = arith.constant 0 : i32
    %c0_i32_1 = arith.constant 0 : i32
    return %c0_i32, %c0_i32_0 : i32, i32
  }
  func.func @transform_10(%arg0: i32) -> (i32, i32) {
    %c0_i32 = arith.constant 0 : i32
    %c0_i32_0 = arith.constant 0 : i32
    %c0_i32_1 = arith.constant 0 : i32
    return %c0_i32, %c0_i32_0 : i32, i32
  }
  func.func @transform_11(%arg0: i32) -> (i32, i32) {
    %c0_i32 = arith.constant 0 : i32
    %c0_i32_0 = arith.constant 0 : i32
    %c0_i32_1 = arith.constant 0 : i32
    return %c0_i32, %c0_i32_0 : i32, i32
  }
  func.func @transform_12(%arg0: i32) -> (i32, i32) {
    %c0_i32 = arith.constant 0 : i32
    %c0_i32_0 = arith.constant 0 : i32
    %c0_i32_1 = arith.constant 0 : i32
    return %c0_i32, %c0_i32_0 : i32, i32
  }
}

module attributes {stable_mosaic.version = 11 : i64} {
  func.func @_lm_head_kernel(%arg0: i32, %arg1: memref<32x128xbf16, #tpu.memory_space<vmem>>, %arg2: memref<1x128xf32, #tpu.memory_space<vmem>>, %arg3: memref<128x256xbf16, #tpu.memory_space<vmem>>, %arg4: memref<32x256xf32, #tpu.memory_space<vmem>>, %arg5: memref<32x128xbf16, #tpu.memory_space<vmem>>) attributes {dimension_semantics = [#tpu.dimension_semantics<arbitrary>], iteration_bounds = array<i64: 1>, scalar_prefetch = 0 : i64, scratch_operands = 1 : i64, tpu.core_type = #tpu.core_type<tc>, window_params = [{pipeline_mode = #tpu.pipeline_mode<synchronous>, transform_indices = @transform_0, window_bounds = array<i64: 32, 128>}, {pipeline_mode = #tpu.pipeline_mode<synchronous>, transform_indices = @transform_1, window_bounds = array<i64: 1, 128>}, {transform_indices = @transform_2, window_bounds = array<i64: 128, 256>}, {transform_indices = @transform_3, window_bounds = array<i64: 32, 256>}]} {
    %c0_i32 = arith.constant 0 : i32
    %0 = arith.cmpi eq, %arg0, %c0_i32 : i32
    %1 = arith.extui %0 : i1 to i32
    %c0_i32_0 = arith.constant 0 : i32
    %2 = arith.cmpi ne, %1, %c0_i32_0 : i32
    scf.if %2 {
      %c0_6 = arith.constant 0 : index
      %c0_7 = arith.constant 0 : index
      %7 = vector.load %arg1[%c0_6, %c0_7] : memref<32x128xbf16, #tpu.memory_space<vmem>>, vector<32x128xbf16>
      %8 = arith.extf %7 : vector<32x128xbf16> to vector<32x128xf32>
      %9 = arith.mulf %8, %8 : vector<32x128xf32>
      %cst_8 = arith.constant dense<0.000000e+00> : vector<32xf32>
      %10 = vector.multi_reduction <add>, %9, %cst_8 [1] : vector<32x128xf32> to vector<32xf32>
      %11 = vector.shape_cast %10 : vector<32xf32> to vector<32x1xf32>
      %cst_9 = arith.constant 1.280000e+02 : f32
      %12 = vector.broadcast %cst_9 : f32 to vector<32x1xf32>
      %13 = arith.divf %11, %12 : vector<32x1xf32>
      %cst_10 = arith.constant 9.99999997E-7 : f32
      %14 = vector.broadcast %cst_10 : f32 to vector<32x1xf32>
      %15 = arith.addf %13, %14 : vector<32x1xf32>
      %16 = math.rsqrt %15 : vector<32x1xf32>
      %17 = vector.broadcast %16 : vector<32x1xf32> to vector<32x128xf32>
      %18 = arith.mulf %8, %17 : vector<32x128xf32>
      %c0_11 = arith.constant 0 : index
      %c0_12 = arith.constant 0 : index
      %19 = vector.load %arg2[%c0_11, %c0_12] : memref<1x128xf32, #tpu.memory_space<vmem>>, vector<1x128xf32>
      %20 = vector.broadcast %19 : vector<1x128xf32> to vector<32x128xf32>
      %21 = arith.mulf %18, %20 : vector<32x128xf32>
      %22 = arith.truncf %21 : vector<32x128xf32> to vector<32x128xbf16>
      %c0_13 = arith.constant 0 : index
      %c0_14 = arith.constant 0 : index
      %23 = vector.load %arg5[%c0_13, %c0_14] : memref<32x128xbf16, #tpu.memory_space<vmem>>, vector<32x128xbf16>
      tpu.vector_store %arg5[%c0_13, %c0_14], %22 {strides = array<i32>} : memref<32x128xbf16, #tpu.memory_space<vmem>>, vector<32x128xbf16>,
    } else {
    }
    %c0 = arith.constant 0 : index
    %c0_1 = arith.constant 0 : index
    %3 = vector.load %arg5[%c0, %c0_1] : memref<32x128xbf16, #tpu.memory_space<vmem>>, vector<32x128xbf16>
    %c0_2 = arith.constant 0 : index
    %c0_3 = arith.constant 0 : index
    %4 = vector.load %arg3[%c0_2, %c0_3] : memref<128x256xbf16, #tpu.memory_space<vmem>>, vector<128x256xbf16>
    %cst = arith.constant dense<0.000000e+00> : vector<32x256xf32>
    %5 = tpu.matmul %3, %4, %cst {dimension_numbers = #tpu.dot_dimension_numbers<[1], [0], [0], [1], [0, 0, 1, 1], [], []>} : vector<32x128xbf16>, vector<128x256xbf16>, vector<32x256xf32> -> vector<32x256xf32>
    %c0_4 = arith.constant 0 : index
    %c0_5 = arith.constant 0 : index
    %6 = vector.load %arg4[%c0_4, %c0_5] : memref<32x256xf32, #tpu.memory_space<vmem>>, vector<32x256xf32>
    tpu.vector_store %arg4[%c0_4, %c0_5], %5 {strides = array<i32>} : memref<32x256xf32, #tpu.memory_space<vmem>>, vector<32x256xf32>,
    return
  }
  func.func @transform_0(%arg0: i32) -> (i32, i32) {
    %c0_i32 = arith.constant 0 : i32
    %c0_i32_0 = arith.constant 0 : i32
    %c0_i32_1 = arith.constant 0 : i32
    return %c0_i32, %c0_i32_0 : i32, i32
  }
  func.func @transform_1(%arg0: i32) -> (i32, i32) {
    %c0_i32 = arith.constant 0 : i32
    %c0_i32_0 = arith.constant 0 : i32
    %c0_i32_1 = arith.constant 0 : i32
    return %c0_i32, %c0_i32_0 : i32, i32
  }
  func.func @transform_2(%arg0: i32) -> (i32, i32) {
    %c0_i32 = arith.constant 0 : i32
    %c0_i32_0 = arith.constant 0 : i32
    return %c0_i32, %arg0 : i32, i32
  }
  func.func @transform_3(%arg0: i32) -> (i32, i32) {
    %c0_i32 = arith.constant 0 : i32
    %c0_i32_0 = arith.constant 0 : i32
    return %c0_i32, %arg0 : i32, i32
  }
}

module attributes {stable_mosaic.version = 11 : i64} {
  func.func @_layer_kernel(%arg0: i32, %arg1: memref<32x128xbf16, #tpu.memory_space<vmem>>, %arg2: memref<1x128xf32, #tpu.memory_space<vmem>>, %arg3: memref<128x256xbf16, #tpu.memory_space<vmem>>, %arg4: memref<1x256xf32, #tpu.memory_space<vmem>>, %arg5: memref<192x192xbf16, #tpu.memory_space<vmem>>, %arg6: memref<32x192xf32, #tpu.memory_space<vmem>>, %arg7: memref<32x192xf32, #tpu.memory_space<vmem>>, %arg8: memref<128x128xbf16, #tpu.memory_space<vmem>>, %arg9: memref<1x128xf32, #tpu.memory_space<vmem>>, %arg10: memref<128x256xbf16, #tpu.memory_space<vmem>>, %arg11: memref<128x256xbf16, #tpu.memory_space<vmem>>, %arg12: memref<256x128xbf16, #tpu.memory_space<vmem>>, %arg13: memref<32x128xbf16, #tpu.memory_space<vmem>>, %arg14: memref<32x128xf32, #tpu.memory_space<vmem>>) attributes {dimension_semantics = [#tpu.dimension_semantics<arbitrary>], iteration_bounds = array<i64: 1>, scalar_prefetch = 0 : i64, scratch_operands = 1 : i64, tpu.core_type = #tpu.core_type<tc>, window_params = [{pipeline_mode = #tpu.pipeline_mode<synchronous>, transform_indices = @transform_0, window_bounds = array<i64: 32, 128>}, {pipeline_mode = #tpu.pipeline_mode<synchronous>, transform_indices = @transform_1, window_bounds = array<i64: 1, 128>}, {pipeline_mode = #tpu.pipeline_mode<synchronous>, transform_indices = @transform_2, window_bounds = array<i64: 128, 256>}, {pipeline_mode = #tpu.pipeline_mode<synchronous>, transform_indices = @transform_3, window_bounds = array<i64: 1, 256>}, {pipeline_mode = #tpu.pipeline_mode<synchronous>, transform_indices = @transform_4, window_bounds = array<i64: 192, 192>}, {pipeline_mode = #tpu.pipeline_mode<synchronous>, transform_indices = @transform_5, window_bounds = array<i64: 32, 192>}, {pipeline_mode = #tpu.pipeline_mode<synchronous>, transform_indices = @transform_6, window_bounds = array<i64: 32, 192>}, {pipeline_mode = #tpu.pipeline_mode<synchronous>, transform_indices = @transform_7, window_bounds = array<i64: 128, 128>}, {pipeline_mode = #tpu.pipeline_mode<synchronous>, transform_indices = @transform_8, window_bounds = array<i64: 1, 128>}, {pipeline_mode = #tpu.pipeline_mode<synchronous>, transform_indices = @transform_9, window_bounds = array<i64: 128, 256>}, {pipeline_mode = #tpu.pipeline_mode<synchronous>, transform_indices = @transform_10, window_bounds = array<i64: 128, 256>}, {pipeline_mode = #tpu.pipeline_mode<synchronous>, transform_indices = @transform_11, window_bounds = array<i64: 256, 128>}, {pipeline_mode = #tpu.pipeline_mode<synchronous>, transform_indices = @transform_12, window_bounds = array<i64: 32, 128>}]} {
    %c0 = arith.constant 0 : index
    %c0_0 = arith.constant 0 : index
    %0 = vector.load %arg1[%c0, %c0_0] : memref<32x128xbf16, #tpu.memory_space<vmem>>, vector<32x128xbf16>
    %1 = arith.extf %0 : vector<32x128xbf16> to vector<32x128xf32>
    %2 = arith.mulf %1, %1 : vector<32x128xf32>
    %cst = arith.constant dense<0.000000e+00> : vector<32xf32>
    %3 = vector.multi_reduction <add>, %2, %cst [1] : vector<32x128xf32> to vector<32xf32>
    %4 = vector.shape_cast %3 : vector<32xf32> to vector<32x1xf32>
    %cst_1 = arith.constant 1.280000e+02 : f32
    %5 = vector.broadcast %cst_1 : f32 to vector<32x1xf32>
    %6 = arith.divf %4, %5 : vector<32x1xf32>
    %cst_2 = arith.constant 9.99999997E-7 : f32
    %7 = vector.broadcast %cst_2 : f32 to vector<32x1xf32>
    %8 = arith.addf %6, %7 : vector<32x1xf32>
    %9 = math.rsqrt %8 : vector<32x1xf32>
    %10 = vector.broadcast %9 : vector<32x1xf32> to vector<32x128xf32>
    %11 = arith.mulf %1, %10 : vector<32x128xf32>
    %c0_3 = arith.constant 0 : index
    %c0_4 = arith.constant 0 : index
    %12 = vector.load %arg2[%c0_3, %c0_4] : memref<1x128xf32, #tpu.memory_space<vmem>>, vector<1x128xf32>
    %13 = vector.broadcast %12 : vector<1x128xf32> to vector<32x128xf32>
    %14 = arith.mulf %11, %13 : vector<32x128xf32>
    %15 = arith.truncf %14 : vector<32x128xf32> to vector<32x128xbf16>
    %c0_5 = arith.constant 0 : index
    %c0_6 = arith.constant 0 : index
    %16 = vector.load %arg3[%c0_5, %c0_6] : memref<128x256xbf16, #tpu.memory_space<vmem>>, vector<128x256xbf16>
    %cst_7 = arith.constant dense<0.000000e+00> : vector<32x256xf32>
    %17 = tpu.matmul %15, %16, %cst_7 {dimension_numbers = #tpu.dot_dimension_numbers<[1], [0], [0], [1], [0, 0, 1, 1], [], []>} : vector<32x128xbf16>, vector<128x256xbf16>, vector<32x256xf32> -> vector<32x256xf32>
    %c0_8 = arith.constant 0 : index
    %c0_9 = arith.constant 0 : index
    %18 = vector.load %arg4[%c0_8, %c0_9] : memref<1x256xf32, #tpu.memory_space<vmem>>, vector<1x256xf32>
    %19 = vector.broadcast %18 : vector<1x256xf32> to vector<32x256xf32>
    %20 = arith.addf %17, %19 : vector<32x256xf32>
    %21 = vector.extract_strided_slice %20 {offsets = [0, 0], sizes = [32, 192], strides = [1, 1]} : vector<32x256xf32> to vector<32x192xf32>
    %c0_10 = arith.constant 0 : index
    %c0_11 = arith.constant 0 : index
    %22 = vector.load %arg6[%c0_10, %c0_11] : memref<32x192xf32, #tpu.memory_space<vmem>>, vector<32x192xf32>
    %23 = arith.mulf %21, %22 : vector<32x192xf32>
    %24 = arith.truncf %21 : vector<32x192xf32> to vector<32x192xbf16>
    %c0_12 = arith.constant 0 : index
    %c0_13 = arith.constant 0 : index
    %25 = vector.load %arg5[%c0_12, %c0_13] : memref<192x192xbf16, #tpu.memory_space<vmem>>, vector<192x192xbf16>
    %cst_14 = arith.constant dense<0.000000e+00> : vector<32x192xf32>
    %26 = tpu.matmul %24, %25, %cst_14 {dimension_numbers = #tpu.dot_dimension_numbers<[1], [0], [0], [1], [0, 0, 1, 1], [], []>} : vector<32x192xbf16>, vector<192x192xbf16>, vector<32x192xf32> -> vector<32x192xf32>
    %c0_15 = arith.constant 0 : index
    %c0_16 = arith.constant 0 : index
    %27 = vector.load %arg7[%c0_15, %c0_16] : memref<32x192xf32, #tpu.memory_space<vmem>>, vector<32x192xf32>
    %28 = arith.mulf %26, %27 : vector<32x192xf32>
    %29 = arith.addf %23, %28 : vector<32x192xf32>
    %30 = vector.extract_strided_slice %29 {offsets = [0, 0], sizes = [32, 128], strides = [1, 1]} : vector<32x192xf32> to vector<32x128xf32>
    %cst_17 = arith.constant 0.176776692 : f32
    %31 = vector.broadcast %cst_17 : f32 to vector<32x128xf32>
    %32 = arith.mulf %30, %31 : vector<32x128xf32>
    %33 = arith.truncf %32 : vector<32x128xf32> to vector<32x128xbf16>
    %34 = vector.extract_strided_slice %29 {offsets = [0, 128], sizes = [32, 64], strides = [1, 1]} : vector<32x192xf32> to vector<32x64xf32>
    %35 = arith.truncf %34 : vector<32x64xf32> to vector<32x64xbf16>
    %36 = vector.extract_strided_slice %20 {offsets = [0, 192], sizes = [32, 64], strides = [1, 1]} : vector<32x256xf32> to vector<32x64xf32>
    %37 = arith.truncf %36 : vector<32x64xf32> to vector<32x64xbf16>
    %38 = tpu.iota {dimensions = array<i32: 0>} : vector<16x16xi32>
    %39 = tpu.iota {dimensions = array<i32: 1>} : vector<16x16xi32>
    %40 = arith.cmpi sle, %39, %38 : vector<16x16xi32>
    %cst_18 = arith.constant 0.000000e+00 : f32
    %cst_19 = arith.constant -1.000000e+30 : f32
    %41 = vector.broadcast %cst_18 : f32 to vector<16x16xf32>
    %42 = vector.broadcast %cst_19 : f32 to vector<16x16xf32>
    %43 = arith.select %40, %41, %42 : vector<16x16xi1>, vector<16x16xf32>
    %44 = tpu.concatenate %43, %43 in 0 : vector<16x16xf32>, vector<16x16xf32> -> vector<32x16xf32>
    %45 = vector.extract_strided_slice %33 {offsets = [0, 0], sizes = [16, 32], strides = [1, 1]} : vector<32x128xbf16> to vector<16x32xbf16>
    %46 = vector.extract_strided_slice %33 {offsets = [0, 32], sizes = [16, 32], strides = [1, 1]} : vector<32x128xbf16> to vector<16x32xbf16>
    %47 = tpu.concatenate %45, %46 in 0 : vector<16x32xbf16>, vector<16x32xbf16> -> vector<32x32xbf16>
    %48 = vector.extract_strided_slice %35 {offsets = [0, 0], sizes = [16, 32], strides = [1, 1]} : vector<32x64xbf16> to vector<16x32xbf16>
    %49 = vector.extract_strided_slice %37 {offsets = [0, 0], sizes = [16, 32], strides = [1, 1]} : vector<32x64xbf16> to vector<16x32xbf16>
    %cst_20 = arith.constant dense<0.000000e+00> : vector<32x16xf32>
    %50 = tpu.matmul %47, %48, %cst_20 {dimension_numbers = #tpu.dot_dimension_numbers<[1], [1], [0], [0], [0, 0, 1, 0], [], []>} : vector<32x32xbf16>, vector<16x32xbf16>, vector<32x16xf32> -> vector<32x16xf32>
    %51 = arith.addf %50, %44 : vector<32x16xf32>
    %cst_21 = arith.constant dense<0xFF800000> : vector<32xf32>
    %52 = vector.multi_reduction <maximumf>, %51, %cst_21 [1] : vector<32x16xf32> to vector<32xf32>
    %53 = vector.shape_cast %52 : vector<32xf32> to vector<32x1xf32>
    %54 = vector.broadcast %53 : vector<32x1xf32> to vector<32x16xf32>
    %55 = arith.subf %51, %54 : vector<32x16xf32>
    %56 = math.exp %55 : vector<32x16xf32>
    %cst_22 = arith.constant dense<0.000000e+00> : vector<32xf32>
    %57 = vector.multi_reduction <add>, %56, %cst_22 [1] : vector<32x16xf32> to vector<32xf32>
    %58 = vector.shape_cast %57 : vector<32xf32> to vector<32x1xf32>
    %59 = tpu.reciprocal %58 {approx = true} : vector<32x1xf32> -> vector<32x1xf32>
    %60 = vector.broadcast %59 : vector<32x1xf32> to vector<32x16xf32>
    %61 = arith.mulf %56, %60 : vector<32x16xf32>
    %62 = arith.truncf %61 : vector<32x16xf32> to vector<32x16xbf16>
    %cst_23 = arith.constant dense<0.000000e+00> : vector<32x32xf32>
    %63 = tpu.matmul %62, %49, %cst_23 {dimension_numbers = #tpu.dot_dimension_numbers<[1], [0], [0], [1], [0, 0, 1, 1], [], []>} : vector<32x16xbf16>, vector<16x32xbf16>, vector<32x32xf32> -> vector<32x32xf32>
    %64 = vector.extract_strided_slice %63 {offsets = [0, 0], sizes = [16, 32], strides = [1, 1]} : vector<32x32xf32> to vector<16x32xf32>
    %c0_24 = arith.constant 0 : index
    %c0_25 = arith.constant 0 : index
    %65 = vector.load %arg14[%c0_24, %c0_25] : memref<32x128xf32, #tpu.memory_space<vmem>>, vector<16x32xf32>
    tpu.vector_store %arg14[%c0_24, %c0_25], %64 {strides = array<i32>} : memref<32x128xf32, #tpu.memory_space<vmem>>, vector<16x32xf32>,
    %66 = vector.extract_strided_slice %63 {offsets = [16, 0], sizes = [16, 32], strides = [1, 1]} : vector<32x32xf32> to vector<16x32xf32>
    %c0_26 = arith.constant 0 : index
    %c32 = arith.constant 32 : index
    %67 = vector.load %arg14[%c0_26, %c32] : memref<32x128xf32, #tpu.memory_space<vmem>>, vector<16x32xf32>
    tpu.vector_store %arg14[%c0_26, %c32], %66 {strides = array<i32>} : memref<32x128xf32, #tpu.memory_space<vmem>>, vector<16x32xf32>,
    %68 = vector.extract_strided_slice %33 {offsets = [0, 64], sizes = [16, 32], strides = [1, 1]} : vector<32x128xbf16> to vector<16x32xbf16>
    %69 = vector.extract_strided_slice %33 {offsets = [0, 96], sizes = [16, 32], strides = [1, 1]} : vector<32x128xbf16> to vector<16x32xbf16>
    %70 = tpu.concatenate %68, %69 in 0 : vector<16x32xbf16>, vector<16x32xbf16> -> vector<32x32xbf16>
    %71 = vector.extract_strided_slice %35 {offsets = [0, 32], sizes = [16, 32], strides = [1, 1]} : vector<32x64xbf16> to vector<16x32xbf16>
    %72 = vector.extract_strided_slice %37 {offsets = [0, 32], sizes = [16, 32], strides = [1, 1]} : vector<32x64xbf16> to vector<16x32xbf16>
    %cst_27 = arith.constant dense<0.000000e+00> : vector<32x16xf32>
    %73 = tpu.matmul %70, %71, %cst_27 {dimension_numbers = #tpu.dot_dimension_numbers<[1], [1], [0], [0], [0, 0, 1, 0], [], []>} : vector<32x32xbf16>, vector<16x32xbf16>, vector<32x16xf32> -> vector<32x16xf32>
    %74 = arith.addf %73, %44 : vector<32x16xf32>
    %cst_28 = arith.constant dense<0xFF800000> : vector<32xf32>
    %75 = vector.multi_reduction <maximumf>, %74, %cst_28 [1] : vector<32x16xf32> to vector<32xf32>
    %76 = vector.shape_cast %75 : vector<32xf32> to vector<32x1xf32>
    %77 = vector.broadcast %76 : vector<32x1xf32> to vector<32x16xf32>
    %78 = arith.subf %74, %77 : vector<32x16xf32>
    %79 = math.exp %78 : vector<32x16xf32>
    %cst_29 = arith.constant dense<0.000000e+00> : vector<32xf32>
    %80 = vector.multi_reduction <add>, %79, %cst_29 [1] : vector<32x16xf32> to vector<32xf32>
    %81 = vector.shape_cast %80 : vector<32xf32> to vector<32x1xf32>
    %82 = tpu.reciprocal %81 {approx = true} : vector<32x1xf32> -> vector<32x1xf32>
    %83 = vector.broadcast %82 : vector<32x1xf32> to vector<32x16xf32>
    %84 = arith.mulf %79, %83 : vector<32x16xf32>
    %85 = arith.truncf %84 : vector<32x16xf32> to vector<32x16xbf16>
    %cst_30 = arith.constant dense<0.000000e+00> : vector<32x32xf32>
    %86 = tpu.matmul %85, %72, %cst_30 {dimension_numbers = #tpu.dot_dimension_numbers<[1], [0], [0], [1], [0, 0, 1, 1], [], []>} : vector<32x16xbf16>, vector<16x32xbf16>, vector<32x32xf32> -> vector<32x32xf32>
    %87 = vector.extract_strided_slice %86 {offsets = [0, 0], sizes = [16, 32], strides = [1, 1]} : vector<32x32xf32> to vector<16x32xf32>
    %c0_31 = arith.constant 0 : index
    %c64 = arith.constant 64 : index
    %88 = vector.load %arg14[%c0_31, %c64] : memref<32x128xf32, #tpu.memory_space<vmem>>, vector<16x32xf32>
    tpu.vector_store %arg14[%c0_31, %c64], %87 {strides = array<i32>} : memref<32x128xf32, #tpu.memory_space<vmem>>, vector<16x32xf32>,
    %89 = vector.extract_strided_slice %86 {offsets = [16, 0], sizes = [16, 32], strides = [1, 1]} : vector<32x32xf32> to vector<16x32xf32>
    %c0_32 = arith.constant 0 : index
    %c96 = arith.constant 96 : index
    %90 = vector.load %arg14[%c0_32, %c96] : memref<32x128xf32, #tpu.memory_space<vmem>>, vector<16x32xf32>
    tpu.vector_store %arg14[%c0_32, %c96], %89 {strides = array<i32>} : memref<32x128xf32, #tpu.memory_space<vmem>>, vector<16x32xf32>,
    %91 = vector.extract_strided_slice %33 {offsets = [16, 0], sizes = [16, 32], strides = [1, 1]} : vector<32x128xbf16> to vector<16x32xbf16>
    %92 = vector.extract_strided_slice %33 {offsets = [16, 32], sizes = [16, 32], strides = [1, 1]} : vector<32x128xbf16> to vector<16x32xbf16>
    %93 = tpu.concatenate %91, %92 in 0 : vector<16x32xbf16>, vector<16x32xbf16> -> vector<32x32xbf16>
    %94 = vector.extract_strided_slice %35 {offsets = [16, 0], sizes = [16, 32], strides = [1, 1]} : vector<32x64xbf16> to vector<16x32xbf16>
    %95 = vector.extract_strided_slice %37 {offsets = [16, 0], sizes = [16, 32], strides = [1, 1]} : vector<32x64xbf16> to vector<16x32xbf16>
    %cst_33 = arith.constant dense<0.000000e+00> : vector<32x16xf32>
    %96 = tpu.matmul %93, %94, %cst_33 {dimension_numbers = #tpu.dot_dimension_numbers<[1], [1], [0], [0], [0, 0, 1, 0], [], []>} : vector<32x32xbf16>, vector<16x32xbf16>, vector<32x16xf32> -> vector<32x16xf32>
    %97 = arith.addf %96, %44 : vector<32x16xf32>
    %cst_34 = arith.constant dense<0xFF800000> : vector<32xf32>
    %98 = vector.multi_reduction <maximumf>, %97, %cst_34 [1] : vector<32x16xf32> to vector<32xf32>
    %99 = vector.shape_cast %98 : vector<32xf32> to vector<32x1xf32>
    %100 = vector.broadcast %99 : vector<32x1xf32> to vector<32x16xf32>
    %101 = arith.subf %97, %100 : vector<32x16xf32>
    %102 = math.exp %101 : vector<32x16xf32>
    %cst_35 = arith.constant dense<0.000000e+00> : vector<32xf32>
    %103 = vector.multi_reduction <add>, %102, %cst_35 [1] : vector<32x16xf32> to vector<32xf32>
    %104 = vector.shape_cast %103 : vector<32xf32> to vector<32x1xf32>
    %105 = tpu.reciprocal %104 {approx = true} : vector<32x1xf32> -> vector<32x1xf32>
    %106 = vector.broadcast %105 : vector<32x1xf32> to vector<32x16xf32>
    %107 = arith.mulf %102, %106 : vector<32x16xf32>
    %108 = arith.truncf %107 : vector<32x16xf32> to vector<32x16xbf16>
    %cst_36 = arith.constant dense<0.000000e+00> : vector<32x32xf32>
    %109 = tpu.matmul %108, %95, %cst_36 {dimension_numbers = #tpu.dot_dimension_numbers<[1], [0], [0], [1], [0, 0, 1, 1], [], []>} : vector<32x16xbf16>, vector<16x32xbf16>, vector<32x32xf32> -> vector<32x32xf32>
    %110 = vector.extract_strided_slice %109 {offsets = [0, 0], sizes = [16, 32], strides = [1, 1]} : vector<32x32xf32> to vector<16x32xf32>
    %c16 = arith.constant 16 : index
    %c0_37 = arith.constant 0 : index
    %111 = vector.load %arg14[%c16, %c0_37] : memref<32x128xf32, #tpu.memory_space<vmem>>, vector<16x32xf32>
    tpu.vector_store %arg14[%c16, %c0_37], %110 {strides = array<i32>} : memref<32x128xf32, #tpu.memory_space<vmem>>, vector<16x32xf32>,
    %112 = vector.extract_strided_slice %109 {offsets = [16, 0], sizes = [16, 32], strides = [1, 1]} : vector<32x32xf32> to vector<16x32xf32>
    %c16_38 = arith.constant 16 : index
    %c32_39 = arith.constant 32 : index
    %113 = vector.load %arg14[%c16_38, %c32_39] : memref<32x128xf32, #tpu.memory_space<vmem>>, vector<16x32xf32>
    tpu.vector_store %arg14[%c16_38, %c32_39], %112 {strides = array<i32>} : memref<32x128xf32, #tpu.memory_space<vmem>>, vector<16x32xf32>,
    %114 = vector.extract_strided_slice %33 {offsets = [16, 64], sizes = [16, 32], strides = [1, 1]} : vector<32x128xbf16> to vector<16x32xbf16>
    %115 = vector.extract_strided_slice %33 {offsets = [16, 96], sizes = [16, 32], strides = [1, 1]} : vector<32x128xbf16> to vector<16x32xbf16>
    %116 = tpu.concatenate %114, %115 in 0 : vector<16x32xbf16>, vector<16x32xbf16> -> vector<32x32xbf16>
    %117 = vector.extract_strided_slice %35 {offsets = [16, 32], sizes = [16, 32], strides = [1, 1]} : vector<32x64xbf16> to vector<16x32xbf16>
    %118 = vector.extract_strided_slice %37 {offsets = [16, 32], sizes = [16, 32], strides = [1, 1]} : vector<32x64xbf16> to vector<16x32xbf16>
    %cst_40 = arith.constant dense<0.000000e+00> : vector<32x16xf32>
    %119 = tpu.matmul %116, %117, %cst_40 {dimension_numbers = #tpu.dot_dimension_numbers<[1], [1], [0], [0], [0, 0, 1, 0], [], []>} : vector<32x32xbf16>, vector<16x32xbf16>, vector<32x16xf32> -> vector<32x16xf32>
    %120 = arith.addf %119, %44 : vector<32x16xf32>
    %cst_41 = arith.constant dense<0xFF800000> : vector<32xf32>
    %121 = vector.multi_reduction <maximumf>, %120, %cst_41 [1] : vector<32x16xf32> to vector<32xf32>
    %122 = vector.shape_cast %121 : vector<32xf32> to vector<32x1xf32>
    %123 = vector.broadcast %122 : vector<32x1xf32> to vector<32x16xf32>
    %124 = arith.subf %120, %123 : vector<32x16xf32>
    %125 = math.exp %124 : vector<32x16xf32>
    %cst_42 = arith.constant dense<0.000000e+00> : vector<32xf32>
    %126 = vector.multi_reduction <add>, %125, %cst_42 [1] : vector<32x16xf32> to vector<32xf32>
    %127 = vector.shape_cast %126 : vector<32xf32> to vector<32x1xf32>
    %128 = tpu.reciprocal %127 {approx = true} : vector<32x1xf32> -> vector<32x1xf32>
    %129 = vector.broadcast %128 : vector<32x1xf32> to vector<32x16xf32>
    %130 = arith.mulf %125, %129 : vector<32x16xf32>
    %131 = arith.truncf %130 : vector<32x16xf32> to vector<32x16xbf16>
    %cst_43 = arith.constant dense<0.000000e+00> : vector<32x32xf32>
    %132 = tpu.matmul %131, %118, %cst_43 {dimension_numbers = #tpu.dot_dimension_numbers<[1], [0], [0], [1], [0, 0, 1, 1], [], []>} : vector<32x16xbf16>, vector<16x32xbf16>, vector<32x32xf32> -> vector<32x32xf32>
    %133 = vector.extract_strided_slice %132 {offsets = [0, 0], sizes = [16, 32], strides = [1, 1]} : vector<32x32xf32> to vector<16x32xf32>
    %c16_44 = arith.constant 16 : index
    %c64_45 = arith.constant 64 : index
    %134 = vector.load %arg14[%c16_44, %c64_45] : memref<32x128xf32, #tpu.memory_space<vmem>>, vector<16x32xf32>
    tpu.vector_store %arg14[%c16_44, %c64_45], %133 {strides = array<i32>} : memref<32x128xf32, #tpu.memory_space<vmem>>, vector<16x32xf32>,
    %135 = vector.extract_strided_slice %132 {offsets = [16, 0], sizes = [16, 32], strides = [1, 1]} : vector<32x32xf32> to vector<16x32xf32>
    %c16_46 = arith.constant 16 : index
    %c96_47 = arith.constant 96 : index
    %136 = vector.load %arg14[%c16_46, %c96_47] : memref<32x128xf32, #tpu.memory_space<vmem>>, vector<16x32xf32>
    tpu.vector_store %arg14[%c16_46, %c96_47], %135 {strides = array<i32>} : memref<32x128xf32, #tpu.memory_space<vmem>>, vector<16x32xf32>,
    %c0_48 = arith.constant 0 : index
    %c0_49 = arith.constant 0 : index
    %137 = vector.load %arg14[%c0_48, %c0_49] : memref<32x128xf32, #tpu.memory_space<vmem>>, vector<32x128xf32>
    %138 = arith.truncf %137 : vector<32x128xf32> to vector<32x128xbf16>
    %c0_50 = arith.constant 0 : index
    %c0_51 = arith.constant 0 : index
    %139 = vector.load %arg8[%c0_50, %c0_51] : memref<128x128xbf16, #tpu.memory_space<vmem>>, vector<128x128xbf16>
    %cst_52 = arith.constant dense<0.000000e+00> : vector<32x128xf32>
    %140 = tpu.matmul %138, %139, %cst_52 {dimension_numbers = #tpu.dot_dimension_numbers<[1], [0], [0], [1], [0, 0, 1, 1], [], []>} : vector<32x128xbf16>, vector<128x128xbf16>, vector<32x128xf32> -> vector<32x128xf32>
    %141 = arith.addf %1, %140 : vector<32x128xf32>
    %142 = arith.mulf %141, %141 : vector<32x128xf32>
    %cst_53 = arith.constant dense<0.000000e+00> : vector<32xf32>
    %143 = vector.multi_reduction <add>, %142, %cst_53 [1] : vector<32x128xf32> to vector<32xf32>
    %144 = vector.shape_cast %143 : vector<32xf32> to vector<32x1xf32>
    %cst_54 = arith.constant 1.280000e+02 : f32
    %145 = vector.broadcast %cst_54 : f32 to vector<32x1xf32>
    %146 = arith.divf %144, %145 : vector<32x1xf32>
    %cst_55 = arith.constant 9.99999997E-7 : f32
    %147 = vector.broadcast %cst_55 : f32 to vector<32x1xf32>
    %148 = arith.addf %146, %147 : vector<32x1xf32>
    %149 = math.rsqrt %148 : vector<32x1xf32>
    %150 = vector.broadcast %149 : vector<32x1xf32> to vector<32x128xf32>
    %151 = arith.mulf %141, %150 : vector<32x128xf32>
    %c0_56 = arith.constant 0 : index
    %c0_57 = arith.constant 0 : index
    %152 = vector.load %arg9[%c0_56, %c0_57] : memref<1x128xf32, #tpu.memory_space<vmem>>, vector<1x128xf32>
    %153 = vector.broadcast %152 : vector<1x128xf32> to vector<32x128xf32>
    %154 = arith.mulf %151, %153 : vector<32x128xf32>
    %155 = arith.truncf %154 : vector<32x128xf32> to vector<32x128xbf16>
    %c0_58 = arith.constant 0 : index
    %c0_59 = arith.constant 0 : index
    %156 = vector.load %arg10[%c0_58, %c0_59] : memref<128x256xbf16, #tpu.memory_space<vmem>>, vector<128x256xbf16>
    %cst_60 = arith.constant dense<0.000000e+00> : vector<32x256xf32>
    %157 = tpu.matmul %155, %156, %cst_60 {dimension_numbers = #tpu.dot_dimension_numbers<[1], [0], [0], [1], [0, 0, 1, 1], [], []>} : vector<32x128xbf16>, vector<128x256xbf16>, vector<32x256xf32> -> vector<32x256xf32>
    %c0_61 = arith.constant 0 : index
    %c0_62 = arith.constant 0 : index
    %158 = vector.load %arg11[%c0_61, %c0_62] : memref<128x256xbf16, #tpu.memory_space<vmem>>, vector<128x256xbf16>
    %cst_63 = arith.constant dense<0.000000e+00> : vector<32x256xf32>
    %159 = tpu.matmul %155, %158, %cst_63 {dimension_numbers = #tpu.dot_dimension_numbers<[1], [0], [0], [1], [0, 0, 1, 1], [], []>} : vector<32x128xbf16>, vector<128x256xbf16>, vector<32x256xf32> -> vector<32x256xf32>
    %160 = arith.negf %157 : vector<32x256xf32>
    %161 = math.exp %160 : vector<32x256xf32>
    %cst_64 = arith.constant 1.000000e+00 : f32
    %162 = vector.broadcast %cst_64 : f32 to vector<32x256xf32>
    %163 = arith.addf %162, %161 : vector<32x256xf32>
    %164 = arith.divf %162, %163 : vector<32x256xf32>
    %165 = arith.mulf %157, %164 : vector<32x256xf32>
    %166 = arith.mulf %165, %159 : vector<32x256xf32>
    %167 = arith.truncf %166 : vector<32x256xf32> to vector<32x256xbf16>
    %c0_65 = arith.constant 0 : index
    %c0_66 = arith.constant 0 : index
    %168 = vector.load %arg12[%c0_65, %c0_66] : memref<256x128xbf16, #tpu.memory_space<vmem>>, vector<256x128xbf16>
    %cst_67 = arith.constant dense<0.000000e+00> : vector<32x128xf32>
    %169 = tpu.matmul %167, %168, %cst_67 {dimension_numbers = #tpu.dot_dimension_numbers<[1], [0], [0], [1], [0, 0, 1, 1], [], []>} : vector<32x256xbf16>, vector<256x128xbf16>, vector<32x128xf32> -> vector<32x128xf32>
    %170 = arith.addf %141, %169 : vector<32x128xf32>
    %171 = arith.truncf %170 : vector<32x128xf32> to vector<32x128xbf16>
    %c0_68 = arith.constant 0 : index
    %c0_69 = arith.constant 0 : index
    %172 = vector.load %arg13[%c0_68, %c0_69] : memref<32x128xbf16, #tpu.memory_space<vmem>>, vector<32x128xbf16>
    tpu.vector_store %arg13[%c0_68, %c0_69], %171 {strides = array<i32>} : memref<32x128xbf16, #tpu.memory_space<vmem>>, vector<32x128xbf16>,
    return
  }
  func.func @transform_0(%arg0: i32) -> (i32, i32) {
    %c0_i32 = arith.constant 0 : i32
    %c0_i32_0 = arith.constant 0 : i32
    %c0_i32_1 = arith.constant 0 : i32
    return %c0_i32, %c0_i32_0 : i32, i32
  }
  func.func @transform_1(%arg0: i32) -> (i32, i32) {
    %c0_i32 = arith.constant 0 : i32
    %c0_i32_0 = arith.constant 0 : i32
    %c0_i32_1 = arith.constant 0 : i32
    return %c0_i32, %c0_i32_0 : i32, i32
  }
  func.func @transform_2(%arg0: i32) -> (i32, i32) {
    %c0_i32 = arith.constant 0 : i32
    %c0_i32_0 = arith.constant 0 : i32
    %c0_i32_1 = arith.constant 0 : i32
    return %c0_i32, %c0_i32_0 : i32, i32
  }
  func.func @transform_3(%arg0: i32) -> (i32, i32) {
    %c0_i32 = arith.constant 0 : i32
    %c0_i32_0 = arith.constant 0 : i32
    %c0_i32_1 = arith.constant 0 : i32
    return %c0_i32, %c0_i32_0 : i32, i32
  }
  func.func @transform_4(%arg0: i32) -> (i32, i32) {
    %c0_i32 = arith.constant 0 : i32
    %c0_i32_0 = arith.constant 0 : i32
    %c0_i32_1 = arith.constant 0 : i32
    return %c0_i32, %c0_i32_0 : i32, i32
  }
  func.func @transform_5(%arg0: i32) -> (i32, i32) {
    %c0_i32 = arith.constant 0 : i32
    %c0_i32_0 = arith.constant 0 : i32
    %c0_i32_1 = arith.constant 0 : i32
    return %c0_i32, %c0_i32_0 : i32, i32
  }
  func.func @transform_6(%arg0: i32) -> (i32, i32) {
    %c0_i32 = arith.constant 0 : i32
    %c0_i32_0 = arith.constant 0 : i32
    %c0_i32_1 = arith.constant 0 : i32
    return %c0_i32, %c0_i32_0 : i32, i32
  }
  func.func @transform_7(%arg0: i32) -> (i32, i32) {
    %c0_i32 = arith.constant 0 : i32
    %c0_i32_0 = arith.constant 0 : i32
    %c0_i32_1 = arith.constant 0 : i32
    return %c0_i32, %c0_i32_0 : i32, i32
  }
  func.func @transform_8(%arg0: i32) -> (i32, i32) {
    %c0_i32 = arith.constant 0 : i32
    %c0_i32_0 = arith.constant 0 : i32
    %c0_i32_1 = arith.constant 0 : i32
    return %c0_i32, %c0_i32_0 : i32, i32
  }
  func.func @transform_9(%arg0: i32) -> (i32, i32) {
    %c0_i32 = arith.constant 0 : i32
    %c0_i32_0 = arith.constant 0 : i32
    %c0_i32_1 = arith.constant 0 : i32
    return %c0_i32, %c0_i32_0 : i32, i32
  }
  func.func @transform_10(%arg0: i32) -> (i32, i32) {
    %c0_i32 = arith.constant 0 : i32
    %c0_i32_0 = arith.constant 0 : i32
    %c0_i32_1 = arith.constant 0 : i32
    return %c0_i32, %c0_i32_0 : i32, i32
  }
  func.func @transform_11(%arg0: i32) -> (i32, i32) {
    %c0_i32 = arith.constant 0 : i32
    %c0_i32_0 = arith.constant 0 : i32
    %c0_i32_1 = arith.constant 0 : i32
    return %c0_i32, %c0_i32_0 : i32, i32
  }
  func.func @transform_12(%arg0: i32) -> (i32, i32) {
    %c0_i32 = arith.constant 0 : i32
    %c0_i32_0 = arith.constant 0 : i32
    %c0_i32_1 = arith.constant 0 : i32
    return %c0_i32, %c0_i32_0 : i32, i32
  }
}

</mosaic_0001>

<llo_original>
// kernel: qwen_llm_forward.5
$region0: #{qwen_llm_forward.5}
  #allocation0 [shape = 'u32[]', space=smem, size = 0x4, offset = 0x4, fixed_abs, tag = 'smem constant byte address 0x4 - core index']
  #allocation1 [shape = 'u32[144,128]{1,0:T(1,128)}', space=vmem, size = 0x12000, scoped, tag = 'internal scratch']
  #allocation2 [shape = 'bf16[32,128]{1,0:T(16,128)(2,1)}', space=vmem, size = 0x2000, scoped, tag = 'scratch operand']
  %s0 = inlined_call_operand.vmem [shape: bf16[32,128], index: 0, kind: input, shape index: {}]
  %s1 = inlined_call_operand.vmem [shape: f32[1,128], index: 1, kind: input, shape index: {}]
  %s2 = inlined_call_operand.vmem [shape: bf16[128,256], index: 2, kind: input, shape index: {}]
  %s3 = inlined_call_operand.hbm [shape: f32[32,256], index: 3, kind: output, shape index: {}]
  %s4 = sld [smem:[#allocation0]]
  $region26: #{qwen_llm_forward.5} parent=0
    _
  %s6 = ssub.s32 1, %s4
  %s7 = scalar_select 0, %s6, %s4
  $region1: #{qwen_llm_forward.5} parent=0
    #allocation3 [shape = 'u8[32768]{0}', space=vmem, size = 0x8000, scoped, tag = 'output window, operand 0, single buffered']
    #allocation4 [shape = 's32[1]{0}', space=sflag, size = 0x4, scoped, tag = 'scoped memory for qwen_llm_forward.5']
    %8 = vsyncpa [#allocation4], 0
    // Predicated region
    $region2: #{qwen_llm_forward.5} parent=1 // pred_check
      _
    $region3: #{qwen_llm_forward.5} parent=1 // pred_check_branch
      %10 = sbr.rel (0) target = $region5
    $region4: #{qwen_llm_forward.5} parent=1 // pred_region
      _
    $region5: #{qwen_llm_forward.5} parent=1 // pred_fallthru
      _
    // Predicated region
    $region6: #{qwen_llm_forward.5} parent=1 // pred_check
      _
    $region7: #{qwen_llm_forward.5} parent=1 // pred_check_branch
      %12 = sbr.rel (0) target = $region9
    $region8: #{qwen_llm_forward.5} parent=1 // pred_region
      _
    $region9: #{qwen_llm_forward.5} parent=1 // pred_fallthru
      _
    // Predicated region
    $region10: #{qwen_llm_forward.5} parent=1 // pred_check
      _
    $region11: #{qwen_llm_forward.5} parent=1 // pred_check_branch
      %14 = sbr.rel (0) target = $region13
    $region12: #{qwen_llm_forward.5} parent=1 // pred_region
      _
    $region13: #{qwen_llm_forward.5} parent=1 // pred_fallthru
      _
    %p16 = scmp.eq.s32.totalorder 0, 0
    // Predicated region
    $region14: #{qwen_llm_forward.5} parent=1 // pred_check
      %p17 = pneg %p16
    $region15: #{qwen_llm_forward.5} parent=1 // pred_check_branch
      %19 = sbr.rel (%p17) target = $region17
    $region16: #{qwen_llm_forward.5} parent=1 // pred_region
      %v20 = vld [vmem:[%s0] sm:$0xf]
      %v21 = vld [vmem:[%s0 + $0x4] sm:$0xf]
      %v22 = vld [vmem:[%s0 + $0x8] sm:$0xf]
      %v23 = vld [vmem:[%s0 + $0xc] sm:$0xf]
      %v24 = vunpack.c.l.bf16 %v20
      %v25 = vunpack.c.l.bf16 %v21
      %v26 = vunpack.c.l.bf16 %v22
      %v27 = vunpack.c.l.bf16 %v23
      %v28 = vmul.f32 %v24, %v24
      %v29 = vmul.f32 %v25, %v25
      %v30 = vmul.f32 %v26, %v26
      %v31 = vmul.f32 %v27, %v27
      %32 = vadd.xlane.f32.xlu0 %v28
      %v33 = vpop.xlane.xlu0 %32
      %34 = vadd.xlane.f32.xlu0 %v29
      %v35 = vpop.xlane.xlu0 %34
      %36 = vadd.xlane.f32.xlu0 %v30
      %v37 = vpop.xlane.xlu0 %36
      %38 = vadd.xlane.f32.xlu0 %v31
      %v39 = vpop.xlane.xlu0 %38
      %v40 = vrcp.pop 128.0
      %v41 = vmul.f32 %v33, %v40
      %v42 = vmul.f32 %v35, %v40
      %v43 = vmul.f32 %v37, %v40
      %v44 = vmul.f32 %v39, %v40
      %v45 = vadd.f32 %v41, 1e-06
      %v46 = vadd.f32 %v42, 1e-06
      %v47 = vadd.f32 %v43, 1e-06
      %v48 = vadd.f32 %v44, 1e-06
      %v49 = vrsqrt.pop %v45
      %v50 = vrsqrt.pop %v46
      %v51 = vrsqrt.pop %v47
      %v52 = vrsqrt.pop %v48
      %v53 = vmul.f32 %v24, %v49
      %v54 = vmul.f32 %v25, %v50
      %v55 = vmul.f32 %v26, %v51
      %v56 = vmul.f32 %v27, %v52
      %v57 = vld [vmem:[%s1] sm:$0x1]
      %v59 = vlaneseq
      %v60 = vshrl.u32 %v59, 7
      %v61 = vsub.s32 0, %v60
      %v62 = vrot.slane %v57, %v61
      %v64 = vmul.f32 %v53, %v62
      %v65 = vmul.f32 %v54, %v62
      %v66 = vmul.f32 %v55, %v62
      %v67 = vmul.f32 %v56, %v62
      %v68 = vpack.c.bf16 %v65, %v64
      %v69 = vpack.c.bf16 %v67, %v66
      %70 = vst [vmem:[#allocation2] sm:$0xff] %v68
      %71 = vst [vmem:[#allocation2 + $0x8] sm:$0xff] %v69
    $region17: #{qwen_llm_forward.5} parent=1 // pred_fallthru
      _
    %v72 = vld [vmem:[#allocation2] sm:$0xff]
    %v73 = vld [vmem:[#allocation2 + $0x8] sm:$0xff]
    %v74 = vld [vmem:[%s2] sm:$0xff]
    %v75 = vld [vmem:[%s2 + $0x8] sm:$0xff]
    %v76 = vld [vmem:[%s2 + $0x10] sm:$0xff]
    %v77 = vld [vmem:[%s2 + $0x18] sm:$0xff]
    %v78 = vld [vmem:[%s2 + $0x20] sm:$0xff]
    %v79 = vld [vmem:[%s2 + $0x28] sm:$0xff]
    %v80 = vld [vmem:[%s2 + $0x30] sm:$0xff]
    %v81 = vld [vmem:[%s2 + $0x38] sm:$0xff]
    %v82 = vld [vmem:[%s2 + $0x40] sm:$0xff]
    %v83 = vld [vmem:[%s2 + $0x48] sm:$0xff]
    %v84 = vld [vmem:[%s2 + $0x50] sm:$0xff]
    %v85 = vld [vmem:[%s2 + $0x58] sm:$0xff]
    %v86 = vld [vmem:[%s2 + $0x60] sm:$0xff]
    %v87 = vld [vmem:[%s2 + $0x68] sm:$0xff]
    %v88 = vld [vmem:[%s2 + $0x70] sm:$0xff]
    %v89 = vld [vmem:[%s2 + $0x78] sm:$0xff]
    %v106 = vunpack.c.l.b16 %v74
    %v107 = vunpack.c.h.b16 %v74
    %v108 = vunpack.c.l.b16 %v75
    %v109 = vunpack.c.h.b16 %v75
    %v110 = vunpack.c.l.b16 %v76
    %v111 = vunpack.c.h.b16 %v76
    %v112 = vunpack.c.l.b16 %v77
    %v113 = vunpack.c.h.b16 %v77
    %v114 = vunpack.c.l.b16 %v78
    %v115 = vunpack.c.h.b16 %v78
    %v116 = vunpack.c.l.b16 %v79
    %v117 = vunpack.c.h.b16 %v79
    %v118 = vunpack.c.l.b16 %v80
    %v119 = vunpack.c.h.b16 %v80
    %v120 = vunpack.c.l.b16 %v81
    %v121 = vunpack.c.h.b16 %v81
    %v122 = vunpack.c.l.b16 %v82
    %v123 = vunpack.c.h.b16 %v82
    %v124 = vunpack.c.l.b16 %v83
    %v125 = vunpack.c.h.b16 %v83
    %v126 = vunpack.c.l.b16 %v84
    %v127 = vunpack.c.h.b16 %v84
    %v128 = vunpack.c.l.b16 %v85
    %v129 = vunpack.c.h.b16 %v85
    %v130 = vunpack.c.l.b16 %v86
    %v131 = vunpack.c.h.b16 %v86
    %v132 = vunpack.c.l.b16 %v87
    %v133 = vunpack.c.h.b16 %v87
    %v134 = vunpack.c.l.b16 %v88
    %v135 = vunpack.c.h.b16 %v88
    %v136 = vunpack.c.l.b16 %v89
    %v137 = vunpack.c.h.b16 %v89
    %v138 = vpack.c.b16 %v108, %v106
    %v139 = vpack.c.b16 %v109, %v107
    %v140 = vpack.c.b16 %v112, %v110
    %v141 = vpack.c.b16 %v113, %v111
    %v142 = vpack.c.b16 %v116, %v114
    %v143 = vpack.c.b16 %v117, %v115
    %v144 = vpack.c.b16 %v120, %v118
    %v145 = vpack.c.b16 %v121, %v119
    %v146 = vpack.c.b16 %v124, %v122
    %v147 = vpack.c.b16 %v125, %v123
    %v148 = vpack.c.b16 %v128, %v126
    %v149 = vpack.c.b16 %v129, %v127
    %v150 = vpack.c.b16 %v132, %v130
    %v151 = vpack.c.b16 %v133, %v131
    %v152 = vpack.c.b16 %v136, %v134
    %v153 = vpack.c.b16 %v137, %v135
    %170 = vmatprep.subr.bf16.mxu0 %v139
    %171 = vmatpush1.bf16.msra.mxu0 %v138
    %172 = vmatprep.subr.bf16.mxu0 %v141
    %173 = vmatpush1.bf16.msra.mxu0 %v140
    %174 = vmatprep.subr.bf16.mxu0 %v143
    %175 = vmatpush1.bf16.msra.mxu0 %v142
    %176 = vmatprep.subr.bf16.mxu0 %v145
    %177 = vmatpush1.bf16.msra.mxu0 %v144
    %178 = vmatprep.subr.bf16.mxu0 %v147
    %179 = vmatpush1.bf16.msra.mxu0 %v146
    %180 = vmatprep.subr.bf16.mxu0 %v149
    %181 = vmatpush1.bf16.msra.mxu0 %v148
    %182 = vmatprep.subr.bf16.mxu0 %v151
    %183 = vmatpush1.bf16.msra.mxu0 %v150
    %184 = vmatprep.subr.bf16.mxu0 %v153
    %185 = vmatpush1.bf16.msra.mxu0 %v152
    %186 = vmatprep.subr.bf16.mxu0 0
    %187 = vmatpush1.bf16.msra.mxu0 0
    %188 = vmatprep.subr.bf16.mxu0 0
    %189 = vmatpush1.bf16.msra.mxu0 0
    %190 = vmatprep.subr.bf16.mxu0 0
    %191 = vmatpush1.bf16.msra.mxu0 0
    %192 = vmatprep.subr.bf16.mxu0 0
    %193 = vmatpush1.bf16.msra.mxu0 0
    %194 = vmatprep.subr.bf16.mxu0 0
    %195 = vmatpush1.bf16.msra.mxu0 0
    %196 = vmatprep.subr.bf16.mxu0 0
    %197 = vmatpush1.bf16.msra.mxu0 0
    %198 = vmatprep.subr.bf16.mxu0 0
    %199 = vmatpush1.bf16.msra.mxu0 0
    %200 = vmatprep.subr.bf16.mxu0 0
    %201 = vmatpush1.bf16.msra.mxu0 0
    %202 = vmatprep.mubr.bf16.mxu0 0
    %203 = vmatmul.mubr.bf16.gmra.mrb[0].mxu0 %v72
    %v204 = vpop.f32.mrb[0].mxu0
    %v205 = vadd.f32 0.0, %v204
    %v206 = vpop.f32.mrb[0].mxu0
    %v207 = vadd.f32 0.0, %v206
    %v208 = vpop.f32.mrb[0].mxu0
    %v209 = vadd.f32 0.0, %v208
    %v210 = vpop.f32.mrb[0].mxu0
    %v211 = vadd.f32 0.0, %v210
    %212 = vmatprep.mubr.bf16.mxu0 0
    %213 = vmatmul.mubr.bf16.gmra.mrb[0].mxu0 %v73
    %v214 = vpop.f32.mrb[0].mxu0
    %v215 = vadd.f32 0.0, %v214
    %v216 = vpop.f32.mrb[0].mxu0
    %v217 = vadd.f32 0.0, %v216
    %v218 = vpop.f32.mrb[0].mxu0
    %v219 = vadd.f32 0.0, %v218
    %v220 = vpop.f32.mrb[0].mxu0
    %v221 = vadd.f32 0.0, %v220
    %222 = vdwg.mxu0
    %223 = vst [vmem:[#allocation3] sm:$0xff] %v205
    %224 = vst [vmem:[#allocation3 + $0x8] sm:$0xff] %v207
    %225 = vst [vmem:[#allocation3 + $0x10] sm:$0xff] %v209
    %226 = vst [vmem:[#allocation3 + $0x18] sm:$0xff] %v211
    %227 = vst [vmem:[#allocation3 + $0x20] sm:$0xff] %v215
    %228 = vst [vmem:[#allocation3 + $0x28] sm:$0xff] %v217
    %229 = vst [vmem:[#allocation3 + $0x30] sm:$0xff] %v219
    %230 = vst [vmem:[#allocation3 + $0x38] sm:$0xff] %v221
    // Predicated region
    $region18: #{qwen_llm_forward.5} parent=1 // pred_check
      _
    $region19: #{qwen_llm_forward.5} parent=1 // pred_check_branch
      %232 = sbr.rel (0) target = $region21
    $region20: #{qwen_llm_forward.5} parent=1 // pred_region
      %s234 = ssub.s32 1024, 1024
      %235 = vsyncadd [#allocation4], %s234
      %s236 = sshll.u32 [#allocation3], 4
      %s237 = int_to_ptr.vmem [resolvable:$true] %s236
      %242 = dma.vmem_to_hbm [thread:$0]  %s237, 1024, %s3, [#allocation4], 256, 256, 16
    $region21: #{qwen_llm_forward.5} parent=1 // pred_fallthru
      _
    // Predicated region
    $region22: #{qwen_llm_forward.5} parent=1 // pred_check
      _
    $region23: #{qwen_llm_forward.5} parent=1 // pred_check_branch
      %244 = sbr.rel (0) target = $region25
    $region24: #{qwen_llm_forward.5} parent=1 // pred_region
      %245 = dma.done [#allocation4], 1024
    $region25: #{qwen_llm_forward.5} parent=1 // pred_fallthru
      _
    %246 = vsyncpa [#allocation4], 1

// kernel: qwen_llm_forward.3
$region0: #{qwen_llm_forward.3}
  #allocation0 [shape = 'u32[]', space=smem, size = 0x4, offset = 0x4, fixed_abs, tag = 'smem constant byte address 0x4 - core index']
  #allocation1 [shape = 'u32[144,128]{1,0:T(1,128)}', space=vmem, size = 0x12000, scoped, tag = 'internal scratch']
  #allocation2 [shape = 'f32[32,128]{1,0:T(8,128)}', space=vmem, size = 0x4000, scoped, tag = 'scratch operand']
  %s0 = inlined_call_operand.vmem [shape: bf16[32,128], index: 0, kind: input, shape index: {}]
  %s1 = inlined_call_operand.vmem [shape: f32[1,128], index: 1, kind: input, shape index: {}]
  %s2 = inlined_call_operand.vmem [shape: bf16[128,256], index: 2, kind: input, shape index: {}]
  %s3 = inlined_call_operand.vmem [shape: f32[1,256], index: 3, kind: input, shape index: {}]
  %s4 = inlined_call_operand.vmem [shape: bf16[192,192], index: 4, kind: input, shape index: {}]
  %s5 = inlined_call_operand.vmem [shape: f32[32,192], index: 5, kind: input, shape index: {}]
  %s6 = inlined_call_operand.vmem [shape: f32[32,192], index: 6, kind: input, shape index: {}]
  %s7 = inlined_call_operand.vmem [shape: bf16[128,128], index: 7, kind: input, shape index: {}]
  %s8 = inlined_call_operand.vmem [shape: f32[1,128], index: 8, kind: input, shape index: {}]
  %s9 = inlined_call_operand.hbm [shape: bf16[128,256], index: 9, kind: input, shape index: {}]
  %s10 = inlined_call_operand.hbm [shape: bf16[128,256], index: 10, kind: input, shape index: {}]
  %s11 = inlined_call_operand.hbm [shape: bf16[256,128], index: 11, kind: input, shape index: {}]
  %s12 = inlined_call_operand.vmem [shape: bf16[32,128], index: 12, kind: output, shape index: {}]
  %s13 = sld [smem:[#allocation0]]
  $region70: #{qwen_llm_forward.3} parent=0
    _
  %s15 = ssub.s32 1, %s13
  %s16 = scalar_select 0, %s15, %s13
  $region1: #{qwen_llm_forward.3} parent=0
    #allocation3 [shape = 'u8[65536]{0}', space=vmem, size = 0x10000, scoped, tag = 'input window, operand 9, single buffered']
    #allocation4 [shape = 's32[1]{0}', space=sflag, size = 0x4, scoped, tag = 'scoped memory for qwen_llm_forward.3']
    #allocation5 [shape = 'u8[65536]{0}', space=vmem, size = 0x10000, scoped, tag = 'input window, operand 10, single buffered']
    #allocation6 [shape = 's32[1]{0}', space=sflag, size = 0x4, scoped, tag = 'scoped memory for qwen_llm_forward.3']
    #allocation7 [shape = 'u8[65536]{0}', space=vmem, size = 0x10000, scoped, tag = 'input window, operand 11, single buffered']
    %17 = vsyncpa [#allocation4], 0
    %18 = vsyncpa [#allocation6], 0
    // Predicated region
    $region2: #{qwen_llm_forward.3} parent=1 // pred_check
      _
    $region3: #{qwen_llm_forward.3} parent=1 // pred_check_branch
      %20 = sbr.rel (0) target = $region5
    $region4: #{qwen_llm_forward.3} parent=1 // pred_region
      _
    $region5: #{qwen_llm_forward.3} parent=1 // pred_fallthru
      _
    // Predicated region
    $region6: #{qwen_llm_forward.3} parent=1 // pred_check
      _
    $region7: #{qwen_llm_forward.3} parent=1 // pred_check_branch
      %22 = sbr.rel (0) target = $region9
    $region8: #{qwen_llm_forward.3} parent=1 // pred_region
      _
    $region9: #{qwen_llm_forward.3} parent=1 // pred_fallthru
      _
    // Predicated region
    $region10: #{qwen_llm_forward.3} parent=1 // pred_check
      _
    $region11: #{qwen_llm_forward.3} parent=1 // pred_check_branch
      %24 = sbr.rel (0) target = $region13
    $region12: #{qwen_llm_forward.3} parent=1 // pred_region
      _
    $region13: #{qwen_llm_forward.3} parent=1 // pred_fallthru
      _
    // Predicated region
    $region14: #{qwen_llm_forward.3} parent=1 // pred_check
      _
    $region15: #{qwen_llm_forward.3} parent=1 // pred_check_branch
      %26 = sbr.rel (0) target = $region17
    $region16: #{qwen_llm_forward.3} parent=1 // pred_region
      _
    $region17: #{qwen_llm_forward.3} parent=1 // pred_fallthru
      _
    // Predicated region
    $region18: #{qwen_llm_forward.3} parent=1 // pred_check
      _
    $region19: #{qwen_llm_forward.3} parent=1 // pred_check_branch
      %28 = sbr.rel (0) target = $region21
    $region20: #{qwen_llm_forward.3} parent=1 // pred_region
      _
    $region21: #{qwen_llm_forward.3} parent=1 // pred_fallthru
      _
    // Predicated region
    $region22: #{qwen_llm_forward.3} parent=1 // pred_check
      _
    $region23: #{qwen_llm_forward.3} parent=1 // pred_check_branch
      %30 = sbr.rel (0) target = $region25
    $region24: #{qwen_llm_forward.3} parent=1 // pred_region
      _
    $region25: #{qwen_llm_forward.3} parent=1 // pred_fallthru
      _
    // Predicated region
    $region26: #{qwen_llm_forward.3} parent=1 // pred_check
      _
    $region27: #{qwen_llm_forward.3} parent=1 // pred_check_branch
      %32 = sbr.rel (0) target = $region29
    $region28: #{qwen_llm_forward.3} parent=1 // pred_region
      _
    $region29: #{qwen_llm_forward.3} parent=1 // pred_fallthru
      _
    // Predicated region
    $region30: #{qwen_llm_forward.3} parent=1 // pred_check
      _
    $region31: #{qwen_llm_forward.3} parent=1 // pred_check_branch
      %34 = sbr.rel (0) target = $region33
    $region32: #{qwen_llm_forward.3} parent=1 // pred_region
      _
    $region33: #{qwen_llm_forward.3} parent=1 // pred_fallthru
      _
    // Predicated region
    $region34: #{qwen_llm_forward.3} parent=1 // pred_check
      _
    $region35: #{qwen_llm_forward.3} parent=1 // pred_check_branch
      %36 = sbr.rel (0) target = $region37
    $region36: #{qwen_llm_forward.3} parent=1 // pred_region
      _
    $region37: #{qwen_llm_forward.3} parent=1 // pred_fallthru
      _
    // Predicated region
    $region38: #{qwen_llm_forward.3} parent=1 // pred_check
      _
    $region39: #{qwen_llm_forward.3} parent=1 // pred_check_branch
      %38 = sbr.rel (0) target = $region41
    $region40: #{qwen_llm_forward.3} parent=1 // pred_region
      %s40 = ssub.s32 2048, 2048
      %41 = vsyncadd [#allocation4], %s40
      %s42 = sshll.u32 [#allocation3], 4
      %s43 = int_to_ptr.vmem [resolvable:$true] %s42
      %48 = dma.hbm_to_vmem [thread:$0]  %s9, 2048, %s43, [#allocation4], 128, 128, 8
    $region41: #{qwen_llm_forward.3} parent=1 // pred_fallthru
      _
    // Predicated region
    $region42: #{qwen_llm_forward.3} parent=1 // pred_check
      _
    $region43: #{qwen_llm_forward.3} parent=1 // pred_check_branch
      %50 = sbr.rel (0) target = $region45
    $region44: #{qwen_llm_forward.3} parent=1 // pred_region
      %s52 = ssub.s32 2048, 2048
      %53 = vsyncadd [#allocation6], %s52
      %s54 = sshll.u32 [#allocation5], 4
      %s55 = int_to_ptr.vmem [resolvable:$true] %s54
      %60 = dma.hbm_to_vmem [thread:$0]  %s10, 2048, %s55, [#allocation6], 128, 128, 8
    $region45: #{qwen_llm_forward.3} parent=1 // pred_fallthru
      _
    // Predicated region
    $region46: #{qwen_llm_forward.3} parent=1 // pred_check
      _
    $region47: #{qwen_llm_forward.3} parent=1 // pred_check_branch
      %62 = sbr.rel (0) target = $region49
    $region48: #{qwen_llm_forward.3} parent=1 // pred_region
      %s64 = ssub.s32 2048, 2048
      %65 = vsyncadd [#allocation6], %s64
      %s66 = sshll.u32 [#allocation7], 4
      %s67 = int_to_ptr.vmem [resolvable:$true] %s66
      %72 = dma.hbm_to_vmem [thread:$0]  %s11, 2048, %s67, [#allocation6], 64, 64, 4
    $region49: #{qwen_llm_forward.3} parent=1 // pred_fallthru
      _
    // Predicated region
    $region50: #{qwen_llm_forward.3} parent=1 // pred_check
      _
    $region51: #{qwen_llm_forward.3} parent=1 // pred_check_branch
      %74 = sbr.rel (0) target = $region53
    $region52: #{qwen_llm_forward.3} parent=1 // pred_region
      %75 = dma.done [#allocation4], 2048
    $region53: #{qwen_llm_forward.3} parent=1 // pred_fallthru
      _
    // Predicated region
    $region54: #{qwen_llm_forward.3} parent=1 // pred_check
      _
    $region55: #{qwen_llm_forward.3} parent=1 // pred_check_branch
      %77 = sbr.rel (0) target = $region57
    $region56: #{qwen_llm_forward.3} parent=1 // pred_region
      %78 = dma.done [#allocation6], 2048
    $region57: #{qwen_llm_forward.3} parent=1 // pred_fallthru
      _
    // Predicated region
    $region58: #{qwen_llm_forward.3} parent=1 // pred_check
      _
    $region59: #{qwen_llm_forward.3} parent=1 // pred_check_branch
      %80 = sbr.rel (0) target = $region61
    $region60: #{qwen_llm_forward.3} parent=1 // pred_region
      %81 = dma.done [#allocation6], 2048
    $region61: #{qwen_llm_forward.3} parent=1 // pred_fallthru
      _
    %v83 = vld [vmem:[%s0] sm:$0xf]
    %v84 = vld [vmem:[%s0 + $0x4] sm:$0xf]
    %v85 = vld [vmem:[%s0 + $0x8] sm:$0xf]
    %v86 = vld [vmem:[%s0 + $0xc] sm:$0xf]
    %v87 = vunpack.c.l.bf16 %v83
    %v88 = vunpack.c.l.bf16 %v84
    %v89 = vunpack.c.l.bf16 %v85
    %v90 = vunpack.c.l.bf16 %v86
    %v91 = vmul.f32 %v87, %v87
    %v92 = vmul.f32 %v88, %v88
    %v93 = vmul.f32 %v89, %v89
    %v94 = vmul.f32 %v90, %v90
    %95 = vadd.xlane.f32.xlu0 %v91
    %v96 = vpop.xlane.xlu0 %95
    %97 = vadd.xlane.f32.xlu0 %v92
    %v98 = vpop.xlane.xlu0 %97
    %99 = vadd.xlane.f32.xlu0 %v93
    %v100 = vpop.xlane.xlu0 %99
    %101 = vadd.xlane.f32.xlu0 %v94
    %v102 = vpop.xlane.xlu0 %101
    %v103 = vrcp.pop 128.0
    %v104 = vmul.f32 %v96, %v103
    %v105 = vmul.f32 %v98, %v103
    %v106 = vmul.f32 %v100, %v103
    %v107 = vmul.f32 %v102, %v103
    %v108 = vadd.f32 %v104, 1e-06
    %v109 = vadd.f32 %v105, 1e-06
    %v110 = vadd.f32 %v106, 1e-06
    %v111 = vadd.f32 %v107, 1e-06
    %v112 = vrsqrt.pop %v108
    %v113 = vrsqrt.pop %v109
    %v114 = vrsqrt.pop %v110
    %v115 = vrsqrt.pop %v111
    %v116 = vmul.f32 %v87, %v112
    %v117 = vmul.f32 %v88, %v113
    %v118 = vmul.f32 %v89, %v114
    %v119 = vmul.f32 %v90, %v115
    %v120 = vld [vmem:[%s1] sm:$0x1]
    %v122 = vlaneseq
    %v123 = vshrl.u32 %v122, 7
    %v124 = vsub.s32 0, %v123
    %v125 = vrot.slane %v120, %v124
    %v127 = vmul.f32 %v116, %v125
    %v128 = vmul.f32 %v117, %v125
    %v129 = vmul.f32 %v118, %v125
    %v130 = vmul.f32 %v119, %v125
    %v131 = vpack.c.bf16 %v128, %v127
    %v132 = vpack.c.bf16 %v130, %v129
    %v133 = vld [vmem:[%s2] sm:$0xff]
    %v134 = vld [vmem:[%s2 + $0x8] sm:$0xff]
    %v135 = vld [vmem:[%s2 + $0x10] sm:$0xff]
    %v136 = vld [vmem:[%s2 + $0x18] sm:$0xff]
    %v137 = vld [vmem:[%s2 + $0x20] sm:$0xff]
    %v138 = vld [vmem:[%s2 + $0x28] sm:$0xff]
    %v139 = vld [vmem:[%s2 + $0x30] sm:$0xff]
    %v140 = vld [vmem:[%s2 + $0x38] sm:$0xff]
    %v141 = vld [vmem:[%s2 + $0x40] sm:$0xff]
    %v142 = vld [vmem:[%s2 + $0x48] sm:$0xff]
    %v143 = vld [vmem:[%s2 + $0x50] sm:$0xff]
    %v144 = vld [vmem:[%s2 + $0x58] sm:$0xff]
    %v145 = vld [vmem:[%s2 + $0x60] sm:$0xff]
    %v146 = vld [vmem:[%s2 + $0x68] sm:$0xff]
    %v147 = vld [vmem:[%s2 + $0x70] sm:$0xff]
    %v148 = vld [vmem:[%s2 + $0x78] sm:$0xff]
    %v149 = vld [vmem:[%s3] sm:$0x3]
    %v151 = vlaneseq
    %v152 = vshrl.u32 %v151, 7
    %v153 = vsub.s32 0, %v152
    %v154 = vrot.slane %v149, %v153
    %v155 = vlaneseq
    %v156 = vshrl.u32 %v155, 7
    %v157 = vsub.s32 1, %v156
    %v158 = vrot.slane %v149, %v157
    %v177 = vunpack.c.l.b16 %v133
    %v178 = vunpack.c.h.b16 %v133
    %v179 = vunpack.c.l.b16 %v134
    %v180 = vunpack.c.h.b16 %v134
    %v181 = vunpack.c.l.b16 %v135
    %v182 = vunpack.c.h.b16 %v135
    %v183 = vunpack.c.l.b16 %v136
    %v184 = vunpack.c.h.b16 %v136
    %v185 = vunpack.c.l.b16 %v137
    %v186 = vunpack.c.h.b16 %v137
    %v187 = vunpack.c.l.b16 %v138
    %v188 = vunpack.c.h.b16 %v138
    %v189 = vunpack.c.l.b16 %v139
    %v190 = vunpack.c.h.b16 %v139
    %v191 = vunpack.c.l.b16 %v140
    %v192 = vunpack.c.h.b16 %v140
    %v193 = vunpack.c.l.b16 %v141
    %v194 = vunpack.c.h.b16 %v141
    %v195 = vunpack.c.l.b16 %v142
    %v196 = vunpack.c.h.b16 %v142
    %v197 = vunpack.c.l.b16 %v143
    %v198 = vunpack.c.h.b16 %v143
    %v199 = vunpack.c.l.b16 %v144
    %v200 = vunpack.c.h.b16 %v144
    %v201 = vunpack.c.l.b16 %v145
    %v202 = vunpack.c.h.b16 %v145
    %v203 = vunpack.c.l.b16 %v146
    %v204 = vunpack.c.h.b16 %v146
    %v205 = vunpack.c.l.b16 %v147
    %v206 = vunpack.c.h.b16 %v147
    %v207 = vunpack.c.l.b16 %v148
    %v208 = vunpack.c.h.b16 %v148
    %v209 = vpack.c.b16 %v179, %v177
    %v210 = vpack.c.b16 %v180, %v178
    %v211 = vpack.c.b16 %v183, %v181
    %v212 = vpack.c.b16 %v184, %v182
    %v213 = vpack.c.b16 %v187, %v185
    %v214 = vpack.c.b16 %v188, %v186
    %v215 = vpack.c.b16 %v191, %v189
    %v216 = vpack.c.b16 %v192, %v190
    %v217 = vpack.c.b16 %v195, %v193
    %v218 = vpack.c.b16 %v196, %v194
    %v219 = vpack.c.b16 %v199, %v197
    %v220 = vpack.c.b16 %v200, %v198
    %v221 = vpack.c.b16 %v203, %v201
    %v222 = vpack.c.b16 %v204, %v202
    %v223 = vpack.c.b16 %v207, %v205
    %v224 = vpack.c.b16 %v208, %v206
    %241 = vmatprep.subr.bf16.mxu0 %v210
    %242 = vmatpush1.bf16.msra.mxu0 %v209
    %243 = vmatprep.subr.bf16.mxu0 %v212
    %244 = vmatpush1.bf16.msra.mxu0 %v211
    %245 = vmatprep.subr.bf16.mxu0 %v214
    %246 = vmatpush1.bf16.msra.mxu0 %v213
    %247 = vmatprep.subr.bf16.mxu0 %v216
    %248 = vmatpush1.bf16.msra.mxu0 %v215
    %249 = vmatprep.subr.bf16.mxu0 %v218
    %250 = vmatpush1.bf16.msra.mxu0 %v217
    %251 = vmatprep.subr.bf16.mxu0 %v220
    %252 = vmatpush1.bf16.msra.mxu0 %v219
    %253 = vmatprep.subr.bf16.mxu0 %v222
    %254 = vmatpush1.bf16.msra.mxu0 %v221
    %255 = vmatprep.subr.bf16.mxu0 %v224
    %256 = vmatpush1.bf16.msra.mxu0 %v223
    %257 = vmatprep.subr.bf16.mxu0 0
    %258 = vmatpush1.bf16.msra.mxu0 0
    %259 = vmatprep.subr.bf16.mxu0 0
    %260 = vmatpush1.bf16.msra.mxu0 0
    %261 = vmatprep.subr.bf16.mxu0 0
    %262 = vmatpush1.bf16.msra.mxu0 0
    %263 = vmatprep.subr.bf16.mxu0 0
    %264 = vmatpush1.bf16.msra.mxu0 0
    %265 = vmatprep.subr.bf16.mxu0 0
    %266 = vmatpush1.bf16.msra.mxu0 0
    %267 = vmatprep.subr.bf16.mxu0 0
    %268 = vmatpush1.bf16.msra.mxu0 0
    %269 = vmatprep.subr.bf16.mxu0 0
    %270 = vmatpush1.bf16.msra.mxu0 0
    %271 = vmatprep.subr.bf16.mxu0 0
    %272 = vmatpush1.bf16.msra.mxu0 0
    %273 = vmatprep.mubr.bf16.mxu0 0
    %274 = vmatmul.mubr.bf16.gmra.mrb[0].mxu0 %v131
    %v275 = vpop.f32.mrb[0].mxu0
    %v276 = vadd.f32 %v154, %v275
    %v277 = vpop.f32.mrb[0].mxu0
    %v278 = vadd.f32 %v158, %v277
    %v279 = vpop.f32.mrb[0].mxu0
    %v280 = vadd.f32 %v154, %v279
    %v281 = vpop.f32.mrb[0].mxu0
    %v282 = vadd.f32 %v158, %v281
    %283 = vmatprep.mubr.bf16.mxu0 0
    %284 = vmatmul.mubr.bf16.gmra.mrb[0].mxu0 %v132
    %v285 = vpop.f32.mrb[0].mxu0
    %v286 = vadd.f32 %v154, %v285
    %v287 = vpop.f32.mrb[0].mxu0
    %v288 = vadd.f32 %v158, %v287
    %v289 = vpop.f32.mrb[0].mxu0
    %v290 = vadd.f32 %v154, %v289
    %v291 = vpop.f32.mrb[0].mxu0
    %v292 = vadd.f32 %v158, %v291
    %293 = vdwg.mxu0
    %v294 = vld [vmem:[%s5] sm:$0xff]
    %v295 = vld [vmem:[%s5 + $0x8] sm:$0xff]
    %v296 = vld [vmem:[%s5 + $0x10] sm:$0xff]
    %v297 = vld [vmem:[%s5 + $0x18] sm:$0xff]
    %v298 = vld [vmem:[%s5 + $0x20] sm:$0xff]
    %v299 = vld [vmem:[%s5 + $0x28] sm:$0xff]
    %v300 = vld [vmem:[%s5 + $0x30] sm:$0xff]
    %v301 = vld [vmem:[%s5 + $0x38] sm:$0xff]
    %v302 = vmul.f32 %v276, %v294
    %v303 = vmul.f32 %v278, %v295
    %v304 = vmul.f32 %v280, %v296
    %v305 = vmul.f32 %v282, %v297
    %v306 = vmul.f32 %v286, %v298
    %v307 = vmul.f32 %v288, %v299
    %v308 = vmul.f32 %v290, %v300
    %v309 = vmul.f32 %v292, %v301
    %v310 = vpack.c.bf16 %v280, %v276
    %v311 = vpack.c.bf16 %v282, %v278
    %v312 = vpack.c.bf16 %v290, %v286
    %v313 = vpack.c.bf16 %v292, %v288
    %v314 = vld [vmem:[%s4] sm:$0xff]
    %v315 = vld [vmem:[%s4 + $0x8] sm:$0xff]
    %v316 = vld [vmem:[%s4 + $0x10] sm:$0xff]
    %v317 = vld [vmem:[%s4 + $0x18] sm:$0xff]
    %v318 = vld [vmem:[%s4 + $0x20] sm:$0xff]
    %v319 = vld [vmem:[%s4 + $0x28] sm:$0xff]
    %v320 = vld [vmem:[%s4 + $0x30] sm:$0xff]
    %v321 = vld [vmem:[%s4 + $0x38] sm:$0xff]
    %v322 = vld [vmem:[%s4 + $0x40] sm:$0xff]
    %v323 = vld [vmem:[%s4 + $0x48] sm:$0xff]
    %v324 = vld [vmem:[%s4 + $0x50] sm:$0xff]
    %v325 = vld [vmem:[%s4 + $0x58] sm:$0xff]
    %v326 = vld [vmem:[%s4 + $0x60] sm:$0xff]
    %v327 = vld [vmem:[%s4 + $0x68] sm:$0xff]
    %v328 = vld [vmem:[%s4 + $0x70] sm:$0xff]
    %v329 = vld [vmem:[%s4 + $0x78] sm:$0xff]
    %v330 = vld [vmem:[%s4 + $0x80] sm:$0xff]
    %v331 = vld [vmem:[%s4 + $0x88] sm:$0xff]
    %v332 = vld [vmem:[%s4 + $0x90] sm:$0xff]
    %v333 = vld [vmem:[%s4 + $0x98] sm:$0xff]
    %v334 = vld [vmem:[%s4 + $0xa0] sm:$0xff]
    %v335 = vld [vmem:[%s4 + $0xa8] sm:$0xff]
    %v336 = vld [vmem:[%s4 + $0xb0] sm:$0xff]
    %v337 = vld [vmem:[%s4 + $0xb8] sm:$0xff]
    %v362 = vunpack.c.l.b16 %v314
    %v363 = vunpack.c.h.b16 %v314
    %v364 = vunpack.c.l.b16 %v315
    %v365 = vunpack.c.h.b16 %v315
    %v366 = vunpack.c.l.b16 %v316
    %v367 = vunpack.c.h.b16 %v316
    %v368 = vunpack.c.l.b16 %v317
    %v369 = vunpack.c.h.b16 %v317
    %v370 = vunpack.c.l.b16 %v318
    %v371 = vunpack.c.h.b16 %v318
    %v372 = vunpack.c.l.b16 %v319
    %v373 = vunpack.c.h.b16 %v319
    %v374 = vunpack.c.l.b16 %v320
    %v375 = vunpack.c.h.b16 %v320
    %v376 = vunpack.c.l.b16 %v321
    %v377 = vunpack.c.h.b16 %v321
    %v378 = vunpack.c.l.b16 %v322
    %v379 = vunpack.c.h.b16 %v322
    %v380 = vunpack.c.l.b16 %v323
    %v381 = vunpack.c.h.b16 %v323
    %v382 = vunpack.c.l.b16 %v324
    %v383 = vunpack.c.h.b16 %v324
    %v384 = vunpack.c.l.b16 %v325
    %v385 = vunpack.c.h.b16 %v325
    %v386 = vunpack.c.l.b16 %v326
    %v387 = vunpack.c.h.b16 %v326
    %v388 = vunpack.c.l.b16 %v327
    %v389 = vunpack.c.h.b16 %v327
    %v390 = vunpack.c.l.b16 %v328
    %v391 = vunpack.c.h.b16 %v328
    %v392 = vunpack.c.l.b16 %v329
    %v393 = vunpack.c.h.b16 %v329
    %v394 = vunpack.c.l.b16 %v330
    %v395 = vunpack.c.h.b16 %v330
    %v396 = vunpack.c.l.b16 %v331
    %v397 = vunpack.c.h.b16 %v331
    %v398 = vunpack.c.l.b16 %v332
    %v399 = vunpack.c.h.b16 %v332
    %v400 = vunpack.c.l.b16 %v333
    %v401 = vunpack.c.h.b16 %v333
    %v402 = vunpack.c.l.b16 %v334
    %v403 = vunpack.c.h.b16 %v334
    %v404 = vunpack.c.l.b16 %v335
    %v405 = vunpack.c.h.b16 %v335
    %v406 = vunpack.c.l.b16 %v336
    %v407 = vunpack.c.h.b16 %v336
    %v408 = vunpack.c.l.b16 %v337
    %v409 = vunpack.c.h.b16 %v337
    %v410 = vpack.c.b16 %v364, %v362
    %v411 = vpack.c.b16 %v365, %v363
    %v412 = vpack.c.b16 %v368, %v366
    %v413 = vpack.c.b16 %v369, %v367
    %v414 = vpack.c.b16 %v372, %v370
    %v415 = vpack.c.b16 %v373, %v371
    %v416 = vpack.c.b16 %v376, %v374
    %v417 = vpack.c.b16 %v377, %v375
    %v418 = vpack.c.b16 %v380, %v378
    %v419 = vpack.c.b16 %v381, %v379
    %v420 = vpack.c.b16 %v384, %v382
    %v421 = vpack.c.b16 %v385, %v383
    %v422 = vpack.c.b16 %v388, %v386
    %v423 = vpack.c.b16 %v389, %v387
    %v424 = vpack.c.b16 %v392, %v390
    %v425 = vpack.c.b16 %v393, %v391
    %v426 = vpack.c.b16 %v396, %v394
    %v427 = vpack.c.b16 %v397, %v395
    %v428 = vpack.c.b16 %v400, %v398
    %v429 = vpack.c.b16 %v401, %v399
    %v430 = vpack.c.b16 %v404, %v402
    %v431 = vpack.c.b16 %v405, %v403
    %v432 = vpack.c.b16 %v408, %v406
    %v433 = vpack.c.b16 %v409, %v407
    %vm458 = vcmask 523264
    %v460 = vsel %vm458, %v311, 0
    %v463 = vsel %vm458, %v313, 0
    %465 = vmatprep.subr.bf16.mxu0 %v411
    %466 = vmatpush1.bf16.msra.mxu0 %v410
    %467 = vmatprep.subr.bf16.mxu0 %v413
    %468 = vmatpush1.bf16.msra.mxu0 %v412
    %469 = vmatprep.subr.bf16.mxu0 %v415
    %470 = vmatpush1.bf16.msra.mxu0 %v414
    %471 = vmatprep.subr.bf16.mxu0 %v417
    %472 = vmatpush1.bf16.msra.mxu0 %v416
    %473 = vmatprep.subr.bf16.mxu0 %v419
    %474 = vmatpush1.bf16.msra.mxu0 %v418
    %475 = vmatprep.subr.bf16.mxu0 %v421
    %476 = vmatpush1.bf16.msra.mxu0 %v420
    %477 = vmatprep.subr.bf16.mxu0 %v423
    %478 = vmatpush1.bf16.msra.mxu0 %v422
    %479 = vmatprep.subr.bf16.mxu0 %v425
    %480 = vmatpush1.bf16.msra.mxu0 %v424
    %481 = vmatprep.subr.bf16.mxu0 %v427
    %482 = vmatpush1.bf16.msra.mxu0 %v426
    %483 = vmatprep.subr.bf16.mxu0 %v429
    %484 = vmatpush1.bf16.msra.mxu0 %v428
    %485 = vmatprep.subr.bf16.mxu0 %v431
    %486 = vmatpush1.bf16.msra.mxu0 %v430
    %487 = vmatprep.subr.bf16.mxu0 %v433
    %488 = vmatpush1.bf16.msra.mxu0 %v432
    %489 = vmatprep.subr.bf16.mxu0 0
    %490 = vmatpush1.bf16.msra.mxu0 0
    %491 = vmatprep.subr.bf16.mxu0 0
    %492 = vmatpush1.bf16.msra.mxu0 0
    %493 = vmatprep.subr.bf16.mxu0 0
    %494 = vmatpush1.bf16.msra.mxu0 0
    %495 = vmatprep.subr.bf16.mxu0 0
    %496 = vmatpush1.bf16.msra.mxu0 0
    %497 = vmatprep.mubr.bf16.mxu0 %v460
    %498 = vmatmul.mubr.bf16.gmra.mrb[0].mxu0 %v310
    %v499 = vpop.f32.mrb[0].mxu0
    %v500 = vadd.f32 0.0, %v499
    %v501 = vpop.f32.mrb[0].mxu0
    %v502 = vadd.f32 0.0, %v501
    %v503 = vpop.f32.mrb[0].mxu0
    %v504 = vadd.f32 0.0, %v503
    %v505 = vpop.f32.mrb[0].mxu0
    %v506 = vadd.f32 0.0, %v505
    %507 = vmatprep.mubr.bf16.mxu0 %v463
    %508 = vmatmul.mubr.bf16.gmra.mrb[0].mxu0 %v312
    %v509 = vpop.f32.mrb[0].mxu0
    %v510 = vadd.f32 0.0, %v509
    %v511 = vpop.f32.mrb[0].mxu0
    %v512 = vadd.f32 0.0, %v511
    %v513 = vpop.f32.mrb[0].mxu0
    %v514 = vadd.f32 0.0, %v513
    %v515 = vpop.f32.mrb[0].mxu0
    %v516 = vadd.f32 0.0, %v515
    %517 = vdwg.mxu0
    %v518 = vld [vmem:[%s6] sm:$0xff]
    %v519 = vld [vmem:[%s6 + $0x8] sm:$0xff]
    %v520 = vld [vmem:[%s6 + $0x10] sm:$0xff]
    %v521 = vld [vmem:[%s6 + $0x18] sm:$0xff]
    %v522 = vld [vmem:[%s6 + $0x20] sm:$0xff]
    %v523 = vld [vmem:[%s6 + $0x28] sm:$0xff]
    %v524 = vld [vmem:[%s6 + $0x30] sm:$0xff]
    %v525 = vld [vmem:[%s6 + $0x38] sm:$0xff]
    %v526 = vmul.f32 %v500, %v518
    %v527 = vmul.f32 %v502, %v519
    %v528 = vmul.f32 %v504, %v520
    %v529 = vmul.f32 %v506, %v521
    %v530 = vmul.f32 %v510, %v522
    %v531 = vmul.f32 %v512, %v523
    %v532 = vmul.f32 %v514, %v524
    %v533 = vmul.f32 %v516, %v525
    %v534 = vadd.f32 %v302, %v526
    %v535 = vadd.f32 %v303, %v527
    %v536 = vadd.f32 %v304, %v528
    %v537 = vadd.f32 %v305, %v529
    %v538 = vadd.f32 %v306, %v530
    %v539 = vadd.f32 %v307, %v531
    %v540 = vadd.f32 %v308, %v532
    %v541 = vadd.f32 %v309, %v533
    %v542 = vmul.f32 %v534, 0.17677669
    %v543 = vmul.f32 %v536, 0.17677669
    %v544 = vmul.f32 %v538, 0.17677669
    %v545 = vmul.f32 %v540, 0.17677669
    %v546 = vpack.c.bf16 %v543, %v542
    %v547 = vpack.c.bf16 %v545, %v544
    %v548 = vpack.c.bf16 %v537, %v535
    %v549 = vpack.c.bf16 %v541, %v539
    %v550 = vlaneseq
    %v551 = vshrl.u32 %v550, 7
    %v552 = vadd.s32 %v551, 8
    %v553 = vlaneseq
    %v554 = vand.u32 %v553, 127
    %vm555 = vcmp.le.s32.totalorder %v554, %v551
    %vm556 = vcmp.le.s32.totalorder %v554, %v552
    %v557 = vsel %vm555, 0.0, -1e+30
    %v558 = vsel %vm556, 0.0, -1e+30
    %560 = vrot.lane.b32.xlu0 %v546, 96
    %v561 = vpop.permute.xlu0 %560
    %vm562 = vcmask 261120
    %v564 = vsel %vm562, %v546, 0
    %v567 = vsel %vm562, %v561, 0
    %v570 = vsel %vm562, %v548, 0
    %572 = vmatprep.subr.bf16.mxu0 0
    %573 = vmatpush1.bf16.xpose.msra.mxu0 %v570
    %574 = vmatprep.subr.bf16.mxu0 0
    %575 = vmatpush1.bf16.xpose.msra.mxu0 0
    %576 = vmatprep.subr.bf16.mxu0 0
    %577 = vmatpush1.bf16.xpose.msra.mxu0 0
    %578 = vmatprep.subr.bf16.mxu0 0
    %579 = vmatpush1.bf16.xpose.msra.mxu0 0
    %580 = vmatprep.subr.bf16.mxu0 0
    %581 = vmatpush1.bf16.xpose.msra.mxu0 0
    %582 = vmatprep.subr.bf16.mxu0 0
    %583 = vmatpush1.bf16.xpose.msra.mxu0 0
    %584 = vmatprep.subr.bf16.mxu0 0
    %585 = vmatpush1.bf16.xpose.msra.mxu0 0
    %586 = vmatprep.subr.bf16.mxu0 0
    %587 = vmatpush1.bf16.xpose.msra.mxu0 0
    %588 = vmatprep.subr.bf16.mxu0 0
    %589 = vmatpush1.bf16.xpose.msra.mxu0 0
    %590 = vmatprep.subr.bf16.mxu0 0
    %591 = vmatpush1.bf16.xpose.msra.mxu0 0
    %592 = vmatprep.subr.bf16.mxu0 0
    %593 = vmatpush1.bf16.xpose.msra.mxu0 0
    %594 = vmatprep.subr.bf16.mxu0 0
    %595 = vmatpush1.bf16.xpose.msra.mxu0 0
    %596 = vmatprep.subr.bf16.mxu0 0
    %597 = vmatpush1.bf16.xpose.msra.mxu0 0
    %598 = vmatprep.subr.bf16.mxu0 0
    %599 = vmatpush1.bf16.xpose.msra.mxu0 0
    %600 = vmatprep.subr.bf16.mxu0 0
    %601 = vmatpush1.bf16.xpose.msra.mxu0 0
    %602 = vmatprep.subr.bf16.mxu0 0
    %603 = vmatpush1.bf16.xpose.msra.mxu0 0
    %604 = vmatprep.mubr.bf16.mxu0 0
    %605 = vmatmul.mubr.bf16.gmra.mrb[0].mxu0 %v564
    %v606 = vpop.f32.mrb[0].mxu0
    %v607 = vadd.f32 %v557, %v606
    %v608 = vpop.f32.mrb[0].mxu0
    %v609 = vpop.f32.mrb[0].mxu0
    %v610 = vadd.f32 %v558, %v609
    %v611 = vpop.f32.mrb[0].mxu0
    %612 = vmatprep.mubr.bf16.mxu0 0
    %613 = vmatmul.mubr.bf16.gmra.mrb[0].mxu0 %v567
    %v614 = vpop.f32.mrb[0].mxu0
    %v615 = vadd.f32 %v557, %v614
    %v616 = vpop.f32.mrb[0].mxu0
    %v617 = vpop.f32.mrb[0].mxu0
    %v618 = vadd.f32 %v558, %v617
    %v619 = vpop.f32.mrb[0].mxu0
    %620 = vdwg.mxu0
    %vm621 = vcmask 130048
    %v622 = vsel %vm621, %v607, -inf
    %623 = vmax.xlane.f32.xlu0 %v622
    %v624 = vpop.xlane.xlu0 %623
    %v625 = vsel %vm621, %v610, -inf
    %626 = vmax.xlane.f32.xlu0 %v625
    %v627 = vpop.xlane.xlu0 %626
    %v628 = vsel %vm621, %v615, -inf
    %629 = vmax.xlane.f32.xlu0 %v628
    %v630 = vpop.xlane.xlu0 %629
    %v631 = vsel %vm621, %v618, -inf
    %632 = vmax.xlane.f32.xlu0 %v631
    %v633 = vpop.xlane.xlu0 %632
    %v634 = vsub.f32 %v607, %v624
    %v635 = vsub.f32 %v610, %v627
    %v636 = vsub.f32 %v615, %v630
    %v637 = vsub.f32 %v618, %v633
    %v638 = vmul.f32 %v634, 1.442695
    %v639 = vpow.pop %v638
    %v640 = vmul.f32 %v635, 1.442695
    %v641 = vpow.pop %v640
    %v642 = vmul.f32 %v636, 1.442695
    %v643 = vpow.pop %v642
    %v644 = vmul.f32 %v637, 1.442695
    %v645 = vpow.pop %v644
    %v646 = vsel %vm621, %v639, 0.0
    %647 = vadd.xlane.f32.xlu0 %v646
    %v648 = vpop.xlane.xlu0 %647
    %v649 = vsel %vm621, %v641, 0.0
    %650 = vadd.xlane.f32.xlu0 %v649
    %v651 = vpop.xlane.xlu0 %650
    %v652 = vsel %vm621, %v643, 0.0
    %653 = vadd.xlane.f32.xlu0 %v652
    %v654 = vpop.xlane.xlu0 %653
    %v655 = vsel %vm621, %v645, 0.0
    %656 = vadd.xlane.f32.xlu0 %v655
    %v657 = vpop.xlane.xlu0 %656
    %v658 = vrcp.pop %v648
    %v659 = vrcp.pop %v651
    %v660 = vrcp.pop %v654
    %v661 = vrcp.pop %v657
    %v662 = vmul.f32 %v639, %v658
    %v663 = vmul.f32 %v641, %v659
    %v664 = vmul.f32 %v643, %v660
    %v665 = vmul.f32 %v645, %v661
    %v666 = vpack.c.bf16 %v663, %v662
    %v667 = vpack.c.bf16 %v665, %v664
    %669 = vrot.lane.b32.xlu0 %v311, 64
    %v670 = vpop.permute.xlu0 %669
    %v673 = vsel %vm621, %v666, 0
    %v676 = vsel %vm621, %v667, 0
    %678 = vmatprep.subr.bf16.mxu0 0
    %679 = vmatpush1.bf16.msra.mxu0 %v670
    %680 = vmatprep.subr.bf16.mxu0 0
    %681 = vmatpush1.bf16.msra.mxu0 0
    %682 = vmatprep.subr.bf16.mxu0 0
    %683 = vmatpush1.bf16.msra.mxu0 0
    %684 = vmatprep.subr.bf16.mxu0 0
    %685 = vmatpush1.bf16.msra.mxu0 0
    %686 = vmatprep.subr.bf16.mxu0 0
    %687 = vmatpush1.bf16.msra.mxu0 0
    %688 = vmatprep.subr.bf16.mxu0 0
    %689 = vmatpush1.bf16.msra.mxu0 0
    %690 = vmatprep.subr.bf16.mxu0 0
    %691 = vmatpush1.bf16.msra.mxu0 0
    %692 = vmatprep.subr.bf16.mxu0 0
    %693 = vmatpush1.bf16.msra.mxu0 0
    %694 = vmatprep.subr.bf16.mxu0 0
    %695 = vmatpush1.bf16.msra.mxu0 0
    %696 = vmatprep.subr.bf16.mxu0 0
    %697 = vmatpush1.bf16.msra.mxu0 0
    %698 = vmatprep.subr.bf16.mxu0 0
    %699 = vmatpush1.bf16.msra.mxu0 0
    %700 = vmatprep.subr.bf16.mxu0 0
    %701 = vmatpush1.bf16.msra.mxu0 0
    %702 = vmatprep.subr.bf16.mxu0 0
    %703 = vmatpush1.bf16.msra.mxu0 0
    %704 = vmatprep.subr.bf16.mxu0 0
    %705 = vmatpush1.bf16.msra.mxu0 0
    %706 = vmatprep.subr.bf16.mxu0 0
    %707 = vmatpush1.bf16.msra.mxu0 0
    %708 = vmatprep.subr.bf16.mxu0 0
    %709 = vmatpush1.bf16.msra.mxu0 0
    %710 = vmatprep.mubr.bf16.mxu0 0
    %711 = vmatmul.mubr.bf16.gmra.mrb[0].mxu0 %v673
    %v712 = vpop.f32.mrb[0].mxu0
    %v713 = vadd.f32 0.0, %v712
    %v714 = vpop.f32.mrb[0].mxu0
    %v715 = vpop.f32.mrb[0].mxu0
    %v716 = vadd.f32 0.0, %v715
    %v717 = vpop.f32.mrb[0].mxu0
    %718 = vmatprep.mubr.bf16.mxu0 0
    %719 = vmatmul.mubr.bf16.gmra.mrb[0].mxu0 %v676
    %v720 = vpop.f32.mrb[0].mxu0
    %v721 = vadd.f32 0.0, %v720
    %v722 = vpop.f32.mrb[0].mxu0
    %v723 = vpop.f32.mrb[0].mxu0
    %v724 = vadd.f32 0.0, %v723
    %v725 = vpop.f32.mrb[0].mxu0
    %726 = vdwg.mxu0
    %727 = vst.msk [vmem:[#allocation2] sm:$0xff] %vm562, %v713
    %728 = vst.msk [vmem:[#allocation2 + $0x8] sm:$0xff] %vm562, %v716
    %731 = vrot.lane.b32.xlu0 %v721, 32
    %v732 = vpop.permute.xlu0 %731
    %733 = vrot.lane.b32.xlu0 %v724, 32
    %v734 = vpop.permute.xlu0 %733
    %vm737 = vcmask 523520
    %738 = vst.msk [vmem:[#allocation2] sm:$0xff] %vm737, %v732
    %739 = vst.msk [vmem:[#allocation2 + $0x8] sm:$0xff] %vm737, %v734
    %740 = vrot.lane.b32.xlu0 %v546, 64
    %v741 = vpop.permute.xlu0 %740
    %742 = vrot.lane.b32.xlu0 %v561, 64
    %v743 = vpop.permute.xlu0 %742
    %745 = vrot.lane.b32.xlu0 %v548, 96
    %v746 = vpop.permute.xlu0 %745
    %v748 = vsel %vm562, %v741, 0
    %v751 = vsel %vm562, %v743, 0
    %v754 = vsel %vm562, %v746, 0
    %756 = vmatprep.subr.bf16.mxu0 0
    %757 = vmatpush1.bf16.xpose.msra.mxu0 %v754
    %758 = vmatprep.subr.bf16.mxu0 0
    %759 = vmatpush1.bf16.xpose.msra.mxu0 0
    %760 = vmatprep.subr.bf16.mxu0 0
    %761 = vmatpush1.bf16.xpose.msra.mxu0 0
    %762 = vmatprep.subr.bf16.mxu0 0
    %763 = vmatpush1.bf16.xpose.msra.mxu0 0
    %764 = vmatprep.subr.bf16.mxu0 0
    %765 = vmatpush1.bf16.xpose.msra.mxu0 0
    %766 = vmatprep.subr.bf16.mxu0 0
    %767 = vmatpush1.bf16.xpose.msra.mxu0 0
    %768 = vmatprep.subr.bf16.mxu0 0
    %769 = vmatpush1.bf16.xpose.msra.mxu0 0
    %770 = vmatprep.subr.bf16.mxu0 0
    %771 = vmatpush1.bf16.xpose.msra.mxu0 0
    %772 = vmatprep.subr.bf16.mxu0 0
    %773 = vmatpush1.bf16.xpose.msra.mxu0 0
    %774 = vmatprep.subr.bf16.mxu0 0
    %775 = vmatpush1.bf16.xpose.msra.mxu0 0
    %776 = vmatprep.subr.bf16.mxu0 0
    %777 = vmatpush1.bf16.xpose.msra.mxu0 0
    %778 = vmatprep.subr.bf16.mxu0 0
    %779 = vmatpush1.bf16.xpose.msra.mxu0 0
    %780 = vmatprep.subr.bf16.mxu0 0
    %781 = vmatpush1.bf16.xpose.msra.mxu0 0
    %782 = vmatprep.subr.bf16.mxu0 0
    %783 = vmatpush1.bf16.xpose.msra.mxu0 0
    %784 = vmatprep.subr.bf16.mxu0 0
    %785 = vmatpush1.bf16.xpose.msra.mxu0 0
    %786 = vmatprep.subr.bf16.mxu0 0
    %787 = vmatpush1.bf16.xpose.msra.mxu0 0
    %788 = vmatprep.mubr.bf16.mxu0 0
    %789 = vmatmul.mubr.bf16.gmra.mrb[0].mxu0 %v748
    %v790 = vpop.f32.mrb[0].mxu0
    %v791 = vadd.f32 %v557, %v790
    %v792 = vpop.f32.mrb[0].mxu0
    %v793 = vpop.f32.mrb[0].mxu0
    %v794 = vadd.f32 %v558, %v793
    %v795 = vpop.f32.mrb[0].mxu0
    %796 = vmatprep.mubr.bf16.mxu0 0
    %797 = vmatmul.mubr.bf16.gmra.mrb[0].mxu0 %v751
    %v798 = vpop.f32.mrb[0].mxu0
    %v799 = vadd.f32 %v557, %v798
    %v800 = vpop.f32.mrb[0].mxu0
    %v801 = vpop.f32.mrb[0].mxu0
    %v802 = vadd.f32 %v558, %v801
    %v803 = vpop.f32.mrb[0].mxu0
    %804 = vdwg.mxu0
    %v805 = vsel %vm621, %v791, -inf
    %806 = vmax.xlane.f32.xlu0 %v805
    %v807 = vpop.xlane.xlu0 %806
    %v808 = vsel %vm621, %v794, -inf
    %809 = vmax.xlane.f32.xlu0 %v808
    %v810 = vpop.xlane.xlu0 %809
    %v811 = vsel %vm621, %v799, -inf
    %812 = vmax.xlane.f32.xlu0 %v811
    %v813 = vpop.xlane.xlu0 %812
    %v814 = vsel %vm621, %v802, -inf
    %815 = vmax.xlane.f32.xlu0 %v814
    %v816 = vpop.xlane.xlu0 %815
    %v817 = vsub.f32 %v791, %v807
    %v818 = vsub.f32 %v794, %v810
    %v819 = vsub.f32 %v799, %v813
    %v820 = vsub.f32 %v802, %v816
    %v821 = vmul.f32 %v817, 1.442695
    %v822 = vpow.pop %v821
    %v823 = vmul.f32 %v818, 1.442695
    %v824 = vpow.pop %v823
    %v825 = vmul.f32 %v819, 1.442695
    %v826 = vpow.pop %v825
    %v827 = vmul.f32 %v820, 1.442695
    %v828 = vpow.pop %v827
    %v829 = vsel %vm621, %v822, 0.0
    %830 = vadd.xlane.f32.xlu0 %v829
    %v831 = vpop.xlane.xlu0 %830
    %v832 = vsel %vm621, %v824, 0.0
    %833 = vadd.xlane.f32.xlu0 %v832
    %v834 = vpop.xlane.xlu0 %833
    %v835 = vsel %vm621, %v826, 0.0
    %836 = vadd.xlane.f32.xlu0 %v835
    %v837 = vpop.xlane.xlu0 %836
    %v838 = vsel %vm621, %v828, 0.0
    %839 = vadd.xlane.f32.xlu0 %v838
    %v840 = vpop.xlane.xlu0 %839
    %v841 = vrcp.pop %v831
    %v842 = vrcp.pop %v834
    %v843 = vrcp.pop %v837
    %v844 = vrcp.pop %v840
    %v845 = vmul.f32 %v822, %v841
    %v846 = vmul.f32 %v824, %v842
    %v847 = vmul.f32 %v826, %v843
    %v848 = vmul.f32 %v828, %v844
    %v849 = vpack.c.bf16 %v846, %v845
    %v850 = vpack.c.bf16 %v848, %v847
    %851 = vrot.lane.b32.xlu0 %v311, 32
    %v852 = vpop.permute.xlu0 %851
    %v855 = vsel %vm621, %v849, 0
    %v858 = vsel %vm621, %v850, 0
    %860 = vmatprep.subr.bf16.mxu0 0
    %861 = vmatpush1.bf16.msra.mxu0 %v852
    %862 = vmatprep.subr.bf16.mxu0 0
    %863 = vmatpush1.bf16.msra.mxu0 0
    %864 = vmatprep.subr.bf16.mxu0 0
    %865 = vmatpush1.bf16.msra.mxu0 0
    %866 = vmatprep.subr.bf16.mxu0 0
    %867 = vmatpush1.bf16.msra.mxu0 0
    %868 = vmatprep.subr.bf16.mxu0 0
    %869 = vmatpush1.bf16.msra.mxu0 0
    %870 = vmatprep.subr.bf16.mxu0 0
    %871 = vmatpush1.bf16.msra.mxu0 0
    %872 = vmatprep.subr.bf16.mxu0 0
    %873 = vmatpush1.bf16.msra.mxu0 0
    %874 = vmatprep.subr.bf16.mxu0 0
    %875 = vmatpush1.bf16.msra.mxu0 0
    %876 = vmatprep.subr.bf16.mxu0 0
    %877 = vmatpush1.bf16.msra.mxu0 0
    %878 = vmatprep.subr.bf16.mxu0 0
    %879 = vmatpush1.bf16.msra.mxu0 0
    %880 = vmatprep.subr.bf16.mxu0 0
    %881 = vmatpush1.bf16.msra.mxu0 0
    %882 = vmatprep.subr.bf16.mxu0 0
    %883 = vmatpush1.bf16.msra.mxu0 0
    %884 = vmatprep.subr.bf16.mxu0 0
    %885 = vmatpush1.bf16.msra.mxu0 0
    %886 = vmatprep.subr.bf16.mxu0 0
    %887 = vmatpush1.bf16.msra.mxu0 0
    %888 = vmatprep.subr.bf16.mxu0 0
    %889 = vmatpush1.bf16.msra.mxu0 0
    %890 = vmatprep.subr.bf16.mxu0 0
    %891 = vmatpush1.bf16.msra.mxu0 0
    %892 = vmatprep.mubr.bf16.mxu0 0
    %893 = vmatmul.mubr.bf16.gmra.mrb[0].mxu0 %v855
    %v894 = vpop.f32.mrb[0].mxu0
    %v895 = vadd.f32 0.0, %v894
    %v896 = vpop.f32.mrb[0].mxu0
    %v897 = vpop.f32.mrb[0].mxu0
    %v898 = vadd.f32 0.0, %v897
    %v899 = vpop.f32.mrb[0].mxu0
    %900 = vmatprep.mubr.bf16.mxu0 0
    %901 = vmatmul.mubr.bf16.gmra.mrb[0].mxu0 %v858
    %v902 = vpop.f32.mrb[0].mxu0
    %v903 = vadd.f32 0.0, %v902
    %v904 = vpop.f32.mrb[0].mxu0
    %v905 = vpop.f32.mrb[0].mxu0
    %v906 = vadd.f32 0.0, %v905
    %v907 = vpop.f32.mrb[0].mxu0
    %908 = vdwg.mxu0
    %911 = vrot.lane.b32.xlu0 %v895, 64
    %v912 = vpop.permute.xlu0 %911
    %913 = vrot.lane.b32.xlu0 %v898, 64
    %v914 = vpop.permute.xlu0 %913
    %vm917 = vcmask 785920
    %918 = vst.msk [vmem:[#allocation2] sm:$0xff] %vm917, %v912
    %919 = vst.msk [vmem:[#allocation2 + $0x8] sm:$0xff] %vm917, %v914
    %922 = vrot.lane.b32.xlu0 %v903, 96
    %v923 = vpop.permute.xlu0 %922
    %924 = vrot.lane.b32.xlu0 %v906, 96
    %v925 = vpop.permute.xlu0 %924
    %vm928 = vcmask 1048320
    %929 = vst.msk [vmem:[#allocation2] sm:$0xff] %vm928, %v923
    %930 = vst.msk [vmem:[#allocation2 + $0x8] sm:$0xff] %vm928, %v925
    %932 = vrot.lane.b32.xlu0 %v547, 96
    %v933 = vpop.permute.xlu0 %932
    %v935 = vsel %vm562, %v547, 0
    %v938 = vsel %vm562, %v933, 0
    %v941 = vsel %vm562, %v549, 0
    %943 = vmatprep.subr.bf16.mxu0 0
    %944 = vmatpush1.bf16.xpose.msra.mxu0 %v941
    %945 = vmatprep.subr.bf16.mxu0 0
    %946 = vmatpush1.bf16.xpose.msra.mxu0 0
    %947 = vmatprep.subr.bf16.mxu0 0
    %948 = vmatpush1.bf16.xpose.msra.mxu0 0
    %949 = vmatprep.subr.bf16.mxu0 0
    %950 = vmatpush1.bf16.xpose.msra.mxu0 0
    %951 = vmatprep.subr.bf16.mxu0 0
    %952 = vmatpush1.bf16.xpose.msra.mxu0 0
    %953 = vmatprep.subr.bf16.mxu0 0
    %954 = vmatpush1.bf16.xpose.msra.mxu0 0
    %955 = vmatprep.subr.bf16.mxu0 0
    %956 = vmatpush1.bf16.xpose.msra.mxu0 0
    %957 = vmatprep.subr.bf16.mxu0 0
    %958 = vmatpush1.bf16.xpose.msra.mxu0 0
    %959 = vmatprep.subr.bf16.mxu0 0
    %960 = vmatpush1.bf16.xpose.msra.mxu0 0
    %961 = vmatprep.subr.bf16.mxu0 0
    %962 = vmatpush1.bf16.xpose.msra.mxu0 0
    %963 = vmatprep.subr.bf16.mxu0 0
    %964 = vmatpush1.bf16.xpose.msra.mxu0 0
    %965 = vmatprep.subr.bf16.mxu0 0
    %966 = vmatpush1.bf16.xpose.msra.mxu0 0
    %967 = vmatprep.subr.bf16.mxu0 0
    %968 = vmatpush1.bf16.xpose.msra.mxu0 0
    %969 = vmatprep.subr.bf16.mxu0 0
    %970 = vmatpush1.bf16.xpose.msra.mxu0 0
    %971 = vmatprep.subr.bf16.mxu0 0
    %972 = vmatpush1.bf16.xpose.msra.mxu0 0
    %973 = vmatprep.subr.bf16.mxu0 0
    %974 = vmatpush1.bf16.xpose.msra.mxu0 0
    %975 = vmatprep.mubr.bf16.mxu0 0
    %976 = vmatmul.mubr.bf16.gmra.mrb[0].mxu0 %v935
    %v977 = vpop.f32.mrb[0].mxu0
    %v978 = vadd.f32 %v557, %v977
    %v979 = vpop.f32.mrb[0].mxu0
    %v980 = vpop.f32.mrb[0].mxu0
    %v981 = vadd.f32 %v558, %v980
    %v982 = vpop.f32.mrb[0].mxu0
    %983 = vmatprep.mubr.bf16.mxu0 0
    %984 = vmatmul.mubr.bf16.gmra.mrb[0].mxu0 %v938
    %v985 = vpop.f32.mrb[0].mxu0
    %v986 = vadd.f32 %v557, %v985
    %v987 = vpop.f32.mrb[0].mxu0
    %v988 = vpop.f32.mrb[0].mxu0
    %v989 = vadd.f32 %v558, %v988
    %v990 = vpop.f32.mrb[0].mxu0
    %991 = vdwg.mxu0
    %v992 = vsel %vm621, %v978, -inf
    %993 = vmax.xlane.f32.xlu0 %v992
    %v994 = vpop.xlane.xlu0 %993
    %v995 = vsel %vm621, %v981, -inf
    %996 = vmax.xlane.f32.xlu0 %v995
    %v997 = vpop.xlane.xlu0 %996
    %v998 = vsel %vm621, %v986, -inf
    %999 = vmax.xlane.f32.xlu0 %v998
    %v1000 = vpop.xlane.xlu0 %999
    %v1001 = vsel %vm621, %v989, -inf
    %1002 = vmax.xlane.f32.xlu0 %v1001
    %v1003 = vpop.xlane.xlu0 %1002
    %v1004 = vsub.f32 %v978, %v994
    %v1005 = vsub.f32 %v981, %v997
    %v1006 = vsub.f32 %v986, %v1000
    %v1007 = vsub.f32 %v989, %v1003
    %v1008 = vmul.f32 %v1004, 1.442695
    %v1009 = vpow.pop %v1008
    %v1010 = vmul.f32 %v1005, 1.442695
    %v1011 = vpow.pop %v1010
    %v1012 = vmul.f32 %v1006, 1.442695
    %v1013 = vpow.pop %v1012
    %v1014 = vmul.f32 %v1007, 1.442695
    %v1015 = vpow.pop %v1014
    %v1016 = vsel %vm621, %v1009, 0.0
    %1017 = vadd.xlane.f32.xlu0 %v1016
    %v1018 = vpop.xlane.xlu0 %1017
    %v1019 = vsel %vm621, %v1011, 0.0
    %1020 = vadd.xlane.f32.xlu0 %v1019
    %v1021 = vpop.xlane.xlu0 %1020
    %v1022 = vsel %vm621, %v1013, 0.0
    %1023 = vadd.xlane.f32.xlu0 %v1022
    %v1024 = vpop.xlane.xlu0 %1023
    %v1025 = vsel %vm621, %v1015, 0.0
    %1026 = vadd.xlane.f32.xlu0 %v1025
    %v1027 = vpop.xlane.xlu0 %1026
    %v1028 = vrcp.pop %v1018
    %v1029 = vrcp.pop %v1021
    %v1030 = vrcp.pop %v1024
    %v1031 = vrcp.pop %v1027
    %v1032 = vmul.f32 %v1009, %v1028
    %v1033 = vmul.f32 %v1011, %v1029
    %v1034 = vmul.f32 %v1013, %v1030
    %v1035 = vmul.f32 %v1015, %v1031
    %v1036 = vpack.c.bf16 %v1033, %v1032
    %v1037 = vpack.c.bf16 %v1035, %v1034
    %1039 = vrot.lane.b32.xlu0 %v313, 64
    %v1040 = vpop.permute.xlu0 %1039
    %v1043 = vsel %vm621, %v1036, 0
    %v1046 = vsel %vm621, %v1037, 0
    %1048 = vmatprep.subr.bf16.mxu0 0
    %1049 = vmatpush1.bf16.msra.mxu0 %v1040
    %1050 = vmatprep.subr.bf16.mxu0 0
    %1051 = vmatpush1.bf16.msra.mxu0 0
    %1052 = vmatprep.subr.bf16.mxu0 0
    %1053 = vmatpush1.bf16.msra.mxu0 0
    %1054 = vmatprep.subr.bf16.mxu0 0
    %1055 = vmatpush1.bf16.msra.mxu0 0
    %1056 = vmatprep.subr.bf16.mxu0 0
    %1057 = vmatpush1.bf16.msra.mxu0 0
    %1058 = vmatprep.subr.bf16.mxu0 0
    %1059 = vmatpush1.bf16.msra.mxu0 0
    %1060 = vmatprep.subr.bf16.mxu0 0
    %1061 = vmatpush1.bf16.msra.mxu0 0
    %1062 = vmatprep.subr.bf16.mxu0 0
    %1063 = vmatpush1.bf16.msra.mxu0 0
    %1064 = vmatprep.subr.bf16.mxu0 0
    %1065 = vmatpush1.bf16.msra.mxu0 0
    %1066 = vmatprep.subr.bf16.mxu0 0
    %1067 = vmatpush1.bf16.msra.mxu0 0
    %1068 = vmatprep.subr.bf16.mxu0 0
    %1069 = vmatpush1.bf16.msra.mxu0 0
    %1070 = vmatprep.subr.bf16.mxu0 0
    %1071 = vmatpush1.bf16.msra.mxu0 0
    %1072 = vmatprep.subr.bf16.mxu0 0
    %1073 = vmatpush1.bf16.msra.mxu0 0
    %1074 = vmatprep.subr.bf16.mxu0 0
    %1075 = vmatpush1.bf16.msra.mxu0 0
    %1076 = vmatprep.subr.bf16.mxu0 0
    %1077 = vmatpush1.bf16.msra.mxu0 0
    %1078 = vmatprep.subr.bf16.mxu0 0
    %1079 = vmatpush1.bf16.msra.mxu0 0
    %1080 = vmatprep.mubr.bf16.mxu0 0
    %1081 = vmatmul.mubr.bf16.gmra.mrb[0].mxu0 %v1043
    %v1082 = vpop.f32.mrb[0].mxu0
    %v1083 = vadd.f32 0.0, %v1082
    %v1084 = vpop.f32.mrb[0].mxu0
    %v1085 = vpop.f32.mrb[0].mxu0
    %v1086 = vadd.f32 0.0, %v1085
    %v1087 = vpop.f32.mrb[0].mxu0
    %1088 = vmatprep.mubr.bf16.mxu0 0
    %1089 = vmatmul.mubr.bf16.gmra.mrb[0].mxu0 %v1046
    %v1090 = vpop.f32.mrb[0].mxu0
    %v1091 = vadd.f32 0.0, %v1090
    %v1092 = vpop.f32.mrb[0].mxu0
    %v1093 = vpop.f32.mrb[0].mxu0
    %v1094 = vadd.f32 0.0, %v1093
    %v1095 = vpop.f32.mrb[0].mxu0
    %1096 = vdwg.mxu0
    %1097 = vst.msk [vmem:[#allocation2 + $0x10] sm:$0xff] %vm562, %v1083
    %1098 = vst.msk [vmem:[#allocation2 + $0x18] sm:$0xff] %vm562, %v1086
    %1101 = vrot.lane.b32.xlu0 %v1091, 32
    %v1102 = vpop.permute.xlu0 %1101
    %1103 = vrot.lane.b32.xlu0 %v1094, 32
    %v1104 = vpop.permute.xlu0 %1103
    %1107 = vst.msk [vmem:[#allocation2 + $0x10] sm:$0xff] %vm737, %v1102
    %1108 = vst.msk [vmem:[#allocation2 + $0x18] sm:$0xff] %vm737, %v1104
    %1109 = vrot.lane.b32.xlu0 %v547, 64
    %v1110 = vpop.permute.xlu0 %1109
    %1111 = vrot.lane.b32.xlu0 %v933, 64
    %v1112 = vpop.permute.xlu0 %1111
    %1114 = vrot.lane.b32.xlu0 %v549, 96
    %v1115 = vpop.permute.xlu0 %1114
    %v1117 = vsel %vm562, %v1110, 0
    %v1120 = vsel %vm562, %v1112, 0
    %v1123 = vsel %vm562, %v1115, 0
    %1125 = vmatprep.subr.bf16.mxu0 0
    %1126 = vmatpush1.bf16.xpose.msra.mxu0 %v1123
    %1127 = vmatprep.subr.bf16.mxu0 0
    %1128 = vmatpush1.bf16.xpose.msra.mxu0 0
    %1129 = vmatprep.subr.bf16.mxu0 0
    %1130 = vmatpush1.bf16.xpose.msra.mxu0 0
    %1131 = vmatprep.subr.bf16.mxu0 0
    %1132 = vmatpush1.bf16.xpose.msra.mxu0 0
    %1133 = vmatprep.subr.bf16.mxu0 0
    %1134 = vmatpush1.bf16.xpose.msra.mxu0 0
    %1135 = vmatprep.subr.bf16.mxu0 0
    %1136 = vmatpush1.bf16.xpose.msra.mxu0 0
    %1137 = vmatprep.subr.bf16.mxu0 0
    %1138 = vmatpush1.bf16.xpose.msra.mxu0 0
    %1139 = vmatprep.subr.bf16.mxu0 0
    %1140 = vmatpush1.bf16.xpose.msra.mxu0 0
    %1141 = vmatprep.subr.bf16.mxu0 0
    %1142 = vmatpush1.bf16.xpose.msra.mxu0 0
    %1143 = vmatprep.subr.bf16.mxu0 0
    %1144 = vmatpush1.bf16.xpose.msra.mxu0 0
    %1145 = vmatprep.subr.bf16.mxu0 0
    %1146 = vmatpush1.bf16.xpose.msra.mxu0 0
    %1147 = vmatprep.subr.bf16.mxu0 0
    %1148 = vmatpush1.bf16.xpose.msra.mxu0 0
    %1149 = vmatprep.subr.bf16.mxu0 0
    %1150 = vmatpush1.bf16.xpose.msra.mxu0 0
    %1151 = vmatprep.subr.bf16.mxu0 0
    %1152 = vmatpush1.bf16.xpose.msra.mxu0 0
    %1153 = vmatprep.subr.bf16.mxu0 0
    %1154 = vmatpush1.bf16.xpose.msra.mxu0 0
    %1155 = vmatprep.subr.bf16.mxu0 0
    %1156 = vmatpush1.bf16.xpose.msra.mxu0 0
    %1157 = vmatprep.mubr.bf16.mxu0 0
    %1158 = vmatmul.mubr.bf16.gmra.mrb[0].mxu0 %v1117
    %v1159 = vpop.f32.mrb[0].mxu0
    %v1160 = vadd.f32 %v557, %v1159
    %v1161 = vpop.f32.mrb[0].mxu0
    %v1162 = vpop.f32.mrb[0].mxu0
    %v1163 = vadd.f32 %v558, %v1162
    %v1164 = vpop.f32.mrb[0].mxu0
    %1165 = vmatprep.mubr.bf16.mxu0 0
    %1166 = vmatmul.mubr.bf16.gmra.mrb[0].mxu0 %v1120
    %v1167 = vpop.f32.mrb[0].mxu0
    %v1168 = vadd.f32 %v557, %v1167
    %v1169 = vpop.f32.mrb[0].mxu0
    %v1170 = vpop.f32.mrb[0].mxu0
    %v1171 = vadd.f32 %v558, %v1170
    %v1172 = vpop.f32.mrb[0].mxu0
    %1173 = vdwg.mxu0
    %v1174 = vsel %vm621, %v1160, -inf
    %1175 = vmax.xlane.f32.xlu0 %v1174
    %v1176 = vpop.xlane.xlu0 %1175
    %v1177 = vsel %vm621, %v1163, -inf
    %1178 = vmax.xlane.f32.xlu0 %v1177
    %v1179 = vpop.xlane.xlu0 %1178
    %v1180 = vsel %vm621, %v1168, -inf
    %1181 = vmax.xlane.f32.xlu0 %v1180
    %v1182 = vpop.xlane.xlu0 %1181
    %v1183 = vsel %vm621, %v1171, -inf
    %1184 = vmax.xlane.f32.xlu0 %v1183
    %v1185 = vpop.xlane.xlu0 %1184
    %v1186 = vsub.f32 %v1160, %v1176
    %v1187 = vsub.f32 %v1163, %v1179
    %v1188 = vsub.f32 %v1168, %v1182
    %v1189 = vsub.f32 %v1171, %v1185
    %v1190 = vmul.f32 %v1186, 1.442695
    %v1191 = vpow.pop %v1190
    %v1192 = vmul.f32 %v1187, 1.442695
    %v1193 = vpow.pop %v1192
    %v1194 = vmul.f32 %v1188, 1.442695
    %v1195 = vpow.pop %v1194
    %v1196 = vmul.f32 %v1189, 1.442695
    %v1197 = vpow.pop %v1196
    %v1198 = vsel %vm621, %v1191, 0.0
    %1199 = vadd.xlane.f32.xlu0 %v1198
    %v1200 = vpop.xlane.xlu0 %1199
    %v1201 = vsel %vm621, %v1193, 0.0
    %1202 = vadd.xlane.f32.xlu0 %v1201
    %v1203 = vpop.xlane.xlu0 %1202
    %v1204 = vsel %vm621, %v1195, 0.0
    %1205 = vadd.xlane.f32.xlu0 %v1204
    %v1206 = vpop.xlane.xlu0 %1205
    %v1207 = vsel %vm621, %v1197, 0.0
    %1208 = vadd.xlane.f32.xlu0 %v1207
    %v1209 = vpop.xlane.xlu0 %1208
    %v1210 = vrcp.pop %v1200
    %v1211 = vrcp.pop %v1203
    %v1212 = vrcp.pop %v1206
    %v1213 = vrcp.pop %v1209
    %v1214 = vmul.f32 %v1191, %v1210
    %v1215 = vmul.f32 %v1193, %v1211
    %v1216 = vmul.f32 %v1195, %v1212
    %v1217 = vmul.f32 %v1197, %v1213
    %v1218 = vpack.c.bf16 %v1215, %v1214
    %v1219 = vpack.c.bf16 %v1217, %v1216
    %1220 = vrot.lane.b32.xlu0 %v313, 32
    %v1221 = vpop.permute.xlu0 %1220
    %v1224 = vsel %vm621, %v1218, 0
    %v1227 = vsel %vm621, %v1219, 0
    %1229 = vmatprep.subr.bf16.mxu0 0
    %1230 = vmatpush1.bf16.msra.mxu0 %v1221
    %1231 = vmatprep.subr.bf16.mxu0 0
    %1232 = vmatpush1.bf16.msra.mxu0 0
    %1233 = vmatprep.subr.bf16.mxu0 0
    %1234 = vmatpush1.bf16.msra.mxu0 0
    %1235 = vmatprep.subr.bf16.mxu0 0
    %1236 = vmatpush1.bf16.msra.mxu0 0
    %1237 = vmatprep.subr.bf16.mxu0 0
    %1238 = vmatpush1.bf16.msra.mxu0 0
    %1239 = vmatprep.subr.bf16.mxu0 0
    %1240 = vmatpush1.bf16.msra.mxu0 0
    %1241 = vmatprep.subr.bf16.mxu0 0
    %1242 = vmatpush1.bf16.msra.mxu0 0
    %1243 = vmatprep.subr.bf16.mxu0 0
    %1244 = vmatpush1.bf16.msra.mxu0 0
    %1245 = vmatprep.subr.bf16.mxu0 0
    %1246 = vmatpush1.bf16.msra.mxu0 0
    %1247 = vmatprep.subr.bf16.mxu0 0
    %1248 = vmatpush1.bf16.msra.mxu0 0
    %1249 = vmatprep.subr.bf16.mxu0 0
    %1250 = vmatpush1.bf16.msra.mxu0 0
    %1251 = vmatprep.subr.bf16.mxu0 0
    %1252 = vmatpush1.bf16.msra.mxu0 0
    %1253 = vmatprep.subr.bf16.mxu0 0
    %1254 = vmatpush1.bf16.msra.mxu0 0
    %1255 = vmatprep.subr.bf16.mxu0 0
    %1256 = vmatpush1.bf16.msra.mxu0 0
    %1257 = vmatprep.subr.bf16.mxu0 0
    %1258 = vmatpush1.bf16.msra.mxu0 0
    %1259 = vmatprep.subr.bf16.mxu0 0
    %1260 = vmatpush1.bf16.msra.mxu0 0
    %1261 = vmatprep.mubr.bf16.mxu0 0
    %1262 = vmatmul.mubr.bf16.gmra.mrb[0].mxu0 %v1224
    %v1263 = vpop.f32.mrb[0].mxu0
    %v1264 = vadd.f32 0.0, %v1263
    %v1265 = vpop.f32.mrb[0].mxu0
    %v1266 = vpop.f32.mrb[0].mxu0
    %v1267 = vadd.f32 0.0, %v1266
    %v1268 = vpop.f32.mrb[0].mxu0
    %1269 = vmatprep.mubr.bf16.mxu0 0
    %1270 = vmatmul.mubr.bf16.gmra.mrb[0].mxu0 %v1227
    %v1271 = vpop.f32.mrb[0].mxu0
    %v1272 = vadd.f32 0.0, %v1271
    %v1273 = vpop.f32.mrb[0].mxu0
    %v1274 = vpop.f32.mrb[0].mxu0
    %v1275 = vadd.f32 0.0, %v1274
    %v1276 = vpop.f32.mrb[0].mxu0
    %1277 = vdwg.mxu0
    %1280 = vrot.lane.b32.xlu0 %v1264, 64
    %v1281 = vpop.permute.xlu0 %1280
    %1282 = vrot.lane.b32.xlu0 %v1267, 64
    %v1283 = vpop.permute.xlu0 %1282
    %1286 = vst.msk [vmem:[#allocation2 + $0x10] sm:$0xff] %vm917, %v1281
    %1287 = vst.msk [vmem:[#allocation2 + $0x18] sm:$0xff] %vm917, %v1283
    %1290 = vrot.lane.b32.xlu0 %v1272, 96
    %v1291 = vpop.permute.xlu0 %1290
    %1292 = vrot.lane.b32.xlu0 %v1275, 96
    %v1293 = vpop.permute.xlu0 %1292
    %1296 = vst.msk [vmem:[#allocation2 + $0x10] sm:$0xff] %vm928, %v1291
    %1297 = vst.msk [vmem:[#allocation2 + $0x18] sm:$0xff] %vm928, %v1293
    %v1298 = vld [vmem:[#allocation2] sm:$0xff]
    %v1299 = vld [vmem:[#allocation2 + $0x8] sm:$0xff]
    %v1300 = vld [vmem:[#allocation2 + $0x10] sm:$0xff]
    %v1301 = vld [vmem:[#allocation2 + $0x18] sm:$0xff]
    %v1302 = vpack.c.bf16 %v1299, %v1298
    %v1303 = vpack.c.bf16 %v1301, %v1300
    %v1304 = vld [vmem:[%s7] sm:$0xf]
    %v1305 = vld [vmem:[%s7 + $0x4] sm:$0xf]
    %v1306 = vld [vmem:[%s7 + $0x8] sm:$0xf]
    %v1307 = vld [vmem:[%s7 + $0xc] sm:$0xf]
    %v1308 = vld [vmem:[%s7 + $0x10] sm:$0xf]
    %v1309 = vld [vmem:[%s7 + $0x14] sm:$0xf]
    %v1310 = vld [vmem:[%s7 + $0x18] sm:$0xf]
    %v1311 = vld [vmem:[%s7 + $0x1c] sm:$0xf]
    %v1312 = vld [vmem:[%s7 + $0x20] sm:$0xf]
    %v1313 = vld [vmem:[%s7 + $0x24] sm:$0xf]
    %v1314 = vld [vmem:[%s7 + $0x28] sm:$0xf]
    %v1315 = vld [vmem:[%s7 + $0x2c] sm:$0xf]
    %v1316 = vld [vmem:[%s7 + $0x30] sm:$0xf]
    %v1317 = vld [vmem:[%s7 + $0x34] sm:$0xf]
    %v1318 = vld [vmem:[%s7 + $0x38] sm:$0xf]
    %v1319 = vld [vmem:[%s7 + $0x3c] sm:$0xf]
    %v1336 = vunpack.c.l.b16 %v1304
    %v1337 = vunpack.c.l.b16 %v1305
    %v1338 = vunpack.c.l.b16 %v1306
    %v1339 = vunpack.c.l.b16 %v1307
    %v1340 = vunpack.c.l.b16 %v1308
    %v1341 = vunpack.c.l.b16 %v1309
    %v1342 = vunpack.c.l.b16 %v1310
    %v1343 = vunpack.c.l.b16 %v1311
    %v1344 = vunpack.c.l.b16 %v1312
    %v1345 = vunpack.c.l.b16 %v1313
    %v1346 = vunpack.c.l.b16 %v1314
    %v1347 = vunpack.c.l.b16 %v1315
    %v1348 = vunpack.c.l.b16 %v1316
    %v1349 = vunpack.c.l.b16 %v1317
    %v1350 = vunpack.c.l.b16 %v1318
    %v1351 = vunpack.c.l.b16 %v1319
    %v1352 = vpack.c.b16 %v1337, %v1336
    %v1353 = vpack.c.b16 %v1339, %v1338
    %v1354 = vpack.c.b16 %v1341, %v1340
    %v1355 = vpack.c.b16 %v1343, %v1342
    %v1356 = vpack.c.b16 %v1345, %v1344
    %v1357 = vpack.c.b16 %v1347, %v1346
    %v1358 = vpack.c.b16 %v1349, %v1348
    %v1359 = vpack.c.b16 %v1351, %v1350
    %1368 = vmatprep.subr.bf16.mxu0 0
    %1369 = vmatpush1.bf16.msra.mxu0 %v1352
    %1370 = vmatprep.subr.bf16.mxu0 0
    %1371 = vmatpush1.bf16.msra.mxu0 %v1353
    %1372 = vmatprep.subr.bf16.mxu0 0
    %1373 = vmatpush1.bf16.msra.mxu0 %v1354
    %1374 = vmatprep.subr.bf16.mxu0 0
    %1375 = vmatpush1.bf16.msra.mxu0 %v1355
    %1376 = vmatprep.subr.bf16.mxu0 0
    %1377 = vmatpush1.bf16.msra.mxu0 %v1356
    %1378 = vmatprep.subr.bf16.mxu0 0
    %1379 = vmatpush1.bf16.msra.mxu0 %v1357
    %1380 = vmatprep.subr.bf16.mxu0 0
    %1381 = vmatpush1.bf16.msra.mxu0 %v1358
    %1382 = vmatprep.subr.bf16.mxu0 0
    %1383 = vmatpush1.bf16.msra.mxu0 %v1359
    %1384 = vmatprep.subr.bf16.mxu0 0
    %1385 = vmatpush1.bf16.msra.mxu0 0
    %1386 = vmatprep.subr.bf16.mxu0 0
    %1387 = vmatpush1.bf16.msra.mxu0 0
    %1388 = vmatprep.subr.bf16.mxu0 0
    %1389 = vmatpush1.bf16.msra.mxu0 0
    %1390 = vmatprep.subr.bf16.mxu0 0
    %1391 = vmatpush1.bf16.msra.mxu0 0
    %1392 = vmatprep.subr.bf16.mxu0 0
    %1393 = vmatpush1.bf16.msra.mxu0 0
    %1394 = vmatprep.subr.bf16.mxu0 0
    %1395 = vmatpush1.bf16.msra.mxu0 0
    %1396 = vmatprep.subr.bf16.mxu0 0
    %1397 = vmatpush1.bf16.msra.mxu0 0
    %1398 = vmatprep.subr.bf16.mxu0 0
    %1399 = vmatpush1.bf16.msra.mxu0 0
    %1400 = vmatprep.mubr.bf16.mxu0 0
    %1401 = vmatmul.mubr.bf16.gmra.mrb[0].mxu0 %v1302
    %v1402 = vpop.f32.mrb[0].mxu0
    %v1403 = vadd.f32 0.0, %v1402
    %v1404 = vpop.f32.mrb[0].mxu0
    %v1405 = vpop.f32.mrb[0].mxu0
    %v1406 = vadd.f32 0.0, %v1405
    %v1407 = vpop.f32.mrb[0].mxu0
    %1408 = vmatprep.mubr.bf16.mxu0 0
    %1409 = vmatmul.mubr.bf16.gmra.mrb[0].mxu0 %v1303
    %v1410 = vpop.f32.mrb[0].mxu0
    %v1411 = vadd.f32 0.0, %v1410
    %v1412 = vpop.f32.mrb[0].mxu0
    %v1413 = vpop.f32.mrb[0].mxu0
    %v1414 = vadd.f32 0.0, %v1413
    %v1415 = vpop.f32.mrb[0].mxu0
    %1416 = vdwg.mxu0
    %v1417 = vadd.f32 %v87, %v1403
    %v1418 = vadd.f32 %v88, %v1406
    %v1419 = vadd.f32 %v89, %v1411
    %v1420 = vadd.f32 %v90, %v1414
    %v1421 = vmul.f32 %v1417, %v1417
    %v1422 = vmul.f32 %v1418, %v1418
    %v1423 = vmul.f32 %v1419, %v1419
    %v1424 = vmul.f32 %v1420, %v1420
    %1425 = vadd.xlane.f32.xlu0 %v1421
    %v1426 = vpop.xlane.xlu0 %1425
    %1427 = vadd.xlane.f32.xlu0 %v1422
    %v1428 = vpop.xlane.xlu0 %1427
    %1429 = vadd.xlane.f32.xlu0 %v1423
    %v1430 = vpop.xlane.xlu0 %1429
    %1431 = vadd.xlane.f32.xlu0 %v1424
    %v1432 = vpop.xlane.xlu0 %1431
    %v1433 = vmul.f32 %v1426, %v103
    %v1434 = vmul.f32 %v1428, %v103
    %v1435 = vmul.f32 %v1430, %v103
    %v1436 = vmul.f32 %v1432, %v103
    %v1437 = vadd.f32 %v1433, 1e-06
    %v1438 = vadd.f32 %v1434, 1e-06
    %v1439 = vadd.f32 %v1435, 1e-06
    %v1440 = vadd.f32 %v1436, 1e-06
    %v1441 = vrsqrt.pop %v1437
    %v1442 = vrsqrt.pop %v1438
    %v1443 = vrsqrt.pop %v1439
    %v1444 = vrsqrt.pop %v1440
    %v1445 = vmul.f32 %v1417, %v1441
    %v1446 = vmul.f32 %v1418, %v1442
    %v1447 = vmul.f32 %v1419, %v1443
    %v1448 = vmul.f32 %v1420, %v1444
    %v1449 = vld [vmem:[%s8] sm:$0x1]
    %v1451 = vlaneseq
    %v1452 = vshrl.u32 %v1451, 7
    %v1453 = vsub.s32 0, %v1452
    %v1454 = vrot.slane %v1449, %v1453
    %v1456 = vmul.f32 %v1445, %v1454
    %v1457 = vmul.f32 %v1446, %v1454
    %v1458 = vmul.f32 %v1447, %v1454
    %v1459 = vmul.f32 %v1448, %v1454
    %v1460 = vpack.c.bf16 %v1457, %v1456
    %v1461 = vpack.c.bf16 %v1459, %v1458
    %v1462 = vld [vmem:[#allocation3] sm:$0xff]
    %v1463 = vld [vmem:[#allocation3 + $0x8] sm:$0xff]
    %v1464 = vld [vmem:[#allocation3 + $0x10] sm:$0xff]
    %v1465 = vld [vmem:[#allocation3 + $0x18] sm:$0xff]
    %v1466 = vld [vmem:[#allocation3 + $0x20] sm:$0xff]
    %v1467 = vld [vmem:[#allocation3 + $0x28] sm:$0xff]
    %v1468 = vld [vmem:[#allocation3 + $0x30] sm:$0xff]
    %v1469 = vld [vmem:[#allocation3 + $0x38] sm:$0xff]
    %v1470 = vld [vmem:[#allocation3 + $0x40] sm:$0xff]
    %v1471 = vld [vmem:[#allocation3 + $0x48] sm:$0xff]
    %v1472 = vld [vmem:[#allocation3 + $0x50] sm:$0xff]
    %v1473 = vld [vmem:[#allocation3 + $0x58] sm:$0xff]
    %v1474 = vld [vmem:[#allocation3 + $0x60] sm:$0xff]
    %v1475 = vld [vmem:[#allocation3 + $0x68] sm:$0xff]
    %v1476 = vld [vmem:[#allocation3 + $0x70] sm:$0xff]
    %v1477 = vld [vmem:[#allocation3 + $0x78] sm:$0xff]
    %v1494 = vunpack.c.l.b16 %v1462
    %v1495 = vunpack.c.h.b16 %v1462
    %v1496 = vunpack.c.l.b16 %v1463
    %v1497 = vunpack.c.h.b16 %v1463
    %v1498 = vunpack.c.l.b16 %v1464
    %v1499 = vunpack.c.h.b16 %v1464
    %v1500 = vunpack.c.l.b16 %v1465
    %v1501 = vunpack.c.h.b16 %v1465
    %v1502 = vunpack.c.l.b16 %v1466
    %v1503 = vunpack.c.h.b16 %v1466
    %v1504 = vunpack.c.l.b16 %v1467
    %v1505 = vunpack.c.h.b16 %v1467
    %v1506 = vunpack.c.l.b16 %v1468
    %v1507 = vunpack.c.h.b16 %v1468
    %v1508 = vunpack.c.l.b16 %v1469
    %v1509 = vunpack.c.h.b16 %v1469
    %v1510 = vunpack.c.l.b16 %v1470
    %v1511 = vunpack.c.h.b16 %v1470
    %v1512 = vunpack.c.l.b16 %v1471
    %v1513 = vunpack.c.h.b16 %v1471
    %v1514 = vunpack.c.l.b16 %v1472
    %v1515 = vunpack.c.h.b16 %v1472
    %v1516 = vunpack.c.l.b16 %v1473
    %v1517 = vunpack.c.h.b16 %v1473
    %v1518 = vunpack.c.l.b16 %v1474
    %v1519 = vunpack.c.h.b16 %v1474
    %v1520 = vunpack.c.l.b16 %v1475
    %v1521 = vunpack.c.h.b16 %v1475
    %v1522 = vunpack.c.l.b16 %v1476
    %v1523 = vunpack.c.h.b16 %v1476
    %v1524 = vunpack.c.l.b16 %v1477
    %v1525 = vunpack.c.h.b16 %v1477
    %v1526 = vpack.c.b16 %v1496, %v1494
    %v1527 = vpack.c.b16 %v1497, %v1495
    %v1528 = vpack.c.b16 %v1500, %v1498
    %v1529 = vpack.c.b16 %v1501, %v1499
    %v1530 = vpack.c.b16 %v1504, %v1502
    %v1531 = vpack.c.b16 %v1505, %v1503
    %v1532 = vpack.c.b16 %v1508, %v1506
    %v1533 = vpack.c.b16 %v1509, %v1507
    %v1534 = vpack.c.b16 %v1512, %v1510
    %v1535 = vpack.c.b16 %v1513, %v1511
    %v1536 = vpack.c.b16 %v1516, %v1514
    %v1537 = vpack.c.b16 %v1517, %v1515
    %v1538 = vpack.c.b16 %v1520, %v1518
    %v1539 = vpack.c.b16 %v1521, %v1519
    %v1540 = vpack.c.b16 %v1524, %v1522
    %v1541 = vpack.c.b16 %v1525, %v1523
    %1558 = vmatprep.subr.bf16.mxu0 %v1527
    %1559 = vmatpush1.bf16.msra.mxu0 %v1526
    %1560 = vmatprep.subr.bf16.mxu0 %v1529
    %1561 = vmatpush1.bf16.msra.mxu0 %v1528
    %1562 = vmatprep.subr.bf16.mxu0 %v1531
    %1563 = vmatpush1.bf16.msra.mxu0 %v1530
    %1564 = vmatprep.subr.bf16.mxu0 %v1533
    %1565 = vmatpush1.bf16.msra.mxu0 %v1532
    %1566 = vmatprep.subr.bf16.mxu0 %v1535
    %1567 = vmatpush1.bf16.msra.mxu0 %v1534
    %1568 = vmatprep.subr.bf16.mxu0 %v1537
    %1569 = vmatpush1.bf16.msra.mxu0 %v1536
    %1570 = vmatprep.subr.bf16.mxu0 %v1539
    %1571 = vmatpush1.bf16.msra.mxu0 %v1538
    %1572 = vmatprep.subr.bf16.mxu0 %v1541
    %1573 = vmatpush1.bf16.msra.mxu0 %v1540
    %1574 = vmatprep.subr.bf16.mxu0 0
    %1575 = vmatpush1.bf16.msra.mxu0 0
    %1576 = vmatprep.subr.bf16.mxu0 0
    %1577 = vmatpush1.bf16.msra.mxu0 0
    %1578 = vmatprep.subr.bf16.mxu0 0
    %1579 = vmatpush1.bf16.msra.mxu0 0
    %1580 = vmatprep.subr.bf16.mxu0 0
    %1581 = vmatpush1.bf16.msra.mxu0 0
    %1582 = vmatprep.subr.bf16.mxu0 0
    %1583 = vmatpush1.bf16.msra.mxu0 0
    %1584 = vmatprep.subr.bf16.mxu0 0
    %1585 = vmatpush1.bf16.msra.mxu0 0
    %1586 = vmatprep.subr.bf16.mxu0 0
    %1587 = vmatpush1.bf16.msra.mxu0 0
    %1588 = vmatprep.subr.bf16.mxu0 0
    %1589 = vmatpush1.bf16.msra.mxu0 0
    %1590 = vmatprep.mubr.bf16.mxu0 0
    %1591 = vmatmul.mubr.bf16.gmra.mrb[0].mxu0 %v1460
    %v1592 = vpop.f32.mrb[0].mxu0
    %v1593 = vadd.f32 0.0, %v1592
    %v1594 = vpop.f32.mrb[0].mxu0
    %v1595 = vadd.f32 0.0, %v1594
    %v1596 = vpop.f32.mrb[0].mxu0
    %v1597 = vadd.f32 0.0, %v1596
    %v1598 = vpop.f32.mrb[0].mxu0
    %v1599 = vadd.f32 0.0, %v1598
    %1600 = vmatprep.mubr.bf16.mxu0 0
    %1601 = vmatmul.mubr.bf16.gmra.mrb[0].mxu0 %v1461
    %v1602 = vpop.f32.mrb[0].mxu0
    %v1603 = vadd.f32 0.0, %v1602
    %v1604 = vpop.f32.mrb[0].mxu0
    %v1605 = vadd.f32 0.0, %v1604
    %v1606 = vpop.f32.mrb[0].mxu0
    %v1607 = vadd.f32 0.0, %v1606
    %v1608 = vpop.f32.mrb[0].mxu0
    %v1609 = vadd.f32 0.0, %v1608
    %1610 = vdwg.mxu0
    %v1611 = vld [vmem:[#allocation5] sm:$0xff]
    %v1612 = vld [vmem:[#allocation5 + $0x8] sm:$0xff]
    %v1613 = vld [vmem:[#allocation5 + $0x10] sm:$0xff]
    %v1614 = vld [vmem:[#allocation5 + $0x18] sm:$0xff]
    %v1615 = vld [vmem:[#allocation5 + $0x20] sm:$0xff]
    %v1616 = vld [vmem:[#allocation5 + $0x28] sm:$0xff]
    %v1617 = vld [vmem:[#allocation5 + $0x30] sm:$0xff]
    %v1618 = vld [vmem:[#allocation5 + $0x38] sm:$0xff]
    %v1619 = vld [vmem:[#allocation5 + $0x40] sm:$0xff]
    %v1620 = vld [vmem:[#allocation5 + $0x48] sm:$0xff]
    %v1621 = vld [vmem:[#allocation5 + $0x50] sm:$0xff]
    %v1622 = vld [vmem:[#allocation5 + $0x58] sm:$0xff]
    %v1623 = vld [vmem:[#allocation5 + $0x60] sm:$0xff]
    %v1624 = vld [vmem:[#allocation5 + $0x68] sm:$0xff]
    %v1625 = vld [vmem:[#allocation5 + $0x70] sm:$0xff]
    %v1626 = vld [vmem:[#allocation5 + $0x78] sm:$0xff]
    %v1643 = vunpack.c.l.b16 %v1611
    %v1644 = vunpack.c.h.b16 %v1611
    %v1645 = vunpack.c.l.b16 %v1612
    %v1646 = vunpack.c.h.b16 %v1612
    %v1647 = vunpack.c.l.b16 %v1613
    %v1648 = vunpack.c.h.b16 %v1613
    %v1649 = vunpack.c.l.b16 %v1614
    %v1650 = vunpack.c.h.b16 %v1614
    %v1651 = vunpack.c.l.b16 %v1615
    %v1652 = vunpack.c.h.b16 %v1615
    %v1653 = vunpack.c.l.b16 %v1616
    %v1654 = vunpack.c.h.b16 %v1616
    %v1655 = vunpack.c.l.b16 %v1617
    %v1656 = vunpack.c.h.b16 %v1617
    %v1657 = vunpack.c.l.b16 %v1618
    %v1658 = vunpack.c.h.b16 %v1618
    %v1659 = vunpack.c.l.b16 %v1619
    %v1660 = vunpack.c.h.b16 %v1619
    %v1661 = vunpack.c.l.b16 %v1620
    %v1662 = vunpack.c.h.b16 %v1620
    %v1663 = vunpack.c.l.b16 %v1621
    %v1664 = vunpack.c.h.b16 %v1621
    %v1665 = vunpack.c.l.b16 %v1622
    %v1666 = vunpack.c.h.b16 %v1622
    %v1667 = vunpack.c.l.b16 %v1623
    %v1668 = vunpack.c.h.b16 %v1623
    %v1669 = vunpack.c.l.b16 %v1624
    %v1670 = vunpack.c.h.b16 %v1624
    %v1671 = vunpack.c.l.b16 %v1625
    %v1672 = vunpack.c.h.b16 %v1625
    %v1673 = vunpack.c.l.b16 %v1626
    %v1674 = vunpack.c.h.b16 %v1626
    %v1675 = vpack.c.b16 %v1645, %v1643
    %v1676 = vpack.c.b16 %v1646, %v1644
    %v1677 = vpack.c.b16 %v1649, %v1647
    %v1678 = vpack.c.b16 %v1650, %v1648
    %v1679 = vpack.c.b16 %v1653, %v1651
    %v1680 = vpack.c.b16 %v1654, %v1652
    %v1681 = vpack.c.b16 %v1657, %v1655
    %v1682 = vpack.c.b16 %v1658, %v1656
    %v1683 = vpack.c.b16 %v1661, %v1659
    %v1684 = vpack.c.b16 %v1662, %v1660
    %v1685 = vpack.c.b16 %v1665, %v1663
    %v1686 = vpack.c.b16 %v1666, %v1664
    %v1687 = vpack.c.b16 %v1669, %v1667
    %v1688 = vpack.c.b16 %v1670, %v1668
    %v1689 = vpack.c.b16 %v1673, %v1671
    %v1690 = vpack.c.b16 %v1674, %v1672
    %1707 = vmatprep.subr.bf16.mxu0 %v1676
    %1708 = vmatpush1.bf16.msra.mxu0 %v1675
    %1709 = vmatprep.subr.bf16.mxu0 %v1678
    %1710 = vmatpush1.bf16.msra.mxu0 %v1677
    %1711 = vmatprep.subr.bf16.mxu0 %v1680
    %1712 = vmatpush1.bf16.msra.mxu0 %v1679
    %1713 = vmatprep.subr.bf16.mxu0 %v1682
    %1714 = vmatpush1.bf16.msra.mxu0 %v1681
    %1715 = vmatprep.subr.bf16.mxu0 %v1684
    %1716 = vmatpush1.bf16.msra.mxu0 %v1683
    %1717 = vmatprep.subr.bf16.mxu0 %v1686
    %1718 = vmatpush1.bf16.msra.mxu0 %v1685
    %1719 = vmatprep.subr.bf16.mxu0 %v1688
    %1720 = vmatpush1.bf16.msra.mxu0 %v1687
    %1721 = vmatprep.subr.bf16.mxu0 %v1690
    %1722 = vmatpush1.bf16.msra.mxu0 %v1689
    %1723 = vmatprep.subr.bf16.mxu0 0
    %1724 = vmatpush1.bf16.msra.mxu0 0
    %1725 = vmatprep.subr.bf16.mxu0 0
    %1726 = vmatpush1.bf16.msra.mxu0 0
    %1727 = vmatprep.subr.bf16.mxu0 0
    %1728 = vmatpush1.bf16.msra.mxu0 0
    %1729 = vmatprep.subr.bf16.mxu0 0
    %1730 = vmatpush1.bf16.msra.mxu0 0
    %1731 = vmatprep.subr.bf16.mxu0 0
    %1732 = vmatpush1.bf16.msra.mxu0 0
    %1733 = vmatprep.subr.bf16.mxu0 0
    %1734 = vmatpush1.bf16.msra.mxu0 0
    %1735 = vmatprep.subr.bf16.mxu0 0
    %1736 = vmatpush1.bf16.msra.mxu0 0
    %1737 = vmatprep.subr.bf16.mxu0 0
    %1738 = vmatpush1.bf16.msra.mxu0 0
    %1739 = vmatprep.mubr.bf16.mxu0 0
    %1740 = vmatmul.mubr.bf16.gmra.mrb[0].mxu0 %v1460
    %v1741 = vpop.f32.mrb[0].mxu0
    %v1742 = vadd.f32 0.0, %v1741
    %v1743 = vpop.f32.mrb[0].mxu0
    %v1744 = vadd.f32 0.0, %v1743
    %v1745 = vpop.f32.mrb[0].mxu0
    %v1746 = vadd.f32 0.0, %v1745
    %v1747 = vpop.f32.mrb[0].mxu0
    %v1748 = vadd.f32 0.0, %v1747
    %1749 = vmatprep.mubr.bf16.mxu0 0
    %1750 = vmatmul.mubr.bf16.gmra.mrb[0].mxu0 %v1461
    %v1751 = vpop.f32.mrb[0].mxu0
    %v1752 = vadd.f32 0.0, %v1751
    %v1753 = vpop.f32.mrb[0].mxu0
    %v1754 = vadd.f32 0.0, %v1753
    %v1755 = vpop.f32.mrb[0].mxu0
    %v1756 = vadd.f32 0.0, %v1755
    %v1757 = vpop.f32.mrb[0].mxu0
    %v1758 = vadd.f32 0.0, %v1757
    %1759 = vdwg.mxu0
    %v1760 = vxor.u32 %v1593, 2147483648
    %v1761 = vxor.u32 %v1595, 2147483648
    %v1762 = vxor.u32 %v1597, 2147483648
    %v1763 = vxor.u32 %v1599, 2147483648
    %v1764 = vxor.u32 %v1603, 2147483648
    %v1765 = vxor.u32 %v1605, 2147483648
    %v1766 = vxor.u32 %v1607, 2147483648
    %v1767 = vxor.u32 %v1609, 2147483648
    %v1768 = vmul.f32 %v1760, 1.442695
    %v1769 = vpow.pop %v1768
    %v1770 = vmul.f32 %v1761, 1.442695
    %v1771 = vpow.pop %v1770
    %v1772 = vmul.f32 %v1762, 1.442695
    %v1773 = vpow.pop %v1772
    %v1774 = vmul.f32 %v1763, 1.442695
    %v1775 = vpow.pop %v1774
    %v1776 = vmul.f32 %v1764, 1.442695
    %v1777 = vpow.pop %v1776
    %v1778 = vmul.f32 %v1765, 1.442695
    %v1779 = vpow.pop %v1778
    %v1780 = vmul.f32 %v1766, 1.442695
    %v1781 = vpow.pop %v1780
    %v1782 = vmul.f32 %v1767, 1.442695
    %v1783 = vpow.pop %v1782
    %v1784 = vadd.f32 %v1769, 1.0
    %v1785 = vadd.f32 %v1771, 1.0
    %v1786 = vadd.f32 %v1773, 1.0
    %v1787 = vadd.f32 %v1775, 1.0
    %v1788 = vadd.f32 %v1777, 1.0
    %v1789 = vadd.f32 %v1779, 1.0
    %v1790 = vadd.f32 %v1781, 1.0
    %v1791 = vadd.f32 %v1783, 1.0
    %v1792 = vrcp.pop %v1784
    %v1793 = vmul.f32 1.0, %v1792
    %v1794 = vrcp.pop %v1785
    %v1795 = vmul.f32 1.0, %v1794
    %v1796 = vrcp.pop %v1786
    %v1797 = vmul.f32 1.0, %v1796
    %v1798 = vrcp.pop %v1787
    %v1799 = vmul.f32 1.0, %v1798
    %v1800 = vrcp.pop %v1788
    %v1801 = vmul.f32 1.0, %v1800
    %v1802 = vrcp.pop %v1789
    %v1803 = vmul.f32 1.0, %v1802
    %v1804 = vrcp.pop %v1790
    %v1805 = vmul.f32 1.0, %v1804
    %v1806 = vrcp.pop %v1791
    %v1807 = vmul.f32 1.0, %v1806
    %v1808 = vmul.f32 %v1593, %v1793
    %v1809 = vmul.f32 %v1595, %v1795
    %v1810 = vmul.f32 %v1597, %v1797
    %v1811 = vmul.f32 %v1599, %v1799
    %v1812 = vmul.f32 %v1603, %v1801
    %v1813 = vmul.f32 %v1605, %v1803
    %v1814 = vmul.f32 %v1607, %v1805
    %v1815 = vmul.f32 %v1609, %v1807
    %v1816 = vmul.f32 %v1808, %v1742
    %v1817 = vmul.f32 %v1809, %v1744
    %v1818 = vmul.f32 %v1810, %v1746
    %v1819 = vmul.f32 %v1811, %v1748
    %v1820 = vmul.f32 %v1812, %v1752
    %v1821 = vmul.f32 %v1813, %v1754
    %v1822 = vmul.f32 %v1814, %v1756
    %v1823 = vmul.f32 %v1815, %v1758
    %v1824 = vpack.c.bf16 %v1818, %v1816
    %v1825 = vpack.c.bf16 %v1819, %v1817
    %v1826 = vpack.c.bf16 %v1822, %v1820
    %v1827 = vpack.c.bf16 %v1823, %v1821
    %v1828 = vld [vmem:[#allocation7] sm:$0xf]
    %v1829 = vld [vmem:[#allocation7 + $0x4] sm:$0xf]
    %v1830 = vld [vmem:[#allocation7 + $0x8] sm:$0xf]
    %v1831 = vld [vmem:[#allocation7 + $0xc] sm:$0xf]
    %v1832 = vld [vmem:[#allocation7 + $0x10] sm:$0xf]
    %v1833 = vld [vmem:[#allocation7 + $0x14] sm:$0xf]
    %v1834 = vld [vmem:[#allocation7 + $0x18] sm:$0xf]
    %v1835 = vld [vmem:[#allocation7 + $0x1c] sm:$0xf]
    %v1836 = vld [vmem:[#allocation7 + $0x20] sm:$0xf]
    %v1837 = vld [vmem:[#allocation7 + $0x24] sm:$0xf]
    %v1838 = vld [vmem:[#allocation7 + $0x28] sm:$0xf]
    %v1839 = vld [vmem:[#allocation7 + $0x2c] sm:$0xf]
    %v1840 = vld [vmem:[#allocation7 + $0x30] sm:$0xf]
    %v1841 = vld [vmem:[#allocation7 + $0x34] sm:$0xf]
    %v1842 = vld [vmem:[#allocation7 + $0x38] sm:$0xf]
    %v1843 = vld [vmem:[#allocation7 + $0x3c] sm:$0xf]
    %v1844 = vld [vmem:[#allocation7 + $0x40] sm:$0xf]
    %v1845 = vld [vmem:[#allocation7 + $0x44] sm:$0xf]
    %v1846 = vld [vmem:[#allocation7 + $0x48] sm:$0xf]
    %v1847 = vld [vmem:[#allocation7 + $0x4c] sm:$0xf]
    %v1848 = vld [vmem:[#allocation7 + $0x50] sm:$0xf]
    %v1849 = vld [vmem:[#allocation7 + $0x54] sm:$0xf]
    %v1850 = vld [vmem:[#allocation7 + $0x58] sm:$0xf]
    %v1851 = vld [vmem:[#allocation7 + $0x5c] sm:$0xf]
    %v1852 = vld [vmem:[#allocation7 + $0x60] sm:$0xf]
    %v1853 = vld [vmem:[#allocation7 + $0x64] sm:$0xf]
    %v1854 = vld [vmem:[#allocation7 + $0x68] sm:$0xf]
    %v1855 = vld [vmem:[#allocation7 + $0x6c] sm:$0xf]
    %v1856 = vld [vmem:[#allocation7 + $0x70] sm:$0xf]
    %v1857 = vld [vmem:[#allocation7 + $0x74] sm:$0xf]
    %v1858 = vld [vmem:[#allocation7 + $0x78] sm:$0xf]
    %v1859 = vld [vmem:[#allocation7 + $0x7c] sm:$0xf]
    %v1892 = vunpack.c.l.b16 %v1828
    %v1893 = vunpack.c.l.b16 %v1829
    %v1894 = vunpack.c.l.b16 %v1830
    %v1895 = vunpack.c.l.b16 %v1831
    %v1896 = vunpack.c.l.b16 %v1832
    %v1897 = vunpack.c.l.b16 %v1833
    %v1898 = vunpack.c.l.b16 %v1834
    %v1899 = vunpack.c.l.b16 %v1835
    %v1900 = vunpack.c.l.b16 %v1836
    %v1901 = vunpack.c.l.b16 %v1837
    %v1902 = vunpack.c.l.b16 %v1838
    %v1903 = vunpack.c.l.b16 %v1839
    %v1904 = vunpack.c.l.b16 %v1840
    %v1905 = vunpack.c.l.b16 %v1841
    %v1906 = vunpack.c.l.b16 %v1842
    %v1907 = vunpack.c.l.b16 %v1843
    %v1908 = vunpack.c.l.b16 %v1844
    %v1909 = vunpack.c.l.b16 %v1845
    %v1910 = vunpack.c.l.b16 %v1846
    %v1911 = vunpack.c.l.b16 %v1847
    %v1912 = vunpack.c.l.b16 %v1848
    %v1913 = vunpack.c.l.b16 %v1849
    %v1914 = vunpack.c.l.b16 %v1850
    %v1915 = vunpack.c.l.b16 %v1851
    %v1916 = vunpack.c.l.b16 %v1852
    %v1917 = vunpack.c.l.b16 %v1853
    %v1918 = vunpack.c.l.b16 %v1854
    %v1919 = vunpack.c.l.b16 %v1855
    %v1920 = vunpack.c.l.b16 %v1856
    %v1921 = vunpack.c.l.b16 %v1857
    %v1922 = vunpack.c.l.b16 %v1858
    %v1923 = vunpack.c.l.b16 %v1859
    %v1924 = vpack.c.b16 %v1893, %v1892
    %v1925 = vpack.c.b16 %v1895, %v1894
    %v1926 = vpack.c.b16 %v1897, %v1896
    %v1927 = vpack.c.b16 %v1899, %v1898
    %v1928 = vpack.c.b16 %v1901, %v1900
    %v1929 = vpack.c.b16 %v1903, %v1902
    %v1930 = vpack.c.b16 %v1905, %v1904
    %v1931 = vpack.c.b16 %v1907, %v1906
    %v1932 = vpack.c.b16 %v1909, %v1908
    %v1933 = vpack.c.b16 %v1911, %v1910
    %v1934 = vpack.c.b16 %v1913, %v1912
    %v1935 = vpack.c.b16 %v1915, %v1914
    %v1936 = vpack.c.b16 %v1917, %v1916
    %v1937 = vpack.c.b16 %v1919, %v1918
    %v1938 = vpack.c.b16 %v1921, %v1920
    %v1939 = vpack.c.b16 %v1923, %v1922
    %1956 = vmatprep.subr.bf16.mxu0 0
    %1957 = vmatpush1.bf16.msra.mxu0 %v1924
    %1958 = vmatprep.subr.bf16.mxu0 0
    %1959 = vmatpush1.bf16.msra.mxu0 %v1925
    %1960 = vmatprep.subr.bf16.mxu0 0
    %1961 = vmatpush1.bf16.msra.mxu0 %v1926
    %1962 = vmatprep.subr.bf16.mxu0 0
    %1963 = vmatpush1.bf16.msra.mxu0 %v1927
    %1964 = vmatprep.subr.bf16.mxu0 0
    %1965 = vmatpush1.bf16.msra.mxu0 %v1928
    %1966 = vmatprep.subr.bf16.mxu0 0
    %1967 = vmatpush1.bf16.msra.mxu0 %v1929
    %1968 = vmatprep.subr.bf16.mxu0 0
    %1969 = vmatpush1.bf16.msra.mxu0 %v1930
    %1970 = vmatprep.subr.bf16.mxu0 0
    %1971 = vmatpush1.bf16.msra.mxu0 %v1931
    %1972 = vmatprep.subr.bf16.mxu0 0
    %1973 = vmatpush1.bf16.msra.mxu0 %v1932
    %1974 = vmatprep.subr.bf16.mxu0 0
    %1975 = vmatpush1.bf16.msra.mxu0 %v1933
    %1976 = vmatprep.subr.bf16.mxu0 0
    %1977 = vmatpush1.bf16.msra.mxu0 %v1934
    %1978 = vmatprep.subr.bf16.mxu0 0
    %1979 = vmatpush1.bf16.msra.mxu0 %v1935
    %1980 = vmatprep.subr.bf16.mxu0 0
    %1981 = vmatpush1.bf16.msra.mxu0 %v1936
    %1982 = vmatprep.subr.bf16.mxu0 0
    %1983 = vmatpush1.bf16.msra.mxu0 %v1937
    %1984 = vmatprep.subr.bf16.mxu0 0
    %1985 = vmatpush1.bf16.msra.mxu0 %v1938
    %1986 = vmatprep.subr.bf16.mxu0 0
    %1987 = vmatpush1.bf16.msra.mxu0 %v1939
    %1988 = vmatprep.mubr.bf16.mxu0 %v1825
    %1989 = vmatmul.mubr.bf16.gmra.mrb[0].mxu0 %v1824
    %v1990 = vpop.f32.mrb[0].mxu0
    %v1991 = vadd.f32 0.0, %v1990
    %v1992 = vpop.f32.mrb[0].mxu0
    %v1993 = vpop.f32.mrb[0].mxu0
    %v1994 = vadd.f32 0.0, %v1993
    %v1995 = vpop.f32.mrb[0].mxu0
    %1996 = vmatprep.mubr.bf16.mxu0 %v1827
    %1997 = vmatmul.mubr.bf16.gmra.mrb[0].mxu0 %v1826
    %v1998 = vpop.f32.mrb[0].mxu0
    %v1999 = vadd.f32 0.0, %v1998
    %v2000 = vpop.f32.mrb[0].mxu0
    %v2001 = vpop.f32.mrb[0].mxu0
    %v2002 = vadd.f32 0.0, %v2001
    %v2003 = vpop.f32.mrb[0].mxu0
    %2004 = vdwg.mxu0
    %v2005 = vadd.f32 %v1417, %v1991
    %v2006 = vadd.f32 %v1418, %v1994
    %v2007 = vadd.f32 %v1419, %v1999
    %v2008 = vadd.f32 %v1420, %v2002
    %v2009 = vpack.c.bf16 %v2006, %v2005
    %v2010 = vpack.c.bf16 %v2008, %v2007
    %v2013 = vunpack.c.l.b16 %v2009
    %v2014 = vunpack.c.h.b16 %v2009
    %v2015 = vunpack.c.l.b16 %v2010
    %v2016 = vunpack.c.h.b16 %v2010
    %v2017 = vpack.c.b16 %v2013, %v2013
    %v2018 = vpack.c.b16 %v2014, %v2014
    %v2019 = vpack.c.b16 %v2015, %v2015
    %v2020 = vpack.c.b16 %v2016, %v2016
    %2025 = vst [vmem:[%s12] sm:$0xf] %v2017
    %2026 = vst [vmem:[%s12 + $0x4] sm:$0xf] %v2018
    %2027 = vst [vmem:[%s12 + $0x8] sm:$0xf] %v2019
    %2028 = vst [vmem:[%s12 + $0xc] sm:$0xf] %v2020
    // Predicated region
    $region62: #{qwen_llm_forward.3} parent=1 // pred_check
      _
    $region63: #{qwen_llm_forward.3} parent=1 // pred_check_branch
      %2030 = sbr.rel (0) target = $region65
    $region64: #{qwen_llm_forward.3} parent=1 // pred_region
      _
    $region65: #{qwen_llm_forward.3} parent=1 // pred_fallthru
      _
    // Predicated region
    $region66: #{qwen_llm_forward.3} parent=1 // pred_check
      _
    $region67: #{qwen_llm_forward.3} parent=1 // pred_check_branch
      %2032 = sbr.rel (0) target = $region69
    $region68: #{qwen_llm_forward.3} parent=1 // pred_region
      _
    $region69: #{qwen_llm_forward.3} parent=1 // pred_fallthru
      _
    %2033 = vsyncpa [#allocation4], 1
    %2034 = vsyncpa [#allocation6], 1

// kernel: qwen_llm_forward.4
$region0: #{qwen_llm_forward.4}
  #allocation0 [shape = 'u32[]', space=smem, size = 0x4, offset = 0x4, fixed_abs, tag = 'smem constant byte address 0x4 - core index']
  #allocation1 [shape = 'u32[144,128]{1,0:T(1,128)}', space=vmem, size = 0x12000, scoped, tag = 'internal scratch']
  #allocation2 [shape = 'f32[32,128]{1,0:T(8,128)}', space=vmem, size = 0x4000, scoped, tag = 'scratch operand']
  %s0 = inlined_call_operand.vmem [shape: bf16[32,128], index: 0, kind: input, shape index: {}]
  %s1 = inlined_call_operand.vmem [shape: f32[1,128], index: 1, kind: input, shape index: {}]
  %s2 = inlined_call_operand.vmem [shape: bf16[128,256], index: 2, kind: input, shape index: {}]
  %s3 = inlined_call_operand.vmem [shape: f32[1,256], index: 3, kind: input, shape index: {}]
  %s4 = inlined_call_operand.vmem [shape: bf16[192,192], index: 4, kind: input, shape index: {}]
  %s5 = inlined_call_operand.vmem [shape: f32[32,192], index: 5, kind: input, shape index: {}]
  %s6 = inlined_call_operand.vmem [shape: f32[32,192], index: 6, kind: input, shape index: {}]
  %s7 = inlined_call_operand.vmem [shape: bf16[128,128], index: 7, kind: input, shape index: {}]
  %s8 = inlined_call_operand.vmem [shape: f32[1,128], index: 8, kind: input, shape index: {}]
  %s9 = inlined_call_operand.vmem [shape: bf16[128,256], index: 9, kind: input, shape index: {}]
  %s10 = inlined_call_operand.vmem [shape: bf16[128,256], index: 10, kind: input, shape index: {}]
  %s11 = inlined_call_operand.vmem [shape: bf16[256,128], index: 11, kind: input, shape index: {}]
  %s12 = inlined_call_operand.vmem [shape: bf16[32,128], index: 12, kind: output, shape index: {}]
  %s13 = sld [smem:[#allocation0]]
  $region58: #{qwen_llm_forward.4} parent=0
    _
  %s15 = ssub.s32 1, %s13
  %s16 = scalar_select 0, %s15, %s13
  // Predicated region
  $region2: #{qwen_llm_forward.4} parent=0 // pred_check
    _
  $region3: #{qwen_llm_forward.4} parent=0 // pred_check_branch
    %18 = sbr.rel (0) target = $region5
  $region4: #{qwen_llm_forward.4} parent=0 // pred_region
    _
  $region5: #{qwen_llm_forward.4} parent=0 // pred_fallthru
    _
  // Predicated region
  $region6: #{qwen_llm_forward.4} parent=0 // pred_check
    _
  $region7: #{qwen_llm_forward.4} parent=0 // pred_check_branch
    %20 = sbr.rel (0) target = $region9
  $region8: #{qwen_llm_forward.4} parent=0 // pred_region
    _
  $region9: #{qwen_llm_forward.4} parent=0 // pred_fallthru
    _
  // Predicated region
  $region10: #{qwen_llm_forward.4} parent=0 // pred_check
    _
  $region11: #{qwen_llm_forward.4} parent=0 // pred_check_branch
    %22 = sbr.rel (0) target = $region13
  $region12: #{qwen_llm_forward.4} parent=0 // pred_region
    _
  $region13: #{qwen_llm_forward.4} parent=0 // pred_fallthru
    _
  // Predicated region
  $region14: #{qwen_llm_forward.4} parent=0 // pred_check
    _
  $region15: #{qwen_llm_forward.4} parent=0 // pred_check_branch
    %24 = sbr.rel (0) target = $region17
  $region16: #{qwen_llm_forward.4} parent=0 // pred_region
    _
  $region17: #{qwen_llm_forward.4} parent=0 // pred_fallthru
    _
  // Predicated region
  $region18: #{qwen_llm_forward.4} parent=0 // pred_check
    _
  $region19: #{qwen_llm_forward.4} parent=0 // pred_check_branch
    %26 = sbr.rel (0) target = $region21
  $region20: #{qwen_llm_forward.4} parent=0 // pred_region
    _
  $region21: #{qwen_llm_forward.4} parent=0 // pred_fallthru
    _
  // Predicated region
  $region22: #{qwen_llm_forward.4} parent=0 // pred_check
    _
  $region23: #{qwen_llm_forward.4} parent=0 // pred_check_branch
    %28 = sbr.rel (0) target = $region25
  $region24: #{qwen_llm_forward.4} parent=0 // pred_region
    _
  $region25: #{qwen_llm_forward.4} parent=0 // pred_fallthru
    _
  // Predicated region
  $region26: #{qwen_llm_forward.4} parent=0 // pred_check
    _
  $region27: #{qwen_llm_forward.4} parent=0 // pred_check_branch
    %30 = sbr.rel (0) target = $region29
  $region28: #{qwen_llm_forward.4} parent=0 // pred_region
    _
  $region29: #{qwen_llm_forward.4} parent=0 // pred_fallthru
    _
  // Predicated region
  $region30: #{qwen_llm_forward.4} parent=0 // pred_check
    _
  $region31: #{qwen_llm_forward.4} parent=0 // pred_check_branch
    %32 = sbr.rel (0) target = $region33
  $region32: #{qwen_llm_forward.4} parent=0 // pred_region
    _
  $region33: #{qwen_llm_forward.4} parent=0 // pred_fallthru
    _
  // Predicated region
  $region34: #{qwen_llm_forward.4} parent=0 // pred_check
    _
  $region35: #{qwen_llm_forward.4} parent=0 // pred_check_branch
    %34 = sbr.rel (0) target = $region37
  $region36: #{qwen_llm_forward.4} parent=0 // pred_region
    _
  $region37: #{qwen_llm_forward.4} parent=0 // pred_fallthru
    _
  // Predicated region
  $region38: #{qwen_llm_forward.4} parent=0 // pred_check
    _
  $region39: #{qwen_llm_forward.4} parent=0 // pred_check_branch
    %36 = sbr.rel (0) target = $region41
  $region40: #{qwen_llm_forward.4} parent=0 // pred_region
    _
  $region41: #{qwen_llm_forward.4} parent=0 // pred_fallthru
    _
  // Predicated region
  $region42: #{qwen_llm_forward.4} parent=0 // pred_check
    _
  $region43: #{qwen_llm_forward.4} parent=0 // pred_check_branch
    %38 = sbr.rel (0) target = $region45
  $region44: #{qwen_llm_forward.4} parent=0 // pred_region
    _
  $region45: #{qwen_llm_forward.4} parent=0 // pred_fallthru
    _
  // Predicated region
  $region46: #{qwen_llm_forward.4} parent=0 // pred_check
    _
  $region47: #{qwen_llm_forward.4} parent=0 // pred_check_branch
    %40 = sbr.rel (0) target = $region49
  $region48: #{qwen_llm_forward.4} parent=0 // pred_region
    _
  $region49: #{qwen_llm_forward.4} parent=0 // pred_fallthru
    _
  %v42 = vld [vmem:[%s0] sm:$0xf]
  %v43 = vld [vmem:[%s0 + $0x4] sm:$0xf]
  %v44 = vld [vmem:[%s0 + $0x8] sm:$0xf]
  %v45 = vld [vmem:[%s0 + $0xc] sm:$0xf]
  %v46 = vunpack.c.l.bf16 %v42
  %v47 = vunpack.c.l.bf16 %v43
  %v48 = vunpack.c.l.bf16 %v44
  %v49 = vunpack.c.l.bf16 %v45
  %v50 = vmul.f32 %v46, %v46
  %v51 = vmul.f32 %v47, %v47
  %v52 = vmul.f32 %v48, %v48
  %v53 = vmul.f32 %v49, %v49
  %54 = vadd.xlane.f32.xlu0 %v50
  %v55 = vpop.xlane.xlu0 %54
  %56 = vadd.xlane.f32.xlu0 %v51
  %v57 = vpop.xlane.xlu0 %56
  %58 = vadd.xlane.f32.xlu0 %v52
  %v59 = vpop.xlane.xlu0 %58
  %60 = vadd.xlane.f32.xlu0 %v53
  %v61 = vpop.xlane.xlu0 %60
  %v62 = vrcp.pop 128.0
  %v63 = vmul.f32 %v55, %v62
  %v64 = vmul.f32 %v57, %v62
  %v65 = vmul.f32 %v59, %v62
  %v66 = vmul.f32 %v61, %v62
  %v67 = vadd.f32 %v63, 1e-06
  %v68 = vadd.f32 %v64, 1e-06
  %v69 = vadd.f32 %v65, 1e-06
  %v70 = vadd.f32 %v66, 1e-06
  %v71 = vrsqrt.pop %v67
  %v72 = vrsqrt.pop %v68
  %v73 = vrsqrt.pop %v69
  %v74 = vrsqrt.pop %v70
  %v75 = vmul.f32 %v46, %v71
  %v76 = vmul.f32 %v47, %v72
  %v77 = vmul.f32 %v48, %v73
  %v78 = vmul.f32 %v49, %v74
  %v79 = vld [vmem:[%s1] sm:$0x1]
  %v81 = vlaneseq
  %v82 = vshrl.u32 %v81, 7
  %v83 = vsub.s32 0, %v82
  %v84 = vrot.slane %v79, %v83
  %v86 = vmul.f32 %v75, %v84
  %v87 = vmul.f32 %v76, %v84
  %v88 = vmul.f32 %v77, %v84
  %v89 = vmul.f32 %v78, %v84
  %v90 = vpack.c.bf16 %v87, %v86
  %v91 = vpack.c.bf16 %v89, %v88
  %v92 = vld [vmem:[%s2] sm:$0xff]
  %v93 = vld [vmem:[%s2 + $0x8] sm:$0xff]
  %v94 = vld [vmem:[%s2 + $0x10] sm:$0xff]
  %v95 = vld [vmem:[%s2 + $0x18] sm:$0xff]
  %v96 = vld [vmem:[%s2 + $0x20] sm:$0xff]
  %v97 = vld [vmem:[%s2 + $0x28] sm:$0xff]
  %v98 = vld [vmem:[%s2 + $0x30] sm:$0xff]
  %v99 = vld [vmem:[%s2 + $0x38] sm:$0xff]
  %v100 = vld [vmem:[%s2 + $0x40] sm:$0xff]
  %v101 = vld [vmem:[%s2 + $0x48] sm:$0xff]
  %v102 = vld [vmem:[%s2 + $0x50] sm:$0xff]
  %v103 = vld [vmem:[%s2 + $0x58] sm:$0xff]
  %v104 = vld [vmem:[%s2 + $0x60] sm:$0xff]
  %v105 = vld [vmem:[%s2 + $0x68] sm:$0xff]
  %v106 = vld [vmem:[%s2 + $0x70] sm:$0xff]
  %v107 = vld [vmem:[%s2 + $0x78] sm:$0xff]
  %v108 = vld [vmem:[%s3] sm:$0x3]
  %v110 = vlaneseq
  %v111 = vshrl.u32 %v110, 7
  %v112 = vsub.s32 0, %v111
  %v113 = vrot.slane %v108, %v112
  %v114 = vlaneseq
  %v115 = vshrl.u32 %v114, 7
  %v116 = vsub.s32 1, %v115
  %v117 = vrot.slane %v108, %v116
  %v136 = vunpack.c.l.b16 %v92
  %v137 = vunpack.c.h.b16 %v92
  %v138 = vunpack.c.l.b16 %v93
  %v139 = vunpack.c.h.b16 %v93
  %v140 = vunpack.c.l.b16 %v94
  %v141 = vunpack.c.h.b16 %v94
  %v142 = vunpack.c.l.b16 %v95
  %v143 = vunpack.c.h.b16 %v95
  %v144 = vunpack.c.l.b16 %v96
  %v145 = vunpack.c.h.b16 %v96
  %v146 = vunpack.c.l.b16 %v97
  %v147 = vunpack.c.h.b16 %v97
  %v148 = vunpack.c.l.b16 %v98
  %v149 = vunpack.c.h.b16 %v98
  %v150 = vunpack.c.l.b16 %v99
  %v151 = vunpack.c.h.b16 %v99
  %v152 = vunpack.c.l.b16 %v100
  %v153 = vunpack.c.h.b16 %v100
  %v154 = vunpack.c.l.b16 %v101
  %v155 = vunpack.c.h.b16 %v101
  %v156 = vunpack.c.l.b16 %v102
  %v157 = vunpack.c.h.b16 %v102
  %v158 = vunpack.c.l.b16 %v103
  %v159 = vunpack.c.h.b16 %v103
  %v160 = vunpack.c.l.b16 %v104
  %v161 = vunpack.c.h.b16 %v104
  %v162 = vunpack.c.l.b16 %v105
  %v163 = vunpack.c.h.b16 %v105
  %v164 = vunpack.c.l.b16 %v106
  %v165 = vunpack.c.h.b16 %v106
  %v166 = vunpack.c.l.b16 %v107
  %v167 = vunpack.c.h.b16 %v107
  %v168 = vpack.c.b16 %v138, %v136
  %v169 = vpack.c.b16 %v139, %v137
  %v170 = vpack.c.b16 %v142, %v140
  %v171 = vpack.c.b16 %v143, %v141
  %v172 = vpack.c.b16 %v146, %v144
  %v173 = vpack.c.b16 %v147, %v145
  %v174 = vpack.c.b16 %v150, %v148
  %v175 = vpack.c.b16 %v151, %v149
  %v176 = vpack.c.b16 %v154, %v152
  %v177 = vpack.c.b16 %v155, %v153
  %v178 = vpack.c.b16 %v158, %v156
  %v179 = vpack.c.b16 %v159, %v157
  %v180 = vpack.c.b16 %v162, %v160
  %v181 = vpack.c.b16 %v163, %v161
  %v182 = vpack.c.b16 %v166, %v164
  %v183 = vpack.c.b16 %v167, %v165
  %200 = vmatprep.subr.bf16.mxu0 %v169
  %201 = vmatpush1.bf16.msra.mxu0 %v168
  %202 = vmatprep.subr.bf16.mxu0 %v171
  %203 = vmatpush1.bf16.msra.mxu0 %v170
  %204 = vmatprep.subr.bf16.mxu0 %v173
  %205 = vmatpush1.bf16.msra.mxu0 %v172
  %206 = vmatprep.subr.bf16.mxu0 %v175
  %207 = vmatpush1.bf16.msra.mxu0 %v174
  %208 = vmatprep.subr.bf16.mxu0 %v177
  %209 = vmatpush1.bf16.msra.mxu0 %v176
  %210 = vmatprep.subr.bf16.mxu0 %v179
  %211 = vmatpush1.bf16.msra.mxu0 %v178
  %212 = vmatprep.subr.bf16.mxu0 %v181
  %213 = vmatpush1.bf16.msra.mxu0 %v180
  %214 = vmatprep.subr.bf16.mxu0 %v183
  %215 = vmatpush1.bf16.msra.mxu0 %v182
  %216 = vmatprep.subr.bf16.mxu0 0
  %217 = vmatpush1.bf16.msra.mxu0 0
  %218 = vmatprep.subr.bf16.mxu0 0
  %219 = vmatpush1.bf16.msra.mxu0 0
  %220 = vmatprep.subr.bf16.mxu0 0
  %221 = vmatpush1.bf16.msra.mxu0 0
  %222 = vmatprep.subr.bf16.mxu0 0
  %223 = vmatpush1.bf16.msra.mxu0 0
  %224 = vmatprep.subr.bf16.mxu0 0
  %225 = vmatpush1.bf16.msra.mxu0 0
  %226 = vmatprep.subr.bf16.mxu0 0
  %227 = vmatpush1.bf16.msra.mxu0 0
  %228 = vmatprep.subr.bf16.mxu0 0
  %229 = vmatpush1.bf16.msra.mxu0 0
  %230 = vmatprep.subr.bf16.mxu0 0
  %231 = vmatpush1.bf16.msra.mxu0 0
  %232 = vmatprep.mubr.bf16.mxu0 0
  %233 = vmatmul.mubr.bf16.gmra.mrb[0].mxu0 %v90
  %v234 = vpop.f32.mrb[0].mxu0
  %v235 = vadd.f32 %v113, %v234
  %v236 = vpop.f32.mrb[0].mxu0
  %v237 = vadd.f32 %v117, %v236
  %v238 = vpop.f32.mrb[0].mxu0
  %v239 = vadd.f32 %v113, %v238
  %v240 = vpop.f32.mrb[0].mxu0
  %v241 = vadd.f32 %v117, %v240
  %242 = vmatprep.mubr.bf16.mxu0 0
  %243 = vmatmul.mubr.bf16.gmra.mrb[0].mxu0 %v91
  %v244 = vpop.f32.mrb[0].mxu0
  %v245 = vadd.f32 %v113, %v244
  %v246 = vpop.f32.mrb[0].mxu0
  %v247 = vadd.f32 %v117, %v246
  %v248 = vpop.f32.mrb[0].mxu0
  %v249 = vadd.f32 %v113, %v248
  %v250 = vpop.f32.mrb[0].mxu0
  %v251 = vadd.f32 %v117, %v250
  %252 = vdwg.mxu0
  %v253 = vld [vmem:[%s5] sm:$0xff]
  %v254 = vld [vmem:[%s5 + $0x8] sm:$0xff]
  %v255 = vld [vmem:[%s5 + $0x10] sm:$0xff]
  %v256 = vld [vmem:[%s5 + $0x18] sm:$0xff]
  %v257 = vld [vmem:[%s5 + $0x20] sm:$0xff]
  %v258 = vld [vmem:[%s5 + $0x28] sm:$0xff]
  %v259 = vld [vmem:[%s5 + $0x30] sm:$0xff]
  %v260 = vld [vmem:[%s5 + $0x38] sm:$0xff]
  %v261 = vmul.f32 %v235, %v253
  %v262 = vmul.f32 %v237, %v254
  %v263 = vmul.f32 %v239, %v255
  %v264 = vmul.f32 %v241, %v256
  %v265 = vmul.f32 %v245, %v257
  %v266 = vmul.f32 %v247, %v258
  %v267 = vmul.f32 %v249, %v259
  %v268 = vmul.f32 %v251, %v260
  %v269 = vpack.c.bf16 %v239, %v235
  %v270 = vpack.c.bf16 %v241, %v237
  %v271 = vpack.c.bf16 %v249, %v245
  %v272 = vpack.c.bf16 %v251, %v247
  %v273 = vld [vmem:[%s4] sm:$0xff]
  %v274 = vld [vmem:[%s4 + $0x8] sm:$0xff]
  %v275 = vld [vmem:[%s4 + $0x10] sm:$0xff]
  %v276 = vld [vmem:[%s4 + $0x18] sm:$0xff]
  %v277 = vld [vmem:[%s4 + $0x20] sm:$0xff]
  %v278 = vld [vmem:[%s4 + $0x28] sm:$0xff]
  %v279 = vld [vmem:[%s4 + $0x30] sm:$0xff]
  %v280 = vld [vmem:[%s4 + $0x38] sm:$0xff]
  %v281 = vld [vmem:[%s4 + $0x40] sm:$0xff]
  %v282 = vld [vmem:[%s4 + $0x48] sm:$0xff]
  %v283 = vld [vmem:[%s4 + $0x50] sm:$0xff]
  %v284 = vld [vmem:[%s4 + $0x58] sm:$0xff]
  %v285 = vld [vmem:[%s4 + $0x60] sm:$0xff]
  %v286 = vld [vmem:[%s4 + $0x68] sm:$0xff]
  %v287 = vld [vmem:[%s4 + $0x70] sm:$0xff]
  %v288 = vld [vmem:[%s4 + $0x78] sm:$0xff]
  %v289 = vld [vmem:[%s4 + $0x80] sm:$0xff]
  %v290 = vld [vmem:[%s4 + $0x88] sm:$0xff]
  %v291 = vld [vmem:[%s4 + $0x90] sm:$0xff]
  %v292 = vld [vmem:[%s4 + $0x98] sm:$0xff]
  %v293 = vld [vmem:[%s4 + $0xa0] sm:$0xff]
  %v294 = vld [vmem:[%s4 + $0xa8] sm:$0xff]
  %v295 = vld [vmem:[%s4 + $0xb0] sm:$0xff]
  %v296 = vld [vmem:[%s4 + $0xb8] sm:$0xff]
  %v321 = vunpack.c.l.b16 %v273
  %v322 = vunpack.c.h.b16 %v273
  %v323 = vunpack.c.l.b16 %v274
  %v324 = vunpack.c.h.b16 %v274
  %v325 = vunpack.c.l.b16 %v275
  %v326 = vunpack.c.h.b16 %v275
  %v327 = vunpack.c.l.b16 %v276
  %v328 = vunpack.c.h.b16 %v276
  %v329 = vunpack.c.l.b16 %v277
  %v330 = vunpack.c.h.b16 %v277
  %v331 = vunpack.c.l.b16 %v278
  %v332 = vunpack.c.h.b16 %v278
  %v333 = vunpack.c.l.b16 %v279
  %v334 = vunpack.c.h.b16 %v279
  %v335 = vunpack.c.l.b16 %v280
  %v336 = vunpack.c.h.b16 %v280
  %v337 = vunpack.c.l.b16 %v281
  %v338 = vunpack.c.h.b16 %v281
  %v339 = vunpack.c.l.b16 %v282
  %v340 = vunpack.c.h.b16 %v282
  %v341 = vunpack.c.l.b16 %v283
  %v342 = vunpack.c.h.b16 %v283
  %v343 = vunpack.c.l.b16 %v284
  %v344 = vunpack.c.h.b16 %v284
  %v345 = vunpack.c.l.b16 %v285
  %v346 = vunpack.c.h.b16 %v285
  %v347 = vunpack.c.l.b16 %v286
  %v348 = vunpack.c.h.b16 %v286
  %v349 = vunpack.c.l.b16 %v287
  %v350 = vunpack.c.h.b16 %v287
  %v351 = vunpack.c.l.b16 %v288
  %v352 = vunpack.c.h.b16 %v288
  %v353 = vunpack.c.l.b16 %v289
  %v354 = vunpack.c.h.b16 %v289
  %v355 = vunpack.c.l.b16 %v290
  %v356 = vunpack.c.h.b16 %v290
  %v357 = vunpack.c.l.b16 %v291
  %v358 = vunpack.c.h.b16 %v291
  %v359 = vunpack.c.l.b16 %v292
  %v360 = vunpack.c.h.b16 %v292
  %v361 = vunpack.c.l.b16 %v293
  %v362 = vunpack.c.h.b16 %v293
  %v363 = vunpack.c.l.b16 %v294
  %v364 = vunpack.c.h.b16 %v294
  %v365 = vunpack.c.l.b16 %v295
  %v366 = vunpack.c.h.b16 %v295
  %v367 = vunpack.c.l.b16 %v296
  %v368 = vunpack.c.h.b16 %v296
  %v369 = vpack.c.b16 %v323, %v321
  %v370 = vpack.c.b16 %v324, %v322
  %v371 = vpack.c.b16 %v327, %v325
  %v372 = vpack.c.b16 %v328, %v326
  %v373 = vpack.c.b16 %v331, %v329
  %v374 = vpack.c.b16 %v332, %v330
  %v375 = vpack.c.b16 %v335, %v333
  %v376 = vpack.c.b16 %v336, %v334
  %v377 = vpack.c.b16 %v339, %v337
  %v378 = vpack.c.b16 %v340, %v338
  %v379 = vpack.c.b16 %v343, %v341
  %v380 = vpack.c.b16 %v344, %v342
  %v381 = vpack.c.b16 %v347, %v345
  %v382 = vpack.c.b16 %v348, %v346
  %v383 = vpack.c.b16 %v351, %v349
  %v384 = vpack.c.b16 %v352, %v350
  %v385 = vpack.c.b16 %v355, %v353
  %v386 = vpack.c.b16 %v356, %v354
  %v387 = vpack.c.b16 %v359, %v357
  %v388 = vpack.c.b16 %v360, %v358
  %v389 = vpack.c.b16 %v363, %v361
  %v390 = vpack.c.b16 %v364, %v362
  %v391 = vpack.c.b16 %v367, %v365
  %v392 = vpack.c.b16 %v368, %v366
  %vm417 = vcmask 523264
  %v419 = vsel %vm417, %v270, 0
  %v422 = vsel %vm417, %v272, 0
  %424 = vmatprep.subr.bf16.mxu0 %v370
  %425 = vmatpush1.bf16.msra.mxu0 %v369
  %426 = vmatprep.subr.bf16.mxu0 %v372
  %427 = vmatpush1.bf16.msra.mxu0 %v371
  %428 = vmatprep.subr.bf16.mxu0 %v374
  %429 = vmatpush1.bf16.msra.mxu0 %v373
  %430 = vmatprep.subr.bf16.mxu0 %v376
  %431 = vmatpush1.bf16.msra.mxu0 %v375
  %432 = vmatprep.subr.bf16.mxu0 %v378
  %433 = vmatpush1.bf16.msra.mxu0 %v377
  %434 = vmatprep.subr.bf16.mxu0 %v380
  %435 = vmatpush1.bf16.msra.mxu0 %v379
  %436 = vmatprep.subr.bf16.mxu0 %v382
  %437 = vmatpush1.bf16.msra.mxu0 %v381
  %438 = vmatprep.subr.bf16.mxu0 %v384
  %439 = vmatpush1.bf16.msra.mxu0 %v383
  %440 = vmatprep.subr.bf16.mxu0 %v386
  %441 = vmatpush1.bf16.msra.mxu0 %v385
  %442 = vmatprep.subr.bf16.mxu0 %v388
  %443 = vmatpush1.bf16.msra.mxu0 %v387
  %444 = vmatprep.subr.bf16.mxu0 %v390
  %445 = vmatpush1.bf16.msra.mxu0 %v389
  %446 = vmatprep.subr.bf16.mxu0 %v392
  %447 = vmatpush1.bf16.msra.mxu0 %v391
  %448 = vmatprep.subr.bf16.mxu0 0
  %449 = vmatpush1.bf16.msra.mxu0 0
  %450 = vmatprep.subr.bf16.mxu0 0
  %451 = vmatpush1.bf16.msra.mxu0 0
  %452 = vmatprep.subr.bf16.mxu0 0
  %453 = vmatpush1.bf16.msra.mxu0 0
  %454 = vmatprep.subr.bf16.mxu0 0
  %455 = vmatpush1.bf16.msra.mxu0 0
  %456 = vmatprep.mubr.bf16.mxu0 %v419
  %457 = vmatmul.mubr.bf16.gmra.mrb[0].mxu0 %v269
  %v458 = vpop.f32.mrb[0].mxu0
  %v459 = vadd.f32 0.0, %v458
  %v460 = vpop.f32.mrb[0].mxu0
  %v461 = vadd.f32 0.0, %v460
  %v462 = vpop.f32.mrb[0].mxu0
  %v463 = vadd.f32 0.0, %v462
  %v464 = vpop.f32.mrb[0].mxu0
  %v465 = vadd.f32 0.0, %v464
  %466 = vmatprep.mubr.bf16.mxu0 %v422
  %467 = vmatmul.mubr.bf16.gmra.mrb[0].mxu0 %v271
  %v468 = vpop.f32.mrb[0].mxu0
  %v469 = vadd.f32 0.0, %v468
  %v470 = vpop.f32.mrb[0].mxu0
  %v471 = vadd.f32 0.0, %v470
  %v472 = vpop.f32.mrb[0].mxu0
  %v473 = vadd.f32 0.0, %v472
  %v474 = vpop.f32.mrb[0].mxu0
  %v475 = vadd.f32 0.0, %v474
  %476 = vdwg.mxu0
  %v477 = vld [vmem:[%s6] sm:$0xff]
  %v478 = vld [vmem:[%s6 + $0x8] sm:$0xff]
  %v479 = vld [vmem:[%s6 + $0x10] sm:$0xff]
  %v480 = vld [vmem:[%s6 + $0x18] sm:$0xff]
  %v481 = vld [vmem:[%s6 + $0x20] sm:$0xff]
  %v482 = vld [vmem:[%s6 + $0x28] sm:$0xff]
  %v483 = vld [vmem:[%s6 + $0x30] sm:$0xff]
  %v484 = vld [vmem:[%s6 + $0x38] sm:$0xff]
  %v485 = vmul.f32 %v459, %v477
  %v486 = vmul.f32 %v461, %v478
  %v487 = vmul.f32 %v463, %v479
  %v488 = vmul.f32 %v465, %v480
  %v489 = vmul.f32 %v469, %v481
  %v490 = vmul.f32 %v471, %v482
  %v491 = vmul.f32 %v473, %v483
  %v492 = vmul.f32 %v475, %v484
  %v493 = vadd.f32 %v261, %v485
  %v494 = vadd.f32 %v262, %v486
  %v495 = vadd.f32 %v263, %v487
  %v496 = vadd.f32 %v264, %v488
  %v497 = vadd.f32 %v265, %v489
  %v498 = vadd.f32 %v266, %v490
  %v499 = vadd.f32 %v267, %v491
  %v500 = vadd.f32 %v268, %v492
  %v501 = vmul.f32 %v493, 0.17677669
  %v502 = vmul.f32 %v495, 0.17677669
  %v503 = vmul.f32 %v497, 0.17677669
  %v504 = vmul.f32 %v499, 0.17677669
  %v505 = vpack.c.bf16 %v502, %v501
  %v506 = vpack.c.bf16 %v504, %v503
  %v507 = vpack.c.bf16 %v496, %v494
  %v508 = vpack.c.bf16 %v500, %v498
  %v509 = vlaneseq
  %v510 = vshrl.u32 %v509, 7
  %v511 = vadd.s32 %v510, 8
  %v512 = vlaneseq
  %v513 = vand.u32 %v512, 127
  %vm514 = vcmp.le.s32.totalorder %v513, %v510
  %vm515 = vcmp.le.s32.totalorder %v513, %v511
  %v516 = vsel %vm514, 0.0, -1e+30
  %v517 = vsel %vm515, 0.0, -1e+30
  %519 = vrot.lane.b32.xlu0 %v505, 96
  %v520 = vpop.permute.xlu0 %519
  %vm521 = vcmask 261120
  %v523 = vsel %vm521, %v505, 0
  %v526 = vsel %vm521, %v520, 0
  %v529 = vsel %vm521, %v507, 0
  %531 = vmatprep.subr.bf16.mxu0 0
  %532 = vmatpush1.bf16.xpose.msra.mxu0 %v529
  %533 = vmatprep.subr.bf16.mxu0 0
  %534 = vmatpush1.bf16.xpose.msra.mxu0 0
  %535 = vmatprep.subr.bf16.mxu0 0
  %536 = vmatpush1.bf16.xpose.msra.mxu0 0
  %537 = vmatprep.subr.bf16.mxu0 0
  %538 = vmatpush1.bf16.xpose.msra.mxu0 0
  %539 = vmatprep.subr.bf16.mxu0 0
  %540 = vmatpush1.bf16.xpose.msra.mxu0 0
  %541 = vmatprep.subr.bf16.mxu0 0
  %542 = vmatpush1.bf16.xpose.msra.mxu0 0
  %543 = vmatprep.subr.bf16.mxu0 0
  %544 = vmatpush1.bf16.xpose.msra.mxu0 0
  %545 = vmatprep.subr.bf16.mxu0 0
  %546 = vmatpush1.bf16.xpose.msra.mxu0 0
  %547 = vmatprep.subr.bf16.mxu0 0
  %548 = vmatpush1.bf16.xpose.msra.mxu0 0
  %549 = vmatprep.subr.bf16.mxu0 0
  %550 = vmatpush1.bf16.xpose.msra.mxu0 0
  %551 = vmatprep.subr.bf16.mxu0 0
  %552 = vmatpush1.bf16.xpose.msra.mxu0 0
  %553 = vmatprep.subr.bf16.mxu0 0
  %554 = vmatpush1.bf16.xpose.msra.mxu0 0
  %555 = vmatprep.subr.bf16.mxu0 0
  %556 = vmatpush1.bf16.xpose.msra.mxu0 0
  %557 = vmatprep.subr.bf16.mxu0 0
  %558 = vmatpush1.bf16.xpose.msra.mxu0 0
  %559 = vmatprep.subr.bf16.mxu0 0
  %560 = vmatpush1.bf16.xpose.msra.mxu0 0
  %561 = vmatprep.subr.bf16.mxu0 0
  %562 = vmatpush1.bf16.xpose.msra.mxu0 0
  %563 = vmatprep.mubr.bf16.mxu0 0
  %564 = vmatmul.mubr.bf16.gmra.mrb[0].mxu0 %v523
  %v565 = vpop.f32.mrb[0].mxu0
  %v566 = vadd.f32 %v516, %v565
  %v567 = vpop.f32.mrb[0].mxu0
  %v568 = vpop.f32.mrb[0].mxu0
  %v569 = vadd.f32 %v517, %v568
  %v570 = vpop.f32.mrb[0].mxu0
  %571 = vmatprep.mubr.bf16.mxu0 0
  %572 = vmatmul.mubr.bf16.gmra.mrb[0].mxu0 %v526
  %v573 = vpop.f32.mrb[0].mxu0
  %v574 = vadd.f32 %v516, %v573
  %v575 = vpop.f32.mrb[0].mxu0
  %v576 = vpop.f32.mrb[0].mxu0
  %v577 = vadd.f32 %v517, %v576
  %v578 = vpop.f32.mrb[0].mxu0
  %579 = vdwg.mxu0
  %vm580 = vcmask 130048
  %v581 = vsel %vm580, %v566, -inf
  %582 = vmax.xlane.f32.xlu0 %v581
  %v583 = vpop.xlane.xlu0 %582
  %v584 = vsel %vm580, %v569, -inf
  %585 = vmax.xlane.f32.xlu0 %v584
  %v586 = vpop.xlane.xlu0 %585
  %v587 = vsel %vm580, %v574, -inf
  %588 = vmax.xlane.f32.xlu0 %v587
  %v589 = vpop.xlane.xlu0 %588
  %v590 = vsel %vm580, %v577, -inf
  %591 = vmax.xlane.f32.xlu0 %v590
  %v592 = vpop.xlane.xlu0 %591
  %v593 = vsub.f32 %v566, %v583
  %v594 = vsub.f32 %v569, %v586
  %v595 = vsub.f32 %v574, %v589
  %v596 = vsub.f32 %v577, %v592
  %v597 = vmul.f32 %v593, 1.442695
  %v598 = vpow.pop %v597
  %v599 = vmul.f32 %v594, 1.442695
  %v600 = vpow.pop %v599
  %v601 = vmul.f32 %v595, 1.442695
  %v602 = vpow.pop %v601
  %v603 = vmul.f32 %v596, 1.442695
  %v604 = vpow.pop %v603
  %v605 = vsel %vm580, %v598, 0.0
  %606 = vadd.xlane.f32.xlu0 %v605
  %v607 = vpop.xlane.xlu0 %606
  %v608 = vsel %vm580, %v600, 0.0
  %609 = vadd.xlane.f32.xlu0 %v608
  %v610 = vpop.xlane.xlu0 %609
  %v611 = vsel %vm580, %v602, 0.0
  %612 = vadd.xlane.f32.xlu0 %v611
  %v613 = vpop.xlane.xlu0 %612
  %v614 = vsel %vm580, %v604, 0.0
  %615 = vadd.xlane.f32.xlu0 %v614
  %v616 = vpop.xlane.xlu0 %615
  %v617 = vrcp.pop %v607
  %v618 = vrcp.pop %v610
  %v619 = vrcp.pop %v613
  %v620 = vrcp.pop %v616
  %v621 = vmul.f32 %v598, %v617
  %v622 = vmul.f32 %v600, %v618
  %v623 = vmul.f32 %v602, %v619
  %v624 = vmul.f32 %v604, %v620
  %v625 = vpack.c.bf16 %v622, %v621
  %v626 = vpack.c.bf16 %v624, %v623
  %628 = vrot.lane.b32.xlu0 %v270, 64
  %v629 = vpop.permute.xlu0 %628
  %v632 = vsel %vm580, %v625, 0
  %v635 = vsel %vm580, %v626, 0
  %637 = vmatprep.subr.bf16.mxu0 0
  %638 = vmatpush1.bf16.msra.mxu0 %v629
  %639 = vmatprep.subr.bf16.mxu0 0
  %640 = vmatpush1.bf16.msra.mxu0 0
  %641 = vmatprep.subr.bf16.mxu0 0
  %642 = vmatpush1.bf16.msra.mxu0 0
  %643 = vmatprep.subr.bf16.mxu0 0
  %644 = vmatpush1.bf16.msra.mxu0 0
  %645 = vmatprep.subr.bf16.mxu0 0
  %646 = vmatpush1.bf16.msra.mxu0 0
  %647 = vmatprep.subr.bf16.mxu0 0
  %648 = vmatpush1.bf16.msra.mxu0 0
  %649 = vmatprep.subr.bf16.mxu0 0
  %650 = vmatpush1.bf16.msra.mxu0 0
  %651 = vmatprep.subr.bf16.mxu0 0
  %652 = vmatpush1.bf16.msra.mxu0 0
  %653 = vmatprep.subr.bf16.mxu0 0
  %654 = vmatpush1.bf16.msra.mxu0 0
  %655 = vmatprep.subr.bf16.mxu0 0
  %656 = vmatpush1.bf16.msra.mxu0 0
  %657 = vmatprep.subr.bf16.mxu0 0
  %658 = vmatpush1.bf16.msra.mxu0 0
  %659 = vmatprep.subr.bf16.mxu0 0
  %660 = vmatpush1.bf16.msra.mxu0 0
  %661 = vmatprep.subr.bf16.mxu0 0
  %662 = vmatpush1.bf16.msra.mxu0 0
  %663 = vmatprep.subr.bf16.mxu0 0
  %664 = vmatpush1.bf16.msra.mxu0 0
  %665 = vmatprep.subr.bf16.mxu0 0
  %666 = vmatpush1.bf16.msra.mxu0 0
  %667 = vmatprep.subr.bf16.mxu0 0
  %668 = vmatpush1.bf16.msra.mxu0 0
  %669 = vmatprep.mubr.bf16.mxu0 0
  %670 = vmatmul.mubr.bf16.gmra.mrb[0].mxu0 %v632
  %v671 = vpop.f32.mrb[0].mxu0
  %v672 = vadd.f32 0.0, %v671
  %v673 = vpop.f32.mrb[0].mxu0
  %v674 = vpop.f32.mrb[0].mxu0
  %v675 = vadd.f32 0.0, %v674
  %v676 = vpop.f32.mrb[0].mxu0
  %677 = vmatprep.mubr.bf16.mxu0 0
  %678 = vmatmul.mubr.bf16.gmra.mrb[0].mxu0 %v635
  %v679 = vpop.f32.mrb[0].mxu0
  %v680 = vadd.f32 0.0, %v679
  %v681 = vpop.f32.mrb[0].mxu0
  %v682 = vpop.f32.mrb[0].mxu0
  %v683 = vadd.f32 0.0, %v682
  %v684 = vpop.f32.mrb[0].mxu0
  %685 = vdwg.mxu0
  %686 = vst.msk [vmem:[#allocation2] sm:$0xff] %vm521, %v672
  %687 = vst.msk [vmem:[#allocation2 + $0x8] sm:$0xff] %vm521, %v675
  %690 = vrot.lane.b32.xlu0 %v680, 32
  %v691 = vpop.permute.xlu0 %690
  %692 = vrot.lane.b32.xlu0 %v683, 32
  %v693 = vpop.permute.xlu0 %692
  %vm696 = vcmask 523520
  %697 = vst.msk [vmem:[#allocation2] sm:$0xff] %vm696, %v691
  %698 = vst.msk [vmem:[#allocation2 + $0x8] sm:$0xff] %vm696, %v693
  %699 = vrot.lane.b32.xlu0 %v505, 64
  %v700 = vpop.permute.xlu0 %699
  %701 = vrot.lane.b32.xlu0 %v520, 64
  %v702 = vpop.permute.xlu0 %701
  %704 = vrot.lane.b32.xlu0 %v507, 96
  %v705 = vpop.permute.xlu0 %704
  %v707 = vsel %vm521, %v700, 0
  %v710 = vsel %vm521, %v702, 0
  %v713 = vsel %vm521, %v705, 0
  %715 = vmatprep.subr.bf16.mxu0 0
  %716 = vmatpush1.bf16.xpose.msra.mxu0 %v713
  %717 = vmatprep.subr.bf16.mxu0 0
  %718 = vmatpush1.bf16.xpose.msra.mxu0 0
  %719 = vmatprep.subr.bf16.mxu0 0
  %720 = vmatpush1.bf16.xpose.msra.mxu0 0
  %721 = vmatprep.subr.bf16.mxu0 0
  %722 = vmatpush1.bf16.xpose.msra.mxu0 0
  %723 = vmatprep.subr.bf16.mxu0 0
  %724 = vmatpush1.bf16.xpose.msra.mxu0 0
  %725 = vmatprep.subr.bf16.mxu0 0
  %726 = vmatpush1.bf16.xpose.msra.mxu0 0
  %727 = vmatprep.subr.bf16.mxu0 0
  %728 = vmatpush1.bf16.xpose.msra.mxu0 0
  %729 = vmatprep.subr.bf16.mxu0 0
  %730 = vmatpush1.bf16.xpose.msra.mxu0 0
  %731 = vmatprep.subr.bf16.mxu0 0
  %732 = vmatpush1.bf16.xpose.msra.mxu0 0
  %733 = vmatprep.subr.bf16.mxu0 0
  %734 = vmatpush1.bf16.xpose.msra.mxu0 0
  %735 = vmatprep.subr.bf16.mxu0 0
  %736 = vmatpush1.bf16.xpose.msra.mxu0 0
  %737 = vmatprep.subr.bf16.mxu0 0
  %738 = vmatpush1.bf16.xpose.msra.mxu0 0
  %739 = vmatprep.subr.bf16.mxu0 0
  %740 = vmatpush1.bf16.xpose.msra.mxu0 0
  %741 = vmatprep.subr.bf16.mxu0 0
  %742 = vmatpush1.bf16.xpose.msra.mxu0 0
  %743 = vmatprep.subr.bf16.mxu0 0
  %744 = vmatpush1.bf16.xpose.msra.mxu0 0
  %745 = vmatprep.subr.bf16.mxu0 0
  %746 = vmatpush1.bf16.xpose.msra.mxu0 0
  %747 = vmatprep.mubr.bf16.mxu0 0
  %748 = vmatmul.mubr.bf16.gmra.mrb[0].mxu0 %v707
  %v749 = vpop.f32.mrb[0].mxu0
  %v750 = vadd.f32 %v516, %v749
  %v751 = vpop.f32.mrb[0].mxu0
  %v752 = vpop.f32.mrb[0].mxu0
  %v753 = vadd.f32 %v517, %v752
  %v754 = vpop.f32.mrb[0].mxu0
  %755 = vmatprep.mubr.bf16.mxu0 0
  %756 = vmatmul.mubr.bf16.gmra.mrb[0].mxu0 %v710
  %v757 = vpop.f32.mrb[0].mxu0
  %v758 = vadd.f32 %v516, %v757
  %v759 = vpop.f32.mrb[0].mxu0
  %v760 = vpop.f32.mrb[0].mxu0
  %v761 = vadd.f32 %v517, %v760
  %v762 = vpop.f32.mrb[0].mxu0
  %763 = vdwg.mxu0
  %v764 = vsel %vm580, %v750, -inf
  %765 = vmax.xlane.f32.xlu0 %v764
  %v766 = vpop.xlane.xlu0 %765
  %v767 = vsel %vm580, %v753, -inf
  %768 = vmax.xlane.f32.xlu0 %v767
  %v769 = vpop.xlane.xlu0 %768
  %v770 = vsel %vm580, %v758, -inf
  %771 = vmax.xlane.f32.xlu0 %v770
  %v772 = vpop.xlane.xlu0 %771
  %v773 = vsel %vm580, %v761, -inf
  %774 = vmax.xlane.f32.xlu0 %v773
  %v775 = vpop.xlane.xlu0 %774
  %v776 = vsub.f32 %v750, %v766
  %v777 = vsub.f32 %v753, %v769
  %v778 = vsub.f32 %v758, %v772
  %v779 = vsub.f32 %v761, %v775
  %v780 = vmul.f32 %v776, 1.442695
  %v781 = vpow.pop %v780
  %v782 = vmul.f32 %v777, 1.442695
  %v783 = vpow.pop %v782
  %v784 = vmul.f32 %v778, 1.442695
  %v785 = vpow.pop %v784
  %v786 = vmul.f32 %v779, 1.442695
  %v787 = vpow.pop %v786
  %v788 = vsel %vm580, %v781, 0.0
  %789 = vadd.xlane.f32.xlu0 %v788
  %v790 = vpop.xlane.xlu0 %789
  %v791 = vsel %vm580, %v783, 0.0
  %792 = vadd.xlane.f32.xlu0 %v791
  %v793 = vpop.xlane.xlu0 %792
  %v794 = vsel %vm580, %v785, 0.0
  %795 = vadd.xlane.f32.xlu0 %v794
  %v796 = vpop.xlane.xlu0 %795
  %v797 = vsel %vm580, %v787, 0.0
  %798 = vadd.xlane.f32.xlu0 %v797
  %v799 = vpop.xlane.xlu0 %798
  %v800 = vrcp.pop %v790
  %v801 = vrcp.pop %v793
  %v802 = vrcp.pop %v796
  %v803 = vrcp.pop %v799
  %v804 = vmul.f32 %v781, %v800
  %v805 = vmul.f32 %v783, %v801
  %v806 = vmul.f32 %v785, %v802
  %v807 = vmul.f32 %v787, %v803
  %v808 = vpack.c.bf16 %v805, %v804
  %v809 = vpack.c.bf16 %v807, %v806
  %810 = vrot.lane.b32.xlu0 %v270, 32
  %v811 = vpop.permute.xlu0 %810
  %v814 = vsel %vm580, %v808, 0
  %v817 = vsel %vm580, %v809, 0
  %819 = vmatprep.subr.bf16.mxu0 0
  %820 = vmatpush1.bf16.msra.mxu0 %v811
  %821 = vmatprep.subr.bf16.mxu0 0
  %822 = vmatpush1.bf16.msra.mxu0 0
  %823 = vmatprep.subr.bf16.mxu0 0
  %824 = vmatpush1.bf16.msra.mxu0 0
  %825 = vmatprep.subr.bf16.mxu0 0
  %826 = vmatpush1.bf16.msra.mxu0 0
  %827 = vmatprep.subr.bf16.mxu0 0
  %828 = vmatpush1.bf16.msra.mxu0 0
  %829 = vmatprep.subr.bf16.mxu0 0
  %830 = vmatpush1.bf16.msra.mxu0 0
  %831 = vmatprep.subr.bf16.mxu0 0
  %832 = vmatpush1.bf16.msra.mxu0 0
  %833 = vmatprep.subr.bf16.mxu0 0
  %834 = vmatpush1.bf16.msra.mxu0 0
  %835 = vmatprep.subr.bf16.mxu0 0
  %836 = vmatpush1.bf16.msra.mxu0 0
  %837 = vmatprep.subr.bf16.mxu0 0
  %838 = vmatpush1.bf16.msra.mxu0 0
  %839 = vmatprep.subr.bf16.mxu0 0
  %840 = vmatpush1.bf16.msra.mxu0 0
  %841 = vmatprep.subr.bf16.mxu0 0
  %842 = vmatpush1.bf16.msra.mxu0 0
  %843 = vmatprep.subr.bf16.mxu0 0
  %844 = vmatpush1.bf16.msra.mxu0 0
  %845 = vmatprep.subr.bf16.mxu0 0
  %846 = vmatpush1.bf16.msra.mxu0 0
  %847 = vmatprep.subr.bf16.mxu0 0
  %848 = vmatpush1.bf16.msra.mxu0 0
  %849 = vmatprep.subr.bf16.mxu0 0
  %850 = vmatpush1.bf16.msra.mxu0 0
  %851 = vmatprep.mubr.bf16.mxu0 0
  %852 = vmatmul.mubr.bf16.gmra.mrb[0].mxu0 %v814
  %v853 = vpop.f32.mrb[0].mxu0
  %v854 = vadd.f32 0.0, %v853
  %v855 = vpop.f32.mrb[0].mxu0
  %v856 = vpop.f32.mrb[0].mxu0
  %v857 = vadd.f32 0.0, %v856
  %v858 = vpop.f32.mrb[0].mxu0
  %859 = vmatprep.mubr.bf16.mxu0 0
  %860 = vmatmul.mubr.bf16.gmra.mrb[0].mxu0 %v817
  %v861 = vpop.f32.mrb[0].mxu0
  %v862 = vadd.f32 0.0, %v861
  %v863 = vpop.f32.mrb[0].mxu0
  %v864 = vpop.f32.mrb[0].mxu0
  %v865 = vadd.f32 0.0, %v864
  %v866 = vpop.f32.mrb[0].mxu0
  %867 = vdwg.mxu0
  %870 = vrot.lane.b32.xlu0 %v854, 64
  %v871 = vpop.permute.xlu0 %870
  %872 = vrot.lane.b32.xlu0 %v857, 64
  %v873 = vpop.permute.xlu0 %872
  %vm876 = vcmask 785920
  %877 = vst.msk [vmem:[#allocation2] sm:$0xff] %vm876, %v871
  %878 = vst.msk [vmem:[#allocation2 + $0x8] sm:$0xff] %vm876, %v873
  %881 = vrot.lane.b32.xlu0 %v862, 96
  %v882 = vpop.permute.xlu0 %881
  %883 = vrot.lane.b32.xlu0 %v865, 96
  %v884 = vpop.permute.xlu0 %883
  %vm887 = vcmask 1048320
  %888 = vst.msk [vmem:[#allocation2] sm:$0xff] %vm887, %v882
  %889 = vst.msk [vmem:[#allocation2 + $0x8] sm:$0xff] %vm887, %v884
  %891 = vrot.lane.b32.xlu0 %v506, 96
  %v892 = vpop.permute.xlu0 %891
  %v894 = vsel %vm521, %v506, 0
  %v897 = vsel %vm521, %v892, 0
  %v900 = vsel %vm521, %v508, 0
  %902 = vmatprep.subr.bf16.mxu0 0
  %903 = vmatpush1.bf16.xpose.msra.mxu0 %v900
  %904 = vmatprep.subr.bf16.mxu0 0
  %905 = vmatpush1.bf16.xpose.msra.mxu0 0
  %906 = vmatprep.subr.bf16.mxu0 0
  %907 = vmatpush1.bf16.xpose.msra.mxu0 0
  %908 = vmatprep.subr.bf16.mxu0 0
  %909 = vmatpush1.bf16.xpose.msra.mxu0 0
  %910 = vmatprep.subr.bf16.mxu0 0
  %911 = vmatpush1.bf16.xpose.msra.mxu0 0
  %912 = vmatprep.subr.bf16.mxu0 0
  %913 = vmatpush1.bf16.xpose.msra.mxu0 0
  %914 = vmatprep.subr.bf16.mxu0 0
  %915 = vmatpush1.bf16.xpose.msra.mxu0 0
  %916 = vmatprep.subr.bf16.mxu0 0
  %917 = vmatpush1.bf16.xpose.msra.mxu0 0
  %918 = vmatprep.subr.bf16.mxu0 0
  %919 = vmatpush1.bf16.xpose.msra.mxu0 0
  %920 = vmatprep.subr.bf16.mxu0 0
  %921 = vmatpush1.bf16.xpose.msra.mxu0 0
  %922 = vmatprep.subr.bf16.mxu0 0
  %923 = vmatpush1.bf16.xpose.msra.mxu0 0
  %924 = vmatprep.subr.bf16.mxu0 0
  %925 = vmatpush1.bf16.xpose.msra.mxu0 0
  %926 = vmatprep.subr.bf16.mxu0 0
  %927 = vmatpush1.bf16.xpose.msra.mxu0 0
  %928 = vmatprep.subr.bf16.mxu0 0
  %929 = vmatpush1.bf16.xpose.msra.mxu0 0
  %930 = vmatprep.subr.bf16.mxu0 0
  %931 = vmatpush1.bf16.xpose.msra.mxu0 0
  %932 = vmatprep.subr.bf16.mxu0 0
  %933 = vmatpush1.bf16.xpose.msra.mxu0 0
  %934 = vmatprep.mubr.bf16.mxu0 0
  %935 = vmatmul.mubr.bf16.gmra.mrb[0].mxu0 %v894
  %v936 = vpop.f32.mrb[0].mxu0
  %v937 = vadd.f32 %v516, %v936
  %v938 = vpop.f32.mrb[0].mxu0
  %v939 = vpop.f32.mrb[0].mxu0
  %v940 = vadd.f32 %v517, %v939
  %v941 = vpop.f32.mrb[0].mxu0
  %942 = vmatprep.mubr.bf16.mxu0 0
  %943 = vmatmul.mubr.bf16.gmra.mrb[0].mxu0 %v897
  %v944 = vpop.f32.mrb[0].mxu0
  %v945 = vadd.f32 %v516, %v944
  %v946 = vpop.f32.mrb[0].mxu0
  %v947 = vpop.f32.mrb[0].mxu0
  %v948 = vadd.f32 %v517, %v947
  %v949 = vpop.f32.mrb[0].mxu0
  %950 = vdwg.mxu0
  %v951 = vsel %vm580, %v937, -inf
  %952 = vmax.xlane.f32.xlu0 %v951
  %v953 = vpop.xlane.xlu0 %952
  %v954 = vsel %vm580, %v940, -inf
  %955 = vmax.xlane.f32.xlu0 %v954
  %v956 = vpop.xlane.xlu0 %955
  %v957 = vsel %vm580, %v945, -inf
  %958 = vmax.xlane.f32.xlu0 %v957
  %v959 = vpop.xlane.xlu0 %958
  %v960 = vsel %vm580, %v948, -inf
  %961 = vmax.xlane.f32.xlu0 %v960
  %v962 = vpop.xlane.xlu0 %961
  %v963 = vsub.f32 %v937, %v953
  %v964 = vsub.f32 %v940, %v956
  %v965 = vsub.f32 %v945, %v959
  %v966 = vsub.f32 %v948, %v962
  %v967 = vmul.f32 %v963, 1.442695
  %v968 = vpow.pop %v967
  %v969 = vmul.f32 %v964, 1.442695
  %v970 = vpow.pop %v969
  %v971 = vmul.f32 %v965, 1.442695
  %v972 = vpow.pop %v971
  %v973 = vmul.f32 %v966, 1.442695
  %v974 = vpow.pop %v973
  %v975 = vsel %vm580, %v968, 0.0
  %976 = vadd.xlane.f32.xlu0 %v975
  %v977 = vpop.xlane.xlu0 %976
  %v978 = vsel %vm580, %v970, 0.0
  %979 = vadd.xlane.f32.xlu0 %v978
  %v980 = vpop.xlane.xlu0 %979
  %v981 = vsel %vm580, %v972, 0.0
  %982 = vadd.xlane.f32.xlu0 %v981
  %v983 = vpop.xlane.xlu0 %982
  %v984 = vsel %vm580, %v974, 0.0
  %985 = vadd.xlane.f32.xlu0 %v984
  %v986 = vpop.xlane.xlu0 %985
  %v987 = vrcp.pop %v977
  %v988 = vrcp.pop %v980
  %v989 = vrcp.pop %v983
  %v990 = vrcp.pop %v986
  %v991 = vmul.f32 %v968, %v987
  %v992 = vmul.f32 %v970, %v988
  %v993 = vmul.f32 %v972, %v989
  %v994 = vmul.f32 %v974, %v990
  %v995 = vpack.c.bf16 %v992, %v991
  %v996 = vpack.c.bf16 %v994, %v993
  %998 = vrot.lane.b32.xlu0 %v272, 64
  %v999 = vpop.permute.xlu0 %998
  %v1002 = vsel %vm580, %v995, 0
  %v1005 = vsel %vm580, %v996, 0
  %1007 = vmatprep.subr.bf16.mxu0 0
  %1008 = vmatpush1.bf16.msra.mxu0 %v999
  %1009 = vmatprep.subr.bf16.mxu0 0
  %1010 = vmatpush1.bf16.msra.mxu0 0
  %1011 = vmatprep.subr.bf16.mxu0 0
  %1012 = vmatpush1.bf16.msra.mxu0 0
  %1013 = vmatprep.subr.bf16.mxu0 0
  %1014 = vmatpush1.bf16.msra.mxu0 0
  %1015 = vmatprep.subr.bf16.mxu0 0
  %1016 = vmatpush1.bf16.msra.mxu0 0
  %1017 = vmatprep.subr.bf16.mxu0 0
  %1018 = vmatpush1.bf16.msra.mxu0 0
  %1019 = vmatprep.subr.bf16.mxu0 0
  %1020 = vmatpush1.bf16.msra.mxu0 0
  %1021 = vmatprep.subr.bf16.mxu0 0
  %1022 = vmatpush1.bf16.msra.mxu0 0
  %1023 = vmatprep.subr.bf16.mxu0 0
  %1024 = vmatpush1.bf16.msra.mxu0 0
  %1025 = vmatprep.subr.bf16.mxu0 0
  %1026 = vmatpush1.bf16.msra.mxu0 0
  %1027 = vmatprep.subr.bf16.mxu0 0
  %1028 = vmatpush1.bf16.msra.mxu0 0
  %1029 = vmatprep.subr.bf16.mxu0 0
  %1030 = vmatpush1.bf16.msra.mxu0 0
  %1031 = vmatprep.subr.bf16.mxu0 0
  %1032 = vmatpush1.bf16.msra.mxu0 0
  %1033 = vmatprep.subr.bf16.mxu0 0
  %1034 = vmatpush1.bf16.msra.mxu0 0
  %1035 = vmatprep.subr.bf16.mxu0 0
  %1036 = vmatpush1.bf16.msra.mxu0 0
  %1037 = vmatprep.subr.bf16.mxu0 0
  %1038 = vmatpush1.bf16.msra.mxu0 0
  %1039 = vmatprep.mubr.bf16.mxu0 0
  %1040 = vmatmul.mubr.bf16.gmra.mrb[0].mxu0 %v1002
  %v1041 = vpop.f32.mrb[0].mxu0
  %v1042 = vadd.f32 0.0, %v1041
  %v1043 = vpop.f32.mrb[0].mxu0
  %v1044 = vpop.f32.mrb[0].mxu0
  %v1045 = vadd.f32 0.0, %v1044
  %v1046 = vpop.f32.mrb[0].mxu0
  %1047 = vmatprep.mubr.bf16.mxu0 0
  %1048 = vmatmul.mubr.bf16.gmra.mrb[0].mxu0 %v1005
  %v1049 = vpop.f32.mrb[0].mxu0
  %v1050 = vadd.f32 0.0, %v1049
  %v1051 = vpop.f32.mrb[0].mxu0
  %v1052 = vpop.f32.mrb[0].mxu0
  %v1053 = vadd.f32 0.0, %v1052
  %v1054 = vpop.f32.mrb[0].mxu0
  %1055 = vdwg.mxu0
  %1056 = vst.msk [vmem:[#allocation2 + $0x10] sm:$0xff] %vm521, %v1042
  %1057 = vst.msk [vmem:[#allocation2 + $0x18] sm:$0xff] %vm521, %v1045
  %1060 = vrot.lane.b32.xlu0 %v1050, 32
  %v1061 = vpop.permute.xlu0 %1060
  %1062 = vrot.lane.b32.xlu0 %v1053, 32
  %v1063 = vpop.permute.xlu0 %1062
  %1066 = vst.msk [vmem:[#allocation2 + $0x10] sm:$0xff] %vm696, %v1061
  %1067 = vst.msk [vmem:[#allocation2 + $0x18] sm:$0xff] %vm696, %v1063
  %1068 = vrot.lane.b32.xlu0 %v506, 64
  %v1069 = vpop.permute.xlu0 %1068
  %1070 = vrot.lane.b32.xlu0 %v892, 64
  %v1071 = vpop.permute.xlu0 %1070
  %1073 = vrot.lane.b32.xlu0 %v508, 96
  %v1074 = vpop.permute.xlu0 %1073
  %v1076 = vsel %vm521, %v1069, 0
  %v1079 = vsel %vm521, %v1071, 0
  %v1082 = vsel %vm521, %v1074, 0
  %1084 = vmatprep.subr.bf16.mxu0 0
  %1085 = vmatpush1.bf16.xpose.msra.mxu0 %v1082
  %1086 = vmatprep.subr.bf16.mxu0 0
  %1087 = vmatpush1.bf16.xpose.msra.mxu0 0
  %1088 = vmatprep.subr.bf16.mxu0 0
  %1089 = vmatpush1.bf16.xpose.msra.mxu0 0
  %1090 = vmatprep.subr.bf16.mxu0 0
  %1091 = vmatpush1.bf16.xpose.msra.mxu0 0
  %1092 = vmatprep.subr.bf16.mxu0 0
  %1093 = vmatpush1.bf16.xpose.msra.mxu0 0
  %1094 = vmatprep.subr.bf16.mxu0 0
  %1095 = vmatpush1.bf16.xpose.msra.mxu0 0
  %1096 = vmatprep.subr.bf16.mxu0 0
  %1097 = vmatpush1.bf16.xpose.msra.mxu0 0
  %1098 = vmatprep.subr.bf16.mxu0 0
  %1099 = vmatpush1.bf16.xpose.msra.mxu0 0
  %1100 = vmatprep.subr.bf16.mxu0 0
  %1101 = vmatpush1.bf16.xpose.msra.mxu0 0
  %1102 = vmatprep.subr.bf16.mxu0 0
  %1103 = vmatpush1.bf16.xpose.msra.mxu0 0
  %1104 = vmatprep.subr.bf16.mxu0 0
  %1105 = vmatpush1.bf16.xpose.msra.mxu0 0
  %1106 = vmatprep.subr.bf16.mxu0 0
  %1107 = vmatpush1.bf16.xpose.msra.mxu0 0
  %1108 = vmatprep.subr.bf16.mxu0 0
  %1109 = vmatpush1.bf16.xpose.msra.mxu0 0
  %1110 = vmatprep.subr.bf16.mxu0 0
  %1111 = vmatpush1.bf16.xpose.msra.mxu0 0
  %1112 = vmatprep.subr.bf16.mxu0 0
  %1113 = vmatpush1.bf16.xpose.msra.mxu0 0
  %1114 = vmatprep.subr.bf16.mxu0 0
  %1115 = vmatpush1.bf16.xpose.msra.mxu0 0
  %1116 = vmatprep.mubr.bf16.mxu0 0
  %1117 = vmatmul.mubr.bf16.gmra.mrb[0].mxu0 %v1076
  %v1118 = vpop.f32.mrb[0].mxu0
  %v1119 = vadd.f32 %v516, %v1118
  %v1120 = vpop.f32.mrb[0].mxu0
  %v1121 = vpop.f32.mrb[0].mxu0
  %v1122 = vadd.f32 %v517, %v1121
  %v1123 = vpop.f32.mrb[0].mxu0
  %1124 = vmatprep.mubr.bf16.mxu0 0
  %1125 = vmatmul.mubr.bf16.gmra.mrb[0].mxu0 %v1079
  %v1126 = vpop.f32.mrb[0].mxu0
  %v1127 = vadd.f32 %v516, %v1126
  %v1128 = vpop.f32.mrb[0].mxu0
  %v1129 = vpop.f32.mrb[0].mxu0
  %v1130 = vadd.f32 %v517, %v1129
  %v1131 = vpop.f32.mrb[0].mxu0
  %1132 = vdwg.mxu0
  %v1133 = vsel %vm580, %v1119, -inf
  %1134 = vmax.xlane.f32.xlu0 %v1133
  %v1135 = vpop.xlane.xlu0 %1134
  %v1136 = vsel %vm580, %v1122, -inf
  %1137 = vmax.xlane.f32.xlu0 %v1136
  %v1138 = vpop.xlane.xlu0 %1137
  %v1139 = vsel %vm580, %v1127, -inf
  %1140 = vmax.xlane.f32.xlu0 %v1139
  %v1141 = vpop.xlane.xlu0 %1140
  %v1142 = vsel %vm580, %v1130, -inf
  %1143 = vmax.xlane.f32.xlu0 %v1142
  %v1144 = vpop.xlane.xlu0 %1143
  %v1145 = vsub.f32 %v1119, %v1135
  %v1146 = vsub.f32 %v1122, %v1138
  %v1147 = vsub.f32 %v1127, %v1141
  %v1148 = vsub.f32 %v1130, %v1144
  %v1149 = vmul.f32 %v1145, 1.442695
  %v1150 = vpow.pop %v1149
  %v1151 = vmul.f32 %v1146, 1.442695
  %v1152 = vpow.pop %v1151
  %v1153 = vmul.f32 %v1147, 1.442695
  %v1154 = vpow.pop %v1153
  %v1155 = vmul.f32 %v1148, 1.442695
  %v1156 = vpow.pop %v1155
  %v1157 = vsel %vm580, %v1150, 0.0
  %1158 = vadd.xlane.f32.xlu0 %v1157
  %v1159 = vpop.xlane.xlu0 %1158
  %v1160 = vsel %vm580, %v1152, 0.0
  %1161 = vadd.xlane.f32.xlu0 %v1160
  %v1162 = vpop.xlane.xlu0 %1161
  %v1163 = vsel %vm580, %v1154, 0.0
  %1164 = vadd.xlane.f32.xlu0 %v1163
  %v1165 = vpop.xlane.xlu0 %1164
  %v1166 = vsel %vm580, %v1156, 0.0
  %1167 = vadd.xlane.f32.xlu0 %v1166
  %v1168 = vpop.xlane.xlu0 %1167
  %v1169 = vrcp.pop %v1159
  %v1170 = vrcp.pop %v1162
  %v1171 = vrcp.pop %v1165
  %v1172 = vrcp.pop %v1168
  %v1173 = vmul.f32 %v1150, %v1169
  %v1174 = vmul.f32 %v1152, %v1170
  %v1175 = vmul.f32 %v1154, %v1171
  %v1176 = vmul.f32 %v1156, %v1172
  %v1177 = vpack.c.bf16 %v1174, %v1173
  %v1178 = vpack.c.bf16 %v1176, %v1175
  %1179 = vrot.lane.b32.xlu0 %v272, 32
  %v1180 = vpop.permute.xlu0 %1179
  %v1183 = vsel %vm580, %v1177, 0
  %v1186 = vsel %vm580, %v1178, 0
  %1188 = vmatprep.subr.bf16.mxu0 0
  %1189 = vmatpush1.bf16.msra.mxu0 %v1180
  %1190 = vmatprep.subr.bf16.mxu0 0
  %1191 = vmatpush1.bf16.msra.mxu0 0
  %1192 = vmatprep.subr.bf16.mxu0 0
  %1193 = vmatpush1.bf16.msra.mxu0 0
  %1194 = vmatprep.subr.bf16.mxu0 0
  %1195 = vmatpush1.bf16.msra.mxu0 0
  %1196 = vmatprep.subr.bf16.mxu0 0
  %1197 = vmatpush1.bf16.msra.mxu0 0
  %1198 = vmatprep.subr.bf16.mxu0 0
  %1199 = vmatpush1.bf16.msra.mxu0 0
  %1200 = vmatprep.subr.bf16.mxu0 0
  %1201 = vmatpush1.bf16.msra.mxu0 0
  %1202 = vmatprep.subr.bf16.mxu0 0
  %1203 = vmatpush1.bf16.msra.mxu0 0
  %1204 = vmatprep.subr.bf16.mxu0 0
  %1205 = vmatpush1.bf16.msra.mxu0 0
  %1206 = vmatprep.subr.bf16.mxu0 0
  %1207 = vmatpush1.bf16.msra.mxu0 0
  %1208 = vmatprep.subr.bf16.mxu0 0
  %1209 = vmatpush1.bf16.msra.mxu0 0
  %1210 = vmatprep.subr.bf16.mxu0 0
  %1211 = vmatpush1.bf16.msra.mxu0 0
  %1212 = vmatprep.subr.bf16.mxu0 0
  %1213 = vmatpush1.bf16.msra.mxu0 0
  %1214 = vmatprep.subr.bf16.mxu0 0
  %1215 = vmatpush1.bf16.msra.mxu0 0
  %1216 = vmatprep.subr.bf16.mxu0 0
  %1217 = vmatpush1.bf16.msra.mxu0 0
  %1218 = vmatprep.subr.bf16.mxu0 0
  %1219 = vmatpush1.bf16.msra.mxu0 0
  %1220 = vmatprep.mubr.bf16.mxu0 0
  %1221 = vmatmul.mubr.bf16.gmra.mrb[0].mxu0 %v1183
  %v1222 = vpop.f32.mrb[0].mxu0
  %v1223 = vadd.f32 0.0, %v1222
  %v1224 = vpop.f32.mrb[0].mxu0
  %v1225 = vpop.f32.mrb[0].mxu0
  %v1226 = vadd.f32 0.0, %v1225
  %v1227 = vpop.f32.mrb[0].mxu0
  %1228 = vmatprep.mubr.bf16.mxu0 0
  %1229 = vmatmul.mubr.bf16.gmra.mrb[0].mxu0 %v1186
  %v1230 = vpop.f32.mrb[0].mxu0
  %v1231 = vadd.f32 0.0, %v1230
  %v1232 = vpop.f32.mrb[0].mxu0
  %v1233 = vpop.f32.mrb[0].mxu0
  %v1234 = vadd.f32 0.0, %v1233
  %v1235 = vpop.f32.mrb[0].mxu0
  %1236 = vdwg.mxu0
  %1239 = vrot.lane.b32.xlu0 %v1223, 64
  %v1240 = vpop.permute.xlu0 %1239
  %1241 = vrot.lane.b32.xlu0 %v1226, 64
  %v1242 = vpop.permute.xlu0 %1241
  %1245 = vst.msk [vmem:[#allocation2 + $0x10] sm:$0xff] %vm876, %v1240
  %1246 = vst.msk [vmem:[#allocation2 + $0x18] sm:$0xff] %vm876, %v1242
  %1249 = vrot.lane.b32.xlu0 %v1231, 96
  %v1250 = vpop.permute.xlu0 %1249
  %1251 = vrot.lane.b32.xlu0 %v1234, 96
  %v1252 = vpop.permute.xlu0 %1251
  %1255 = vst.msk [vmem:[#allocation2 + $0x10] sm:$0xff] %vm887, %v1250
  %1256 = vst.msk [vmem:[#allocation2 + $0x18] sm:$0xff] %vm887, %v1252
  %v1257 = vld [vmem:[#allocation2] sm:$0xff]
  %v1258 = vld [vmem:[#allocation2 + $0x8] sm:$0xff]
  %v1259 = vld [vmem:[#allocation2 + $0x10] sm:$0xff]
  %v1260 = vld [vmem:[#allocation2 + $0x18] sm:$0xff]
  %v1261 = vpack.c.bf16 %v1258, %v1257
  %v1262 = vpack.c.bf16 %v1260, %v1259
  %v1263 = vld [vmem:[%s7] sm:$0xf]
  %v1264 = vld [vmem:[%s7 + $0x4] sm:$0xf]
  %v1265 = vld [vmem:[%s7 + $0x8] sm:$0xf]
  %v1266 = vld [vmem:[%s7 + $0xc] sm:$0xf]
  %v1267 = vld [vmem:[%s7 + $0x10] sm:$0xf]
  %v1268 = vld [vmem:[%s7 + $0x14] sm:$0xf]
  %v1269 = vld [vmem:[%s7 + $0x18] sm:$0xf]
  %v1270 = vld [vmem:[%s7 + $0x1c] sm:$0xf]
  %v1271 = vld [vmem:[%s7 + $0x20] sm:$0xf]
  %v1272 = vld [vmem:[%s7 + $0x24] sm:$0xf]
  %v1273 = vld [vmem:[%s7 + $0x28] sm:$0xf]
  %v1274 = vld [vmem:[%s7 + $0x2c] sm:$0xf]
  %v1275 = vld [vmem:[%s7 + $0x30] sm:$0xf]
  %v1276 = vld [vmem:[%s7 + $0x34] sm:$0xf]
  %v1277 = vld [vmem:[%s7 + $0x38] sm:$0xf]
  %v1278 = vld [vmem:[%s7 + $0x3c] sm:$0xf]
  %v1295 = vunpack.c.l.b16 %v1263
  %v1296 = vunpack.c.l.b16 %v1264
  %v1297 = vunpack.c.l.b16 %v1265
  %v1298 = vunpack.c.l.b16 %v1266
  %v1299 = vunpack.c.l.b16 %v1267
  %v1300 = vunpack.c.l.b16 %v1268
  %v1301 = vunpack.c.l.b16 %v1269
  %v1302 = vunpack.c.l.b16 %v1270
  %v1303 = vunpack.c.l.b16 %v1271
  %v1304 = vunpack.c.l.b16 %v1272
  %v1305 = vunpack.c.l.b16 %v1273
  %v1306 = vunpack.c.l.b16 %v1274
  %v1307 = vunpack.c.l.b16 %v1275
  %v1308 = vunpack.c.l.b16 %v1276
  %v1309 = vunpack.c.l.b16 %v1277
  %v1310 = vunpack.c.l.b16 %v1278
  %v1311 = vpack.c.b16 %v1296, %v1295
  %v1312 = vpack.c.b16 %v1298, %v1297
  %v1313 = vpack.c.b16 %v1300, %v1299
  %v1314 = vpack.c.b16 %v1302, %v1301
  %v1315 = vpack.c.b16 %v1304, %v1303
  %v1316 = vpack.c.b16 %v1306, %v1305
  %v1317 = vpack.c.b16 %v1308, %v1307
  %v1318 = vpack.c.b16 %v1310, %v1309
  %1327 = vmatprep.subr.bf16.mxu0 0
  %1328 = vmatpush1.bf16.msra.mxu0 %v1311
  %1329 = vmatprep.subr.bf16.mxu0 0
  %1330 = vmatpush1.bf16.msra.mxu0 %v1312
  %1331 = vmatprep.subr.bf16.mxu0 0
  %1332 = vmatpush1.bf16.msra.mxu0 %v1313
  %1333 = vmatprep.subr.bf16.mxu0 0
  %1334 = vmatpush1.bf16.msra.mxu0 %v1314
  %1335 = vmatprep.subr.bf16.mxu0 0
  %1336 = vmatpush1.bf16.msra.mxu0 %v1315
  %1337 = vmatprep.subr.bf16.mxu0 0
  %1338 = vmatpush1.bf16.msra.mxu0 %v1316
  %1339 = vmatprep.subr.bf16.mxu0 0
  %1340 = vmatpush1.bf16.msra.mxu0 %v1317
  %1341 = vmatprep.subr.bf16.mxu0 0
  %1342 = vmatpush1.bf16.msra.mxu0 %v1318
  %1343 = vmatprep.subr.bf16.mxu0 0
  %1344 = vmatpush1.bf16.msra.mxu0 0
  %1345 = vmatprep.subr.bf16.mxu0 0
  %1346 = vmatpush1.bf16.msra.mxu0 0
  %1347 = vmatprep.subr.bf16.mxu0 0
  %1348 = vmatpush1.bf16.msra.mxu0 0
  %1349 = vmatprep.subr.bf16.mxu0 0
  %1350 = vmatpush1.bf16.msra.mxu0 0
  %1351 = vmatprep.subr.bf16.mxu0 0
  %1352 = vmatpush1.bf16.msra.mxu0 0
  %1353 = vmatprep.subr.bf16.mxu0 0
  %1354 = vmatpush1.bf16.msra.mxu0 0
  %1355 = vmatprep.subr.bf16.mxu0 0
  %1356 = vmatpush1.bf16.msra.mxu0 0
  %1357 = vmatprep.subr.bf16.mxu0 0
  %1358 = vmatpush1.bf16.msra.mxu0 0
  %1359 = vmatprep.mubr.bf16.mxu0 0
  %1360 = vmatmul.mubr.bf16.gmra.mrb[0].mxu0 %v1261
  %v1361 = vpop.f32.mrb[0].mxu0
  %v1362 = vadd.f32 0.0, %v1361
  %v1363 = vpop.f32.mrb[0].mxu0
  %v1364 = vpop.f32.mrb[0].mxu0
  %v1365 = vadd.f32 0.0, %v1364
  %v1366 = vpop.f32.mrb[0].mxu0
  %1367 = vmatprep.mubr.bf16.mxu0 0
  %1368 = vmatmul.mubr.bf16.gmra.mrb[0].mxu0 %v1262
  %v1369 = vpop.f32.mrb[0].mxu0
  %v1370 = vadd.f32 0.0, %v1369
  %v1371 = vpop.f32.mrb[0].mxu0
  %v1372 = vpop.f32.mrb[0].mxu0
  %v1373 = vadd.f32 0.0, %v1372
  %v1374 = vpop.f32.mrb[0].mxu0
  %1375 = vdwg.mxu0
  %v1376 = vadd.f32 %v46, %v1362
  %v1377 = vadd.f32 %v47, %v1365
  %v1378 = vadd.f32 %v48, %v1370
  %v1379 = vadd.f32 %v49, %v1373
  %v1380 = vmul.f32 %v1376, %v1376
  %v1381 = vmul.f32 %v1377, %v1377
  %v1382 = vmul.f32 %v1378, %v1378
  %v1383 = vmul.f32 %v1379, %v1379
  %1384 = vadd.xlane.f32.xlu0 %v1380
  %v1385 = vpop.xlane.xlu0 %1384
  %1386 = vadd.xlane.f32.xlu0 %v1381
  %v1387 = vpop.xlane.xlu0 %1386
  %1388 = vadd.xlane.f32.xlu0 %v1382
  %v1389 = vpop.xlane.xlu0 %1388
  %1390 = vadd.xlane.f32.xlu0 %v1383
  %v1391 = vpop.xlane.xlu0 %1390
  %v1392 = vmul.f32 %v1385, %v62
  %v1393 = vmul.f32 %v1387, %v62
  %v1394 = vmul.f32 %v1389, %v62
  %v1395 = vmul.f32 %v1391, %v62
  %v1396 = vadd.f32 %v1392, 1e-06
  %v1397 = vadd.f32 %v1393, 1e-06
  %v1398 = vadd.f32 %v1394, 1e-06
  %v1399 = vadd.f32 %v1395, 1e-06
  %v1400 = vrsqrt.pop %v1396
  %v1401 = vrsqrt.pop %v1397
  %v1402 = vrsqrt.pop %v1398
  %v1403 = vrsqrt.pop %v1399
  %v1404 = vmul.f32 %v1376, %v1400
  %v1405 = vmul.f32 %v1377, %v1401
  %v1406 = vmul.f32 %v1378, %v1402
  %v1407 = vmul.f32 %v1379, %v1403
  %v1408 = vld [vmem:[%s8] sm:$0x1]
  %v1410 = vlaneseq
  %v1411 = vshrl.u32 %v1410, 7
  %v1412 = vsub.s32 0, %v1411
  %v1413 = vrot.slane %v1408, %v1412
  %v1415 = vmul.f32 %v1404, %v1413
  %v1416 = vmul.f32 %v1405, %v1413
  %v1417 = vmul.f32 %v1406, %v1413
  %v1418 = vmul.f32 %v1407, %v1413
  %v1419 = vpack.c.bf16 %v1416, %v1415
  %v1420 = vpack.c.bf16 %v1418, %v1417
  %v1421 = vld [vmem:[%s9] sm:$0xff]
  %v1422 = vld [vmem:[%s9 + $0x8] sm:$0xff]
  %v1423 = vld [vmem:[%s9 + $0x10] sm:$0xff]
  %v1424 = vld [vmem:[%s9 + $0x18] sm:$0xff]
  %v1425 = vld [vmem:[%s9 + $0x20] sm:$0xff]
  %v1426 = vld [vmem:[%s9 + $0x28] sm:$0xff]
  %v1427 = vld [vmem:[%s9 + $0x30] sm:$0xff]
  %v1428 = vld [vmem:[%s9 + $0x38] sm:$0xff]
  %v1429 = vld [vmem:[%s9 + $0x40] sm:$0xff]
  %v1430 = vld [vmem:[%s9 + $0x48] sm:$0xff]
  %v1431 = vld [vmem:[%s9 + $0x50] sm:$0xff]
  %v1432 = vld [vmem:[%s9 + $0x58] sm:$0xff]
  %v1433 = vld [vmem:[%s9 + $0x60] sm:$0xff]
  %v1434 = vld [vmem:[%s9 + $0x68] sm:$0xff]
  %v1435 = vld [vmem:[%s9 + $0x70] sm:$0xff]
  %v1436 = vld [vmem:[%s9 + $0x78] sm:$0xff]
  %v1453 = vunpack.c.l.b16 %v1421
  %v1454 = vunpack.c.h.b16 %v1421
  %v1455 = vunpack.c.l.b16 %v1422
  %v1456 = vunpack.c.h.b16 %v1422
  %v1457 = vunpack.c.l.b16 %v1423
  %v1458 = vunpack.c.h.b16 %v1423
  %v1459 = vunpack.c.l.b16 %v1424
  %v1460 = vunpack.c.h.b16 %v1424
  %v1461 = vunpack.c.l.b16 %v1425
  %v1462 = vunpack.c.h.b16 %v1425
  %v1463 = vunpack.c.l.b16 %v1426
  %v1464 = vunpack.c.h.b16 %v1426
  %v1465 = vunpack.c.l.b16 %v1427
  %v1466 = vunpack.c.h.b16 %v1427
  %v1467 = vunpack.c.l.b16 %v1428
  %v1468 = vunpack.c.h.b16 %v1428
  %v1469 = vunpack.c.l.b16 %v1429
  %v1470 = vunpack.c.h.b16 %v1429
  %v1471 = vunpack.c.l.b16 %v1430
  %v1472 = vunpack.c.h.b16 %v1430
  %v1473 = vunpack.c.l.b16 %v1431
  %v1474 = vunpack.c.h.b16 %v1431
  %v1475 = vunpack.c.l.b16 %v1432
  %v1476 = vunpack.c.h.b16 %v1432
  %v1477 = vunpack.c.l.b16 %v1433
  %v1478 = vunpack.c.h.b16 %v1433
  %v1479 = vunpack.c.l.b16 %v1434
  %v1480 = vunpack.c.h.b16 %v1434
  %v1481 = vunpack.c.l.b16 %v1435
  %v1482 = vunpack.c.h.b16 %v1435
  %v1483 = vunpack.c.l.b16 %v1436
  %v1484 = vunpack.c.h.b16 %v1436
  %v1485 = vpack.c.b16 %v1455, %v1453
  %v1486 = vpack.c.b16 %v1456, %v1454
  %v1487 = vpack.c.b16 %v1459, %v1457
  %v1488 = vpack.c.b16 %v1460, %v1458
  %v1489 = vpack.c.b16 %v1463, %v1461
  %v1490 = vpack.c.b16 %v1464, %v1462
  %v1491 = vpack.c.b16 %v1467, %v1465
  %v1492 = vpack.c.b16 %v1468, %v1466
  %v1493 = vpack.c.b16 %v1471, %v1469
  %v1494 = vpack.c.b16 %v1472, %v1470
  %v1495 = vpack.c.b16 %v1475, %v1473
  %v1496 = vpack.c.b16 %v1476, %v1474
  %v1497 = vpack.c.b16 %v1479, %v1477
  %v1498 = vpack.c.b16 %v1480, %v1478
  %v1499 = vpack.c.b16 %v1483, %v1481
  %v1500 = vpack.c.b16 %v1484, %v1482
  %1517 = vmatprep.subr.bf16.mxu0 %v1486
  %1518 = vmatpush1.bf16.msra.mxu0 %v1485
  %1519 = vmatprep.subr.bf16.mxu0 %v1488
  %1520 = vmatpush1.bf16.msra.mxu0 %v1487
  %1521 = vmatprep.subr.bf16.mxu0 %v1490
  %1522 = vmatpush1.bf16.msra.mxu0 %v1489
  %1523 = vmatprep.subr.bf16.mxu0 %v1492
  %1524 = vmatpush1.bf16.msra.mxu0 %v1491
  %1525 = vmatprep.subr.bf16.mxu0 %v1494
  %1526 = vmatpush1.bf16.msra.mxu0 %v1493
  %1527 = vmatprep.subr.bf16.mxu0 %v1496
  %1528 = vmatpush1.bf16.msra.mxu0 %v1495
  %1529 = vmatprep.subr.bf16.mxu0 %v1498
  %1530 = vmatpush1.bf16.msra.mxu0 %v1497
  %1531 = vmatprep.subr.bf16.mxu0 %v1500
  %1532 = vmatpush1.bf16.msra.mxu0 %v1499
  %1533 = vmatprep.subr.bf16.mxu0 0
  %1534 = vmatpush1.bf16.msra.mxu0 0
  %1535 = vmatprep.subr.bf16.mxu0 0
  %1536 = vmatpush1.bf16.msra.mxu0 0
  %1537 = vmatprep.subr.bf16.mxu0 0
  %1538 = vmatpush1.bf16.msra.mxu0 0
  %1539 = vmatprep.subr.bf16.mxu0 0
  %1540 = vmatpush1.bf16.msra.mxu0 0
  %1541 = vmatprep.subr.bf16.mxu0 0
  %1542 = vmatpush1.bf16.msra.mxu0 0
  %1543 = vmatprep.subr.bf16.mxu0 0
  %1544 = vmatpush1.bf16.msra.mxu0 0
  %1545 = vmatprep.subr.bf16.mxu0 0
  %1546 = vmatpush1.bf16.msra.mxu0 0
  %1547 = vmatprep.subr.bf16.mxu0 0
  %1548 = vmatpush1.bf16.msra.mxu0 0
  %1549 = vmatprep.mubr.bf16.mxu0 0
  %1550 = vmatmul.mubr.bf16.gmra.mrb[0].mxu0 %v1419
  %v1551 = vpop.f32.mrb[0].mxu0
  %v1552 = vadd.f32 0.0, %v1551
  %v1553 = vpop.f32.mrb[0].mxu0
  %v1554 = vadd.f32 0.0, %v1553
  %v1555 = vpop.f32.mrb[0].mxu0
  %v1556 = vadd.f32 0.0, %v1555
  %v1557 = vpop.f32.mrb[0].mxu0
  %v1558 = vadd.f32 0.0, %v1557
  %1559 = vmatprep.mubr.bf16.mxu0 0
  %1560 = vmatmul.mubr.bf16.gmra.mrb[0].mxu0 %v1420
  %v1561 = vpop.f32.mrb[0].mxu0
  %v1562 = vadd.f32 0.0, %v1561
  %v1563 = vpop.f32.mrb[0].mxu0
  %v1564 = vadd.f32 0.0, %v1563
  %v1565 = vpop.f32.mrb[0].mxu0
  %v1566 = vadd.f32 0.0, %v1565
  %v1567 = vpop.f32.mrb[0].mxu0
  %v1568 = vadd.f32 0.0, %v1567
  %1569 = vdwg.mxu0
  %v1570 = vld [vmem:[%s10] sm:$0xff]
  %v1571 = vld [vmem:[%s10 + $0x8] sm:$0xff]
  %v1572 = vld [vmem:[%s10 + $0x10] sm:$0xff]
  %v1573 = vld [vmem:[%s10 + $0x18] sm:$0xff]
  %v1574 = vld [vmem:[%s10 + $0x20] sm:$0xff]
  %v1575 = vld [vmem:[%s10 + $0x28] sm:$0xff]
  %v1576 = vld [vmem:[%s10 + $0x30] sm:$0xff]
  %v1577 = vld [vmem:[%s10 + $0x38] sm:$0xff]
  %v1578 = vld [vmem:[%s10 + $0x40] sm:$0xff]
  %v1579 = vld [vmem:[%s10 + $0x48] sm:$0xff]
  %v1580 = vld [vmem:[%s10 + $0x50] sm:$0xff]
  %v1581 = vld [vmem:[%s10 + $0x58] sm:$0xff]
  %v1582 = vld [vmem:[%s10 + $0x60] sm:$0xff]
  %v1583 = vld [vmem:[%s10 + $0x68] sm:$0xff]
  %v1584 = vld [vmem:[%s10 + $0x70] sm:$0xff]
  %v1585 = vld [vmem:[%s10 + $0x78] sm:$0xff]
  %v1602 = vunpack.c.l.b16 %v1570
  %v1603 = vunpack.c.h.b16 %v1570
  %v1604 = vunpack.c.l.b16 %v1571
  %v1605 = vunpack.c.h.b16 %v1571
  %v1606 = vunpack.c.l.b16 %v1572
  %v1607 = vunpack.c.h.b16 %v1572
  %v1608 = vunpack.c.l.b16 %v1573
  %v1609 = vunpack.c.h.b16 %v1573
  %v1610 = vunpack.c.l.b16 %v1574
  %v1611 = vunpack.c.h.b16 %v1574
  %v1612 = vunpack.c.l.b16 %v1575
  %v1613 = vunpack.c.h.b16 %v1575
  %v1614 = vunpack.c.l.b16 %v1576
  %v1615 = vunpack.c.h.b16 %v1576
  %v1616 = vunpack.c.l.b16 %v1577
  %v1617 = vunpack.c.h.b16 %v1577
  %v1618 = vunpack.c.l.b16 %v1578
  %v1619 = vunpack.c.h.b16 %v1578
  %v1620 = vunpack.c.l.b16 %v1579
  %v1621 = vunpack.c.h.b16 %v1579
  %v1622 = vunpack.c.l.b16 %v1580
  %v1623 = vunpack.c.h.b16 %v1580
  %v1624 = vunpack.c.l.b16 %v1581
  %v1625 = vunpack.c.h.b16 %v1581
  %v1626 = vunpack.c.l.b16 %v1582
  %v1627 = vunpack.c.h.b16 %v1582
  %v1628 = vunpack.c.l.b16 %v1583
  %v1629 = vunpack.c.h.b16 %v1583
  %v1630 = vunpack.c.l.b16 %v1584
  %v1631 = vunpack.c.h.b16 %v1584
  %v1632 = vunpack.c.l.b16 %v1585
  %v1633 = vunpack.c.h.b16 %v1585
  %v1634 = vpack.c.b16 %v1604, %v1602
  %v1635 = vpack.c.b16 %v1605, %v1603
  %v1636 = vpack.c.b16 %v1608, %v1606
  %v1637 = vpack.c.b16 %v1609, %v1607
  %v1638 = vpack.c.b16 %v1612, %v1610
  %v1639 = vpack.c.b16 %v1613, %v1611
  %v1640 = vpack.c.b16 %v1616, %v1614
  %v1641 = vpack.c.b16 %v1617, %v1615
  %v1642 = vpack.c.b16 %v1620, %v1618
  %v1643 = vpack.c.b16 %v1621, %v1619
  %v1644 = vpack.c.b16 %v1624, %v1622
  %v1645 = vpack.c.b16 %v1625, %v1623
  %v1646 = vpack.c.b16 %v1628, %v1626
  %v1647 = vpack.c.b16 %v1629, %v1627
  %v1648 = vpack.c.b16 %v1632, %v1630
  %v1649 = vpack.c.b16 %v1633, %v1631
  %1666 = vmatprep.subr.bf16.mxu0 %v1635
  %1667 = vmatpush1.bf16.msra.mxu0 %v1634
  %1668 = vmatprep.subr.bf16.mxu0 %v1637
  %1669 = vmatpush1.bf16.msra.mxu0 %v1636
  %1670 = vmatprep.subr.bf16.mxu0 %v1639
  %1671 = vmatpush1.bf16.msra.mxu0 %v1638
  %1672 = vmatprep.subr.bf16.mxu0 %v1641
  %1673 = vmatpush1.bf16.msra.mxu0 %v1640
  %1674 = vmatprep.subr.bf16.mxu0 %v1643
  %1675 = vmatpush1.bf16.msra.mxu0 %v1642
  %1676 = vmatprep.subr.bf16.mxu0 %v1645
  %1677 = vmatpush1.bf16.msra.mxu0 %v1644
  %1678 = vmatprep.subr.bf16.mxu0 %v1647
  %1679 = vmatpush1.bf16.msra.mxu0 %v1646
  %1680 = vmatprep.subr.bf16.mxu0 %v1649
  %1681 = vmatpush1.bf16.msra.mxu0 %v1648
  %1682 = vmatprep.subr.bf16.mxu0 0
  %1683 = vmatpush1.bf16.msra.mxu0 0
  %1684 = vmatprep.subr.bf16.mxu0 0
  %1685 = vmatpush1.bf16.msra.mxu0 0
  %1686 = vmatprep.subr.bf16.mxu0 0
  %1687 = vmatpush1.bf16.msra.mxu0 0
  %1688 = vmatprep.subr.bf16.mxu0 0
  %1689 = vmatpush1.bf16.msra.mxu0 0
  %1690 = vmatprep.subr.bf16.mxu0 0
  %1691 = vmatpush1.bf16.msra.mxu0 0
  %1692 = vmatprep.subr.bf16.mxu0 0
  %1693 = vmatpush1.bf16.msra.mxu0 0
  %1694 = vmatprep.subr.bf16.mxu0 0
  %1695 = vmatpush1.bf16.msra.mxu0 0
  %1696 = vmatprep.subr.bf16.mxu0 0
  %1697 = vmatpush1.bf16.msra.mxu0 0
  %1698 = vmatprep.mubr.bf16.mxu0 0
  %1699 = vmatmul.mubr.bf16.gmra.mrb[0].mxu0 %v1419
  %v1700 = vpop.f32.mrb[0].mxu0
  %v1701 = vadd.f32 0.0, %v1700
  %v1702 = vpop.f32.mrb[0].mxu0
  %v1703 = vadd.f32 0.0, %v1702
  %v1704 = vpop.f32.mrb[0].mxu0
  %v1705 = vadd.f32 0.0, %v1704
  %v1706 = vpop.f32.mrb[0].mxu0
  %v1707 = vadd.f32 0.0, %v1706
  %1708 = vmatprep.mubr.bf16.mxu0 0
  %1709 = vmatmul.mubr.bf16.gmra.mrb[0].mxu0 %v1420
  %v1710 = vpop.f32.mrb[0].mxu0
  %v1711 = vadd.f32 0.0, %v1710
  %v1712 = vpop.f32.mrb[0].mxu0
  %v1713 = vadd.f32 0.0, %v1712
  %v1714 = vpop.f32.mrb[0].mxu0
  %v1715 = vadd.f32 0.0, %v1714
  %v1716 = vpop.f32.mrb[0].mxu0
  %v1717 = vadd.f32 0.0, %v1716
  %1718 = vdwg.mxu0
  %v1719 = vxor.u32 %v1552, 2147483648
  %v1720 = vxor.u32 %v1554, 2147483648
  %v1721 = vxor.u32 %v1556, 2147483648
  %v1722 = vxor.u32 %v1558, 2147483648
  %v1723 = vxor.u32 %v1562, 2147483648
  %v1724 = vxor.u32 %v1564, 2147483648
  %v1725 = vxor.u32 %v1566, 2147483648
  %v1726 = vxor.u32 %v1568, 2147483648
  %v1727 = vmul.f32 %v1719, 1.442695
  %v1728 = vpow.pop %v1727
  %v1729 = vmul.f32 %v1720, 1.442695
  %v1730 = vpow.pop %v1729
  %v1731 = vmul.f32 %v1721, 1.442695
  %v1732 = vpow.pop %v1731
  %v1733 = vmul.f32 %v1722, 1.442695
  %v1734 = vpow.pop %v1733
  %v1735 = vmul.f32 %v1723, 1.442695
  %v1736 = vpow.pop %v1735
  %v1737 = vmul.f32 %v1724, 1.442695
  %v1738 = vpow.pop %v1737
  %v1739 = vmul.f32 %v1725, 1.442695
  %v1740 = vpow.pop %v1739
  %v1741 = vmul.f32 %v1726, 1.442695
  %v1742 = vpow.pop %v1741
  %v1743 = vadd.f32 %v1728, 1.0
  %v1744 = vadd.f32 %v1730, 1.0
  %v1745 = vadd.f32 %v1732, 1.0
  %v1746 = vadd.f32 %v1734, 1.0
  %v1747 = vadd.f32 %v1736, 1.0
  %v1748 = vadd.f32 %v1738, 1.0
  %v1749 = vadd.f32 %v1740, 1.0
  %v1750 = vadd.f32 %v1742, 1.0
  %v1751 = vrcp.pop %v1743
  %v1752 = vmul.f32 1.0, %v1751
  %v1753 = vrcp.pop %v1744
  %v1754 = vmul.f32 1.0, %v1753
  %v1755 = vrcp.pop %v1745
  %v1756 = vmul.f32 1.0, %v1755
  %v1757 = vrcp.pop %v1746
  %v1758 = vmul.f32 1.0, %v1757
  %v1759 = vrcp.pop %v1747
  %v1760 = vmul.f32 1.0, %v1759
  %v1761 = vrcp.pop %v1748
  %v1762 = vmul.f32 1.0, %v1761
  %v1763 = vrcp.pop %v1749
  %v1764 = vmul.f32 1.0, %v1763
  %v1765 = vrcp.pop %v1750
  %v1766 = vmul.f32 1.0, %v1765
  %v1767 = vmul.f32 %v1552, %v1752
  %v1768 = vmul.f32 %v1554, %v1754
  %v1769 = vmul.f32 %v1556, %v1756
  %v1770 = vmul.f32 %v1558, %v1758
  %v1771 = vmul.f32 %v1562, %v1760
  %v1772 = vmul.f32 %v1564, %v1762
  %v1773 = vmul.f32 %v1566, %v1764
  %v1774 = vmul.f32 %v1568, %v1766
  %v1775 = vmul.f32 %v1767, %v1701
  %v1776 = vmul.f32 %v1768, %v1703
  %v1777 = vmul.f32 %v1769, %v1705
  %v1778 = vmul.f32 %v1770, %v1707
  %v1779 = vmul.f32 %v1771, %v1711
  %v1780 = vmul.f32 %v1772, %v1713
  %v1781 = vmul.f32 %v1773, %v1715
  %v1782 = vmul.f32 %v1774, %v1717
  %v1783 = vpack.c.bf16 %v1777, %v1775
  %v1784 = vpack.c.bf16 %v1778, %v1776
  %v1785 = vpack.c.bf16 %v1781, %v1779
  %v1786 = vpack.c.bf16 %v1782, %v1780
  %v1787 = vld [vmem:[%s11] sm:$0xf]
  %v1788 = vld [vmem:[%s11 + $0x4] sm:$0xf]
  %v1789 = vld [vmem:[%s11 + $0x8] sm:$0xf]
  %v1790 = vld [vmem:[%s11 + $0xc] sm:$0xf]
  %v1791 = vld [vmem:[%s11 + $0x10] sm:$0xf]
  %v1792 = vld [vmem:[%s11 + $0x14] sm:$0xf]
  %v1793 = vld [vmem:[%s11 + $0x18] sm:$0xf]
  %v1794 = vld [vmem:[%s11 + $0x1c] sm:$0xf]
  %v1795 = vld [vmem:[%s11 + $0x20] sm:$0xf]
  %v1796 = vld [vmem:[%s11 + $0x24] sm:$0xf]
  %v1797 = vld [vmem:[%s11 + $0x28] sm:$0xf]
  %v1798 = vld [vmem:[%s11 + $0x2c] sm:$0xf]
  %v1799 = vld [vmem:[%s11 + $0x30] sm:$0xf]
  %v1800 = vld [vmem:[%s11 + $0x34] sm:$0xf]
  %v1801 = vld [vmem:[%s11 + $0x38] sm:$0xf]
  %v1802 = vld [vmem:[%s11 + $0x3c] sm:$0xf]
  %v1803 = vld [vmem:[%s11 + $0x40] sm:$0xf]
  %v1804 = vld [vmem:[%s11 + $0x44] sm:$0xf]
  %v1805 = vld [vmem:[%s11 + $0x48] sm:$0xf]
  %v1806 = vld [vmem:[%s11 + $0x4c] sm:$0xf]
  %v1807 = vld [vmem:[%s11 + $0x50] sm:$0xf]
  %v1808 = vld [vmem:[%s11 + $0x54] sm:$0xf]
  %v1809 = vld [vmem:[%s11 + $0x58] sm:$0xf]
  %v1810 = vld [vmem:[%s11 + $0x5c] sm:$0xf]
  %v1811 = vld [vmem:[%s11 + $0x60] sm:$0xf]
  %v1812 = vld [vmem:[%s11 + $0x64] sm:$0xf]
  %v1813 = vld [vmem:[%s11 + $0x68] sm:$0xf]
  %v1814 = vld [vmem:[%s11 + $0x6c] sm:$0xf]
  %v1815 = vld [vmem:[%s11 + $0x70] sm:$0xf]
  %v1816 = vld [vmem:[%s11 + $0x74] sm:$0xf]
  %v1817 = vld [vmem:[%s11 + $0x78] sm:$0xf]
  %v1818 = vld [vmem:[%s11 + $0x7c] sm:$0xf]
  %v1851 = vunpack.c.l.b16 %v1787
  %v1852 = vunpack.c.l.b16 %v1788
  %v1853 = vunpack.c.l.b16 %v1789
  %v1854 = vunpack.c.l.b16 %v1790
  %v1855 = vunpack.c.l.b16 %v1791
  %v1856 = vunpack.c.l.b16 %v1792
  %v1857 = vunpack.c.l.b16 %v1793
  %v1858 = vunpack.c.l.b16 %v1794
  %v1859 = vunpack.c.l.b16 %v1795
  %v1860 = vunpack.c.l.b16 %v1796
  %v1861 = vunpack.c.l.b16 %v1797
  %v1862 = vunpack.c.l.b16 %v1798
  %v1863 = vunpack.c.l.b16 %v1799
  %v1864 = vunpack.c.l.b16 %v1800
  %v1865 = vunpack.c.l.b16 %v1801
  %v1866 = vunpack.c.l.b16 %v1802
  %v1867 = vunpack.c.l.b16 %v1803
  %v1868 = vunpack.c.l.b16 %v1804
  %v1869 = vunpack.c.l.b16 %v1805
  %v1870 = vunpack.c.l.b16 %v1806
  %v1871 = vunpack.c.l.b16 %v1807
  %v1872 = vunpack.c.l.b16 %v1808
  %v1873 = vunpack.c.l.b16 %v1809
  %v1874 = vunpack.c.l.b16 %v1810
  %v1875 = vunpack.c.l.b16 %v1811
  %v1876 = vunpack.c.l.b16 %v1812
  %v1877 = vunpack.c.l.b16 %v1813
  %v1878 = vunpack.c.l.b16 %v1814
  %v1879 = vunpack.c.l.b16 %v1815
  %v1880 = vunpack.c.l.b16 %v1816
  %v1881 = vunpack.c.l.b16 %v1817
  %v1882 = vunpack.c.l.b16 %v1818
  %v1883 = vpack.c.b16 %v1852, %v1851
  %v1884 = vpack.c.b16 %v1854, %v1853
  %v1885 = vpack.c.b16 %v1856, %v1855
  %v1886 = vpack.c.b16 %v1858, %v1857
  %v1887 = vpack.c.b16 %v1860, %v1859
  %v1888 = vpack.c.b16 %v1862, %v1861
  %v1889 = vpack.c.b16 %v1864, %v1863
  %v1890 = vpack.c.b16 %v1866, %v1865
  %v1891 = vpack.c.b16 %v1868, %v1867
  %v1892 = vpack.c.b16 %v1870, %v1869
  %v1893 = vpack.c.b16 %v1872, %v1871
  %v1894 = vpack.c.b16 %v1874, %v1873
  %v1895 = vpack.c.b16 %v1876, %v1875
  %v1896 = vpack.c.b16 %v1878, %v1877
  %v1897 = vpack.c.b16 %v1880, %v1879
  %v1898 = vpack.c.b16 %v1882, %v1881
  %1915 = vmatprep.subr.bf16.mxu0 0
  %1916 = vmatpush1.bf16.msra.mxu0 %v1883
  %1917 = vmatprep.subr.bf16.mxu0 0
  %1918 = vmatpush1.bf16.msra.mxu0 %v1884
  %1919 = vmatprep.subr.bf16.mxu0 0
  %1920 = vmatpush1.bf16.msra.mxu0 %v1885
  %1921 = vmatprep.subr.bf16.mxu0 0
  %1922 = vmatpush1.bf16.msra.mxu0 %v1886
  %1923 = vmatprep.subr.bf16.mxu0 0
  %1924 = vmatpush1.bf16.msra.mxu0 %v1887
  %1925 = vmatprep.subr.bf16.mxu0 0
  %1926 = vmatpush1.bf16.msra.mxu0 %v1888
  %1927 = vmatprep.subr.bf16.mxu0 0
  %1928 = vmatpush1.bf16.msra.mxu0 %v1889
  %1929 = vmatprep.subr.bf16.mxu0 0
  %1930 = vmatpush1.bf16.msra.mxu0 %v1890
  %1931 = vmatprep.subr.bf16.mxu0 0
  %1932 = vmatpush1.bf16.msra.mxu0 %v1891
  %1933 = vmatprep.subr.bf16.mxu0 0
  %1934 = vmatpush1.bf16.msra.mxu0 %v1892
  %1935 = vmatprep.subr.bf16.mxu0 0
  %1936 = vmatpush1.bf16.msra.mxu0 %v1893
  %1937 = vmatprep.subr.bf16.mxu0 0
  %1938 = vmatpush1.bf16.msra.mxu0 %v1894
  %1939 = vmatprep.subr.bf16.mxu0 0
  %1940 = vmatpush1.bf16.msra.mxu0 %v1895
  %1941 = vmatprep.subr.bf16.mxu0 0
  %1942 = vmatpush1.bf16.msra.mxu0 %v1896
  %1943 = vmatprep.subr.bf16.mxu0 0
  %1944 = vmatpush1.bf16.msra.mxu0 %v1897
  %1945 = vmatprep.subr.bf16.mxu0 0
  %1946 = vmatpush1.bf16.msra.mxu0 %v1898
  %1947 = vmatprep.mubr.bf16.mxu0 %v1784
  %1948 = vmatmul.mubr.bf16.gmra.mrb[0].mxu0 %v1783
  %v1949 = vpop.f32.mrb[0].mxu0
  %v1950 = vadd.f32 0.0, %v1949
  %v1951 = vpop.f32.mrb[0].mxu0
  %v1952 = vpop.f32.mrb[0].mxu0
  %v1953 = vadd.f32 0.0, %v1952
  %v1954 = vpop.f32.mrb[0].mxu0
  %1955 = vmatprep.mubr.bf16.mxu0 %v1786
  %1956 = vmatmul.mubr.bf16.gmra.mrb[0].mxu0 %v1785
  %v1957 = vpop.f32.mrb[0].mxu0
  %v1958 = vadd.f32 0.0, %v1957
  %v1959 = vpop.f32.mrb[0].mxu0
  %v1960 = vpop.f32.mrb[0].mxu0
  %v1961 = vadd.f32 0.0, %v1960
  %v1962 = vpop.f32.mrb[0].mxu0
  %1963 = vdwg.mxu0
  %v1964 = vadd.f32 %v1376, %v1950
  %v1965 = vadd.f32 %v1377, %v1953
  %v1966 = vadd.f32 %v1378, %v1958
  %v1967 = vadd.f32 %v1379, %v1961
  %v1968 = vpack.c.bf16 %v1965, %v1964
  %v1969 = vpack.c.bf16 %v1967, %v1966
  %v1972 = vunpack.c.l.b16 %v1968
  %v1973 = vunpack.c.h.b16 %v1968
  %v1974 = vunpack.c.l.b16 %v1969
  %v1975 = vunpack.c.h.b16 %v1969
  %v1976 = vpack.c.b16 %v1972, %v1972
  %v1977 = vpack.c.b16 %v1973, %v1973
  %v1978 = vpack.c.b16 %v1974, %v1974
  %v1979 = vpack.c.b16 %v1975, %v1975
  %1984 = vst [vmem:[%s12] sm:$0xf] %v1976
  %1985 = vst [vmem:[%s12 + $0x4] sm:$0xf] %v1977
  %1986 = vst [vmem:[%s12 + $0x8] sm:$0xf] %v1978
  %1987 = vst [vmem:[%s12 + $0xc] sm:$0xf] %v1979
  // Predicated region
  $region50: #{qwen_llm_forward.4} parent=0 // pred_check
    _
  $region51: #{qwen_llm_forward.4} parent=0 // pred_check_branch
    %1989 = sbr.rel (0) target = $region53
  $region52: #{qwen_llm_forward.4} parent=0 // pred_region
    _
  $region53: #{qwen_llm_forward.4} parent=0 // pred_fallthru
    _
  // Predicated region
  $region54: #{qwen_llm_forward.4} parent=0 // pred_check
    _
  $region55: #{qwen_llm_forward.4} parent=0 // pred_check_branch
    %1991 = sbr.rel (0) target = $region57
  $region56: #{qwen_llm_forward.4} parent=0 // pred_region
    _
  $region57: #{qwen_llm_forward.4} parent=0 // pred_fallthru
    _

</llo_original>
